<compile_context>
chip_gen: v7x
topology: tpu7x:2x2x1
jax: 0.10.0
libtpu: 0.0.40
codegen_flags: <defaults>
</compile_context>

<pallas_src>
import jax
import jax.numpy as jnp
from jax.experimental import pallas as pl

# ---------------- configuration (small, consistent with the module) ----------------
N_CTX = 2                      # number of context tokens
CTX_DIM = 512                  # ctx_dim (meta_net: 512 -> 512//16 -> ctx_dim)
HIDDEN = CTX_DIM // 16         # 32
VIS_DIM = 768                  # visual projection dim
PROMPT_DEPTH = 3               # -> 2 compound layers
N_DEPTH = PROMPT_DEPTH - 1
N_CLS = 4
SEQ_LEN = 8                    # total tokenized length; suffix length = SEQ_LEN - 1 - N_CTX
BATCH = 2
DTYPE = jnp.float32            # activation / accumulation dtype
WDTYPE = jnp.bfloat16          # matmul-weight dtype (original module uses fp16 weights)


# ---------------- fused Pallas kernel ----------------

def _maple_prompt_kernel(
    # inputs
    x_ref,          # (B, 512)         f32  MAE image features
    rn_ref,         # (B, 512)         f32  raw gaussian noise (unscaled)
    ctx_ref,        # (n_ctx, 512)     f32  learnable context
    cpt_ref,        # (D, n_ctx, 512)  f32  compound text prompts
    mn_w1_ref, mn_b1_ref, mn_w2_ref, mn_b2_ref,   # meta_net (w: bf16, b: f32)
    proj_w_ref, proj_b_ref,                       # proj to 768
    vq_w_ref, vq_b_ref,                           # visual quat, bottom-half weight (512, 512)
    dw_ref, db_ref,                               # depth quat, bottom-half weights (D, 512, 768)
    # outputs
    ctx_shift_ref,  # (B*n_ctx, 512)   f32
    ctx_proj_ref,   # (n_ctx, 768)     f32
    vis_ref,        # (D, B*n_ctx, 768) f32
    sims_ref,       # (D, 1, 1)        f32  per-layer mean cosine similarity
):
    f32 = jnp.float32
    B = x_ref.shape[0]
    d = ctx_ref.shape[1]
    half = d // 2
    depth = cpt_ref.shape[0]

    x = x_ref[...]                                                     # (B, 512) f32

    # ---- meta_net: bias = ReLU(x @ W1 + b1) @ W2 + b2 (bias stays resident in VMEM) ----
    h = jnp.dot(x.astype(mn_w1_ref.dtype), mn_w1_ref[...],
                preferred_element_type=f32) + mn_b1_ref[...]
    h = jnp.maximum(h, 0.0)                                            # ReLU on VPU, f32
    bias = jnp.dot(h.astype(mn_w2_ref.dtype), mn_w2_ref[...],
                   preferred_element_type=f32) + mn_b2_ref[...]        # (B, d) f32

    # ---- noise = randn(bias.shape) * mean(maefeatures) ----
    mean = jnp.mean(x, axis=(0, 1), keepdims=True)                     # (1, 1)
    shift = bias + rn_ref[...] * mean                                  # (B, d)

    ctx = ctx_ref[...]                                                 # (n_ctx, d)

    # ---- visual orthogonality: QuatLinear(cat(zeros, ctx + bias + noise)) ----
    # cat((zeros, v), -1) @ W_full == v @ W_full[d:, :] -> only the bottom-half
    # Hamilton weight (assembled at init) is multiplied; batch collapsed into M.
    xs = jnp.concatenate([ctx + shift[b:b + 1, :] for b in range(B)], axis=0)   # (B*n_ctx, d)
    y = jnp.dot(xs.astype(vq_w_ref.dtype), vq_w_ref[...],
                preferred_element_type=f32) + vq_b_ref[...]
    ctx_shift_ref[...] = y.astype(ctx_shift_ref.dtype)

    # ---- proj(self.ctx) ----
    ctx_proj_ref[...] = (
        jnp.dot(ctx.astype(proj_w_ref.dtype), proj_w_ref[...],
                preferred_element_type=f32) + proj_b_ref[...]
    ).astype(ctx_proj_ref.dtype)

    # ---- compound (deep) visual prompts ----
    for i in range(depth):                                             # depth is tiny & static
        cpt = cpt_ref[i]                                               # (n_ctx, d)
        cs = jnp.concatenate([cpt + bias[b:b + 1, :] for b in range(B)], axis=0)  # (B*n_ctx, d)

        # cosine similarity between the two halves (original writes this to a file)
        a_h, b_h = cs[:, :half], cs[:, half:]
        num = jnp.sum(a_h * b_h, axis=-1, keepdims=True)
        na = jnp.sqrt(jnp.sum(a_h * a_h, axis=-1, keepdims=True))
        nb = jnp.sqrt(jnp.sum(b_h * b_h, axis=-1, keepdims=True))
        cos = num / jnp.maximum(na * nb, 1e-8)                         # (B*n_ctx, 1)
        sims_ref[i] = jnp.mean(cos, axis=0, keepdims=True)             # (1, 1)

        v = jnp.dot(cs.astype(dw_ref.dtype), dw_ref[i],
                    preferred_element_type=f32) + db_ref[i]
        vis_ref[i] = v.astype(vis_ref.dtype)


# ---------------- parameter setup (weight assembly hoisted out of forward) ----------------

def make_quaternion_weight_bottom(r, i, j, k):
    """Rows d:2d of the (2d, out) Hamilton block matrix.

    The full quaternion weight is
        [[ r,  i,  j,  k],
         [-i,  r,  k, -j],
         [-j, -k,  r,  i],
         [-k,  j, -i,  r]]
    and the input is cat((zeros_d, x_d)), so the top d rows always multiply zeros.
    Only the bottom two block-rows are needed.
    """
    row2 = jnp.concatenate([-j, -k,  r,  i], axis=1)
    row3 = jnp.concatenate([-k,  j, -i,  r], axis=1)
    return jnp.concatenate([row2, row3], axis=0)       # (d, out)


def init_params(key):
    ks = jax.random.split(key, 24)
    p = {}
    p['ctx'] = 0.02 * jax.random.normal(ks[0], (N_CTX, CTX_DIM), DTYPE)

    # meta_net: Linear(512, 32) -> ReLU -> Linear(32, ctx_dim)
    p['mn_w1'] = (0.02 * jax.random.normal(ks[1], (CTX_DIM, HIDDEN), DTYPE)).astype(WDTYPE)
    p['mn_b1'] = jnp.zeros((1, HIDDEN), DTYPE)
    p['mn_w2'] = (0.02 * jax.random.normal(ks[2], (HIDDEN, CTX_DIM), DTYPE)).astype(WDTYPE)
    p['mn_b2'] = jnp.zeros((1, CTX_DIM), DTYPE)

    # proj: Linear(ctx_dim, 768)
    p['proj_w'] = (0.02 * jax.random.normal(ks[3], (CTX_DIM, VIS_DIM), DTYPE)).astype(WDTYPE)
    p['proj_b'] = jnp.zeros((1, VIS_DIM), DTYPE)

    # visual_net_orthogonality: QuaternionLinear(2*ctx_dim, ctx_dim) -> bottom-half weight only
    qi, qo = (2 * CTX_DIM) // 4, CTX_DIM // 4
    r, i_, j_, k_ = [0.02 * jax.random.normal(ks[4 + t], (qi, qo), DTYPE) for t in range(4)]
    p['vq_w'] = make_quaternion_weight_bottom(r, i_, j_, k_).astype(WDTYPE)     # (512, 512)
    p['vq_b'] = jnp.zeros((1, CTX_DIM), DTYPE)

    # compound_prompts_text + compound_prompt_projections (QuaternionLinear(2*ctx_dim, 768))
    p['compound_text'] = jnp.stack(
        [0.02 * jax.random.normal(ks[8 + n], (N_CTX, CTX_DIM), DTYPE) for n in range(N_DEPTH)])
    qo2 = VIS_DIM // 4
    dws = []
    for n in range(N_DEPTH):
        r, i_, j_, k_ = [0.02 * jax.random.normal(ks[12 + 4 * n + t], (qi, qo2), DTYPE)
                         for t in range(4)]
        dws.append(make_quaternion_weight_bottom(r, i_, j_, k_))
    p['depth_w'] = jnp.stack(dws).astype(WDTYPE)                                # (D, 512, 768)
    p['depth_b'] = jnp.zeros((N_DEPTH, 1, VIS_DIM), DTYPE)

    # frozen CLIP token-embedding buffers (synthetic; real module takes them from clip_model)
    p['token_prefix'] = 0.02 * jax.random.normal(ks[20], (N_CLS, 1, CTX_DIM), DTYPE)
    p['token_suffix'] = 0.02 * jax.random.normal(
        ks[21], (N_CLS, SEQ_LEN - 1 - N_CTX, CTX_DIM), DTYPE)
    return p


# ---------------- forward pass ----------------

@jax.jit
def forward(params, maefeatures, noise_key):
    B = maefeatures.shape[0]
    x = maefeatures.astype(DTYPE)
    raw_noise = jax.random.normal(noise_key, (B, CTX_DIM), DTYPE)

    out_shapes = (
        jax.ShapeDtypeStruct((B * N_CTX, CTX_DIM), DTYPE),        # ctx_shifted (flat over batch)
        jax.ShapeDtypeStruct((N_CTX, VIS_DIM), DTYPE),            # proj(ctx)
        jax.ShapeDtypeStruct((N_DEPTH, B * N_CTX, VIS_DIM), DTYPE),  # visual deep prompts
        jax.ShapeDtypeStruct((N_DEPTH, 1, 1), DTYPE),             # cosine similarities
    )
    ctx_shift_flat, ctx_proj, vis_flat, sims = pl.pallas_call(
        _maple_prompt_kernel,
        out_shape=out_shapes,
    )(x, raw_noise, params['ctx'], params['compound_text'],
      params['mn_w1'], params['mn_b1'], params['mn_w2'], params['mn_b2'],
      params['proj_w'], params['proj_b'],
      params['vq_w'], params['vq_b'],
      params['depth_w'], params['depth_b'])

    ctx_shifted = ctx_shift_flat.reshape(B, N_CTX, CTX_DIM)

    # prompts = stack_b( cat([prefix, ctx_shifted[b] expanded over classes, suffix], dim=1) )
    prefix, suffix = params['token_prefix'], params['token_suffix']
    n_cls = prefix.shape[0]
    ctx_b = jnp.broadcast_to(ctx_shifted[:, None], (B, n_cls, N_CTX, CTX_DIM))
    pre_b = jnp.broadcast_to(prefix[None], (B,) + prefix.shape)
    suf_b = jnp.broadcast_to(suffix[None], (B,) + suffix.shape)
    prompts = jnp.concatenate([pre_b, ctx_b, suf_b], axis=2)           # (B, n_cls, T, ctx_dim)

    visual_deep_prompts = [vis_flat[i].reshape(B, N_CTX, VIS_DIM) for i in range(N_DEPTH)]
    compound_text = [params['compound_text'][i] for i in range(N_DEPTH)]
    similarities = sims.reshape(N_DEPTH)
    # TODO(synk): the original appends similarity_{i} to /code/tensor_results_train/similarity_{i}.txt;
    # file I/O has no Pallas/JAX equivalent, so the values are returned instead.
    return prompts, ctx_proj, compound_text, visual_deep_prompts, similarities


# ---------------- driver ----------------

if __name__ == "__main__":
    key = jax.random.PRNGKey(0)
    pkey, xkey, nkey = jax.random.split(key, 3)
    params = init_params(pkey)

    maefeatures = jax.random.normal(xkey, (BATCH, CTX_DIM), DTYPE)     # MAE image features

    prompts, ctx_proj, compound_text, visual_deep_prompts, sims = forward(
        params, maefeatures, nkey)

    jax.block_until_ready(prompts)
    jax.block_until_ready(ctx_proj)
    for v in visual_deep_prompts:
        jax.block_until_ready(v)
    jax.block_until_ready(sims)

    assert prompts.shape == (BATCH, N_CLS, SEQ_LEN, CTX_DIM), prompts.shape
    assert ctx_proj.shape == (N_CTX, VIS_DIM), ctx_proj.shape
    assert len(compound_text) == N_DEPTH
    assert len(visual_deep_prompts) == N_DEPTH
    assert visual_deep_prompts[0].shape == (BATCH, N_CTX, VIS_DIM), visual_deep_prompts[0].shape
    assert sims.shape == (N_DEPTH,), sims.shape
    assert bool(jnp.isfinite(prompts).all()) and bool(jnp.isfinite(ctx_proj).all())
    assert all(bool(jnp.isfinite(v).all()) for v in visual_deep_prompts)
    assert bool(jnp.isfinite(sims).all())

    print("KERNEL_OK")
</pallas_src>

<mosaic_0001>
module attributes {stable_mosaic.version = 11 : i64} {
  func.func @_maple_prompt_kernel(%arg0: memref<2x512xf32, #tpu.memory_space<vmem>>, %arg1: memref<2x512xf32, #tpu.memory_space<vmem>>, %arg2: memref<2x512xf32, #tpu.memory_space<vmem>>, %arg3: memref<2x2x512xf32, #tpu.memory_space<vmem>>, %arg4: memref<512x32xbf16, #tpu.memory_space<vmem>>, %arg5: memref<1x32xf32, #tpu.memory_space<vmem>>, %arg6: memref<32x512xbf16, #tpu.memory_space<vmem>>, %arg7: memref<1x512xf32, #tpu.memory_space<vmem>>, %arg8: memref<512x768xbf16, #tpu.memory_space<vmem>>, %arg9: memref<1x768xf32, #tpu.memory_space<vmem>>, %arg10: memref<512x512xbf16, #tpu.memory_space<vmem>>, %arg11: memref<1x512xf32, #tpu.memory_space<vmem>>, %arg12: memref<2x512x768xbf16, #tpu.memory_space<vmem>>, %arg13: memref<2x1x768xf32, #tpu.memory_space<vmem>>, %arg14: memref<4x512xf32, #tpu.memory_space<vmem>>, %arg15: memref<2x768xf32, #tpu.memory_space<vmem>>, %arg16: memref<2x4x768xf32, #tpu.memory_space<vmem>>, %arg17: memref<2x1x1xf32, #tpu.memory_space<vmem>>) attributes {dimension_semantics = [], scalar_prefetch = 0 : i64, scratch_operands = 0 : i64, tpu.core_type = #tpu.core_type<tc>} {
    %c0 = arith.constant 0 : index
    %c0_0 = arith.constant 0 : index
    %0 = vector.load %arg0[%c0, %c0_0] : memref<2x512xf32, #tpu.memory_space<vmem>>, vector<2x512xf32>
    %1 = arith.truncf %0 : vector<2x512xf32> to vector<2x512xbf16>
    %c0_1 = arith.constant 0 : index
    %c0_2 = arith.constant 0 : index
    %2 = vector.load %arg4[%c0_1, %c0_2] : memref<512x32xbf16, #tpu.memory_space<vmem>>, vector<512x32xbf16>
    %cst = arith.constant dense<0.000000e+00> : vector<2x32xf32>
    %3 = tpu.matmul %1, %2, %cst {dimension_numbers = #tpu.dot_dimension_numbers<[1], [0], [0], [1], [0, 0, 1, 1], [], []>} : vector<2x512xbf16>, vector<512x32xbf16>, vector<2x32xf32> -> vector<2x32xf32>
    %c0_3 = arith.constant 0 : index
    %c0_4 = arith.constant 0 : index
    %4 = vector.load %arg5[%c0_3, %c0_4] : memref<1x32xf32, #tpu.memory_space<vmem>>, vector<1x32xf32>
    %5 = vector.broadcast %4 : vector<1x32xf32> to vector<2x32xf32>
    %6 = arith.addf %3, %5 : vector<2x32xf32>
    %cst_5 = arith.constant 0.000000e+00 : f32
    %7 = vector.broadcast %cst_5 : f32 to vector<2x32xf32>
    %8 = arith.maximumf %6, %7 : vector<2x32xf32>
    %9 = arith.truncf %8 : vector<2x32xf32> to vector<2x32xbf16>
    %c0_6 = arith.constant 0 : index
    %c0_7 = arith.constant 0 : index
    %10 = vector.load %arg6[%c0_6, %c0_7] : memref<32x512xbf16, #tpu.memory_space<vmem>>, vector<32x512xbf16>
    %cst_8 = arith.constant dense<0.000000e+00> : vector<2x512xf32>
    %11 = tpu.matmul %9, %10, %cst_8 {dimension_numbers = #tpu.dot_dimension_numbers<[1], [0], [0], [1], [0, 0, 1, 1], [], []>} : vector<2x32xbf16>, vector<32x512xbf16>, vector<2x512xf32> -> vector<2x512xf32>
    %c0_9 = arith.constant 0 : index
    %c0_10 = arith.constant 0 : index
    %12 = vector.load %arg7[%c0_9, %c0_10] : memref<1x512xf32, #tpu.memory_space<vmem>>, vector<1x512xf32>
    %13 = vector.broadcast %12 : vector<1x512xf32> to vector<2x512xf32>
    %14 = arith.addf %11, %13 : vector<2x512xf32>
    %15 = vector.shape_cast %0 : vector<2x512xf32> to vector<1x2x512xf32>
    %cst_11 = arith.constant dense<0.000000e+00> : vector<1xf32>
    %16 = vector.multi_reduction <add>, %15, %cst_11 [1, 2] : vector<1x2x512xf32> to vector<1xf32>
    %17 = vector.shape_cast %16 : vector<1xf32> to vector<1x1x1xf32>
    %18 = vector.extract %17[0, 0, 0] : f32 from vector<1x1x1xf32>
    %19 = vector.broadcast %18 : f32 to vector<1x1xf32>
    %cst_12 = arith.constant 1.024000e+03 : f32
    %20 = vector.broadcast %cst_12 : f32 to vector<1x1xf32>
    %21 = arith.divf %19, %20 : vector<1x1xf32>
    %c0_13 = arith.constant 0 : index
    %c0_14 = arith.constant 0 : index
    %22 = vector.load %arg1[%c0_13, %c0_14] : memref<2x512xf32, #tpu.memory_space<vmem>>, vector<2x512xf32>
    %23 = vector.broadcast %21 : vector<1x1xf32> to vector<2x512xf32>
    %24 = arith.mulf %22, %23 : vector<2x512xf32>
    %25 = arith.addf %14, %24 : vector<2x512xf32>
    %c0_15 = arith.constant 0 : index
    %c0_16 = arith.constant 0 : index
    %26 = vector.load %arg2[%c0_15, %c0_16] : memref<2x512xf32, #tpu.memory_space<vmem>>, vector<2x512xf32>
    %27 = vector.extract_strided_slice %25 {offsets = [0, 0], sizes = [1, 512], strides = [1, 1]} : vector<2x512xf32> to vector<1x512xf32>
    %28 = vector.broadcast %27 : vector<1x512xf32> to vector<2x512xf32>
    %29 = arith.addf %26, %28 : vector<2x512xf32>
    %30 = vector.extract_strided_slice %25 {offsets = [1, 0], sizes = [1, 512], strides = [1, 1]} : vector<2x512xf32> to vector<1x512xf32>
    %31 = vector.broadcast %30 : vector<1x512xf32> to vector<2x512xf32>
    %32 = arith.addf %26, %31 : vector<2x512xf32>
    %33 = tpu.concatenate %29, %32 in 0 : vector<2x512xf32>, vector<2x512xf32> -> vector<4x512xf32>
    %34 = arith.truncf %33 : vector<4x512xf32> to vector<4x512xbf16>
    %c0_17 = arith.constant 0 : index
    %c0_18 = arith.constant 0 : index
    %35 = vector.load %arg10[%c0_17, %c0_18] : memref<512x512xbf16, #tpu.memory_space<vmem>>, vector<512x512xbf16>
    %cst_19 = arith.constant dense<0.000000e+00> : vector<4x512xf32>
    %36 = tpu.matmul %34, %35, %cst_19 {dimension_numbers = #tpu.dot_dimension_numbers<[1], [0], [0], [1], [0, 0, 1, 1], [], []>} : vector<4x512xbf16>, vector<512x512xbf16>, vector<4x512xf32> -> vector<4x512xf32>
    %c0_20 = arith.constant 0 : index
    %c0_21 = arith.constant 0 : index
    %37 = vector.load %arg11[%c0_20, %c0_21] : memref<1x512xf32, #tpu.memory_space<vmem>>, vector<1x512xf32>
    %38 = vector.broadcast %37 : vector<1x512xf32> to vector<4x512xf32>
    %39 = arith.addf %36, %38 : vector<4x512xf32>
    %c0_22 = arith.constant 0 : index
    %c0_23 = arith.constant 0 : index
    %40 = vector.load %arg14[%c0_22, %c0_23] : memref<4x512xf32, #tpu.memory_space<vmem>>, vector<4x512xf32>
    tpu.vector_store %arg14[%c0_22, %c0_23], %39 {strides = array<i32>} : memref<4x512xf32, #tpu.memory_space<vmem>>, vector<4x512xf32>,
    %41 = arith.truncf %26 : vector<2x512xf32> to vector<2x512xbf16>
    %c0_24 = arith.constant 0 : index
    %c0_25 = arith.constant 0 : index
    %42 = vector.load %arg8[%c0_24, %c0_25] : memref<512x768xbf16, #tpu.memory_space<vmem>>, vector<512x768xbf16>
    %cst_26 = arith.constant dense<0.000000e+00> : vector<2x768xf32>
    %43 = tpu.matmul %41, %42, %cst_26 {dimension_numbers = #tpu.dot_dimension_numbers<[1], [0], [0], [1], [0, 0, 1, 1], [], []>} : vector<2x512xbf16>, vector<512x768xbf16>, vector<2x768xf32> -> vector<2x768xf32>
    %c0_27 = arith.constant 0 : index
    %c0_28 = arith.constant 0 : index
    %44 = vector.load %arg9[%c0_27, %c0_28] : memref<1x768xf32, #tpu.memory_space<vmem>>, vector<1x768xf32>
    %45 = vector.broadcast %44 : vector<1x768xf32> to vector<2x768xf32>
    %46 = arith.addf %43, %45 : vector<2x768xf32>
    %c0_29 = arith.constant 0 : index
    %c0_30 = arith.constant 0 : index
    %47 = vector.load %arg15[%c0_29, %c0_30] : memref<2x768xf32, #tpu.memory_space<vmem>>, vector<2x768xf32>
    tpu.vector_store %arg15[%c0_29, %c0_30], %46 {strides = array<i32>} : memref<2x768xf32, #tpu.memory_space<vmem>>, vector<2x768xf32>,
    %c0_31 = arith.constant 0 : index
    %c0_32 = arith.constant 0 : index
    %c0_33 = arith.constant 0 : index
    %48 = vector.load %arg3[%c0_31, %c0_32, %c0_33] : memref<2x2x512xf32, #tpu.memory_space<vmem>>, vector<1x2x512xf32>
    %49 = vector.shape_cast %48 : vector<1x2x512xf32> to vector<2x512xf32>
    %50 = vector.extract_strided_slice %14 {offsets = [0, 0], sizes = [1, 512], strides = [1, 1]} : vector<2x512xf32> to vector<1x512xf32>
    %51 = vector.broadcast %50 : vector<1x512xf32> to vector<2x512xf32>
    %52 = arith.addf %49, %51 : vector<2x512xf32>
    %53 = vector.extract_strided_slice %14 {offsets = [1, 0], sizes = [1, 512], strides = [1, 1]} : vector<2x512xf32> to vector<1x512xf32>
    %54 = vector.broadcast %53 : vector<1x512xf32> to vector<2x512xf32>
    %55 = arith.addf %49, %54 : vector<2x512xf32>
    %56 = tpu.concatenate %52, %55 in 0 : vector<2x512xf32>, vector<2x512xf32> -> vector<4x512xf32>
    %57 = vector.extract_strided_slice %56 {offsets = [0, 0], sizes = [4, 256], strides = [1, 1]} : vector<4x512xf32> to vector<4x256xf32>
    %58 = vector.extract_strided_slice %56 {offsets = [0, 256], sizes = [4, 256], strides = [1, 1]} : vector<4x512xf32> to vector<4x256xf32>
    %59 = arith.mulf %57, %58 : vector<4x256xf32>
    %cst_34 = arith.constant dense<0.000000e+00> : vector<4xf32>
    %60 = vector.multi_reduction <add>, %59, %cst_34 [1] : vector<4x256xf32> to vector<4xf32>
    %61 = vector.shape_cast %60 : vector<4xf32> to vector<4x1xf32>
    %62 = arith.mulf %57, %57 : vector<4x256xf32>
    %cst_35 = arith.constant dense<0.000000e+00> : vector<4xf32>
    %63 = vector.multi_reduction <add>, %62, %cst_35 [1] : vector<4x256xf32> to vector<4xf32>
    %64 = vector.shape_cast %63 : vector<4xf32> to vector<4x1xf32>
    %65 = math.sqrt %64 : vector<4x1xf32>
    %66 = arith.mulf %58, %58 : vector<4x256xf32>
    %cst_36 = arith.constant dense<0.000000e+00> : vector<4xf32>
    %67 = vector.multi_reduction <add>, %66, %cst_36 [1] : vector<4x256xf32> to vector<4xf32>
    %68 = vector.shape_cast %67 : vector<4xf32> to vector<4x1xf32>
    %69 = math.sqrt %68 : vector<4x1xf32>
    %70 = arith.mulf %65, %69 : vector<4x1xf32>
    %cst_37 = arith.constant 9.99999993E-9 : f32
    %71 = vector.broadcast %cst_37 : f32 to vector<4x1xf32>
    %72 = arith.maximumf %70, %71 : vector<4x1xf32>
    %73 = arith.divf %61, %72 : vector<4x1xf32>
    %cst_38 = arith.constant dense<0.000000e+00> : vector<1xf32>
    %74 = vector.multi_reduction <add>, %73, %cst_38 [0] : vector<4x1xf32> to vector<1xf32>
    %75 = vector.shape_cast %74 : vector<1xf32> to vector<1x1xf32>
    %cst_39 = arith.constant 4.000000e+00 : f32
    %76 = vector.broadcast %cst_39 : f32 to vector<1x1xf32>
    %77 = arith.divf %75, %76 : vector<1x1xf32>
    %c0_40 = arith.constant 0 : index
    %c0_41 = arith.constant 0 : index
    %c0_42 = arith.constant 0 : index
    %78 = vector.load %arg17[%c0_40, %c0_41, %c0_42] : memref<2x1x1xf32, #tpu.memory_space<vmem>>, vector<1x1x1xf32>
    %79 = vector.shape_cast %78 : vector<1x1x1xf32> to vector<1x1xf32>
    %80 = vector.shape_cast %77 : vector<1x1xf32> to vector<1x1x1xf32>
    tpu.vector_store %arg17[%c0_40, %c0_41, %c0_42], %80 {strides = array<i32>} : memref<2x1x1xf32, #tpu.memory_space<vmem>>, vector<1x1x1xf32>,
    %81 = arith.truncf %56 : vector<4x512xf32> to vector<4x512xbf16>
    %c0_43 = arith.constant 0 : index
    %c0_44 = arith.constant 0 : index
    %c0_45 = arith.constant 0 : index
    %82 = vector.load %arg12[%c0_43, %c0_44, %c0_45] : memref<2x512x768xbf16, #tpu.memory_space<vmem>>, vector<1x512x768xbf16>
    %83 = vector.shape_cast %82 : vector<1x512x768xbf16> to vector<512x768xbf16>
    %cst_46 = arith.constant dense<0.000000e+00> : vector<4x768xf32>
    %84 = tpu.matmul %81, %83, %cst_46 {dimension_numbers = #tpu.dot_dimension_numbers<[1], [0], [0], [1], [0, 0, 1, 1], [], []>} : vector<4x512xbf16>, vector<512x768xbf16>, vector<4x768xf32> -> vector<4x768xf32>
    %c0_47 = arith.constant 0 : index
    %c0_48 = arith.constant 0 : index
    %c0_49 = arith.constant 0 : index
    %85 = vector.load %arg13[%c0_47, %c0_48, %c0_49] : memref<2x1x768xf32, #tpu.memory_space<vmem>>, vector<1x1x768xf32>
    %86 = vector.shape_cast %85 : vector<1x1x768xf32> to vector<1x768xf32>
    %87 = vector.broadcast %86 : vector<1x768xf32> to vector<4x768xf32>
    %88 = arith.addf %84, %87 : vector<4x768xf32>
    %c0_50 = arith.constant 0 : index
    %c0_51 = arith.constant 0 : index
    %c0_52 = arith.constant 0 : index
    %89 = vector.load %arg16[%c0_50, %c0_51, %c0_52] : memref<2x4x768xf32, #tpu.memory_space<vmem>>, vector<1x4x768xf32>
    %90 = vector.shape_cast %89 : vector<1x4x768xf32> to vector<4x768xf32>
    %91 = vector.shape_cast %88 : vector<4x768xf32> to vector<1x4x768xf32>
    tpu.vector_store %arg16[%c0_50, %c0_51, %c0_52], %91 {strides = array<i32>} : memref<2x4x768xf32, #tpu.memory_space<vmem>>, vector<1x4x768xf32>,
    %c1 = arith.constant 1 : index
    %c0_53 = arith.constant 0 : index
    %c0_54 = arith.constant 0 : index
    %92 = vector.load %arg3[%c1, %c0_53, %c0_54] : memref<2x2x512xf32, #tpu.memory_space<vmem>>, vector<1x2x512xf32>
    %93 = vector.shape_cast %92 : vector<1x2x512xf32> to vector<2x512xf32>
    %94 = vector.extract_strided_slice %14 {offsets = [0, 0], sizes = [1, 512], strides = [1, 1]} : vector<2x512xf32> to vector<1x512xf32>
    %95 = vector.broadcast %94 : vector<1x512xf32> to vector<2x512xf32>
    %96 = arith.addf %93, %95 : vector<2x512xf32>
    %97 = vector.extract_strided_slice %14 {offsets = [1, 0], sizes = [1, 512], strides = [1, 1]} : vector<2x512xf32> to vector<1x512xf32>
    %98 = vector.broadcast %97 : vector<1x512xf32> to vector<2x512xf32>
    %99 = arith.addf %93, %98 : vector<2x512xf32>
    %100 = tpu.concatenate %96, %99 in 0 : vector<2x512xf32>, vector<2x512xf32> -> vector<4x512xf32>
    %101 = vector.extract_strided_slice %100 {offsets = [0, 0], sizes = [4, 256], strides = [1, 1]} : vector<4x512xf32> to vector<4x256xf32>
    %102 = vector.extract_strided_slice %100 {offsets = [0, 256], sizes = [4, 256], strides = [1, 1]} : vector<4x512xf32> to vector<4x256xf32>
    %103 = arith.mulf %101, %102 : vector<4x256xf32>
    %cst_55 = arith.constant dense<0.000000e+00> : vector<4xf32>
    %104 = vector.multi_reduction <add>, %103, %cst_55 [1] : vector<4x256xf32> to vector<4xf32>
    %105 = vector.shape_cast %104 : vector<4xf32> to vector<4x1xf32>
    %106 = arith.mulf %101, %101 : vector<4x256xf32>
    %cst_56 = arith.constant dense<0.000000e+00> : vector<4xf32>
    %107 = vector.multi_reduction <add>, %106, %cst_56 [1] : vector<4x256xf32> to vector<4xf32>
    %108 = vector.shape_cast %107 : vector<4xf32> to vector<4x1xf32>
    %109 = math.sqrt %108 : vector<4x1xf32>
    %110 = arith.mulf %102, %102 : vector<4x256xf32>
    %cst_57 = arith.constant dense<0.000000e+00> : vector<4xf32>
    %111 = vector.multi_reduction <add>, %110, %cst_57 [1] : vector<4x256xf32> to vector<4xf32>
    %112 = vector.shape_cast %111 : vector<4xf32> to vector<4x1xf32>
    %113 = math.sqrt %112 : vector<4x1xf32>
    %114 = arith.mulf %109, %113 : vector<4x1xf32>
    %cst_58 = arith.constant 9.99999993E-9 : f32
    %115 = vector.broadcast %cst_58 : f32 to vector<4x1xf32>
    %116 = arith.maximumf %114, %115 : vector<4x1xf32>
    %117 = arith.divf %105, %116 : vector<4x1xf32>
    %cst_59 = arith.constant dense<0.000000e+00> : vector<1xf32>
    %118 = vector.multi_reduction <add>, %117, %cst_59 [0] : vector<4x1xf32> to vector<1xf32>
    %119 = vector.shape_cast %118 : vector<1xf32> to vector<1x1xf32>
    %cst_60 = arith.constant 4.000000e+00 : f32
    %120 = vector.broadcast %cst_60 : f32 to vector<1x1xf32>
    %121 = arith.divf %119, %120 : vector<1x1xf32>
    %c1_61 = arith.constant 1 : index
    %c0_62 = arith.constant 0 : index
    %c0_63 = arith.constant 0 : index
    %122 = vector.load %arg17[%c1_61, %c0_62, %c0_63] : memref<2x1x1xf32, #tpu.memory_space<vmem>>, vector<1x1x1xf32>
    %123 = vector.shape_cast %122 : vector<1x1x1xf32> to vector<1x1xf32>
    %124 = vector.shape_cast %121 : vector<1x1xf32> to vector<1x1x1xf32>
    tpu.vector_store %arg17[%c1_61, %c0_62, %c0_63], %124 {strides = array<i32>} : memref<2x1x1xf32, #tpu.memory_space<vmem>>, vector<1x1x1xf32>,
    %125 = arith.truncf %100 : vector<4x512xf32> to vector<4x512xbf16>
    %c1_64 = arith.constant 1 : index
    %c0_65 = arith.constant 0 : index
    %c0_66 = arith.constant 0 : index
    %126 = vector.load %arg12[%c1_64, %c0_65, %c0_66] : memref<2x512x768xbf16, #tpu.memory_space<vmem>>, vector<1x512x768xbf16>
    %127 = vector.shape_cast %126 : vector<1x512x768xbf16> to vector<512x768xbf16>
    %cst_67 = arith.constant dense<0.000000e+00> : vector<4x768xf32>
    %128 = tpu.matmul %125, %127, %cst_67 {dimension_numbers = #tpu.dot_dimension_numbers<[1], [0], [0], [1], [0, 0, 1, 1], [], []>} : vector<4x512xbf16>, vector<512x768xbf16>, vector<4x768xf32> -> vector<4x768xf32>
    %c1_68 = arith.constant 1 : index
    %c0_69 = arith.constant 0 : index
    %c0_70 = arith.constant 0 : index
    %129 = vector.load %arg13[%c1_68, %c0_69, %c0_70] : memref<2x1x768xf32, #tpu.memory_space<vmem>>, vector<1x1x768xf32>
    %130 = vector.shape_cast %129 : vector<1x1x768xf32> to vector<1x768xf32>
    %131 = vector.broadcast %130 : vector<1x768xf32> to vector<4x768xf32>
    %132 = arith.addf %128, %131 : vector<4x768xf32>
    %c1_71 = arith.constant 1 : index
    %c0_72 = arith.constant 0 : index
    %c0_73 = arith.constant 0 : index
    %133 = vector.load %arg16[%c1_71, %c0_72, %c0_73] : memref<2x4x768xf32, #tpu.memory_space<vmem>>, vector<1x4x768xf32>
    %134 = vector.shape_cast %133 : vector<1x4x768xf32> to vector<4x768xf32>
    %135 = vector.shape_cast %132 : vector<4x768xf32> to vector<1x4x768xf32>
    tpu.vector_store %arg16[%c1_71, %c0_72, %c0_73], %135 {strides = array<i32>} : memref<2x4x768xf32, #tpu.memory_space<vmem>>, vector<1x4x768xf32>,
    return
  }
}

</mosaic_0001>

<llo_original>
// kernel: squeeze.8
$region0: #{squeeze.8}
  %s0 = inlined_call_operand.vmem [shape: f32[1,4,768], index: 0, kind: input, shape index: {}]
  %s1 = inlined_call_operand.hbm [shape: f32[2,2,768], index: 1, kind: output, shape index: {}]
  $region1: #{squeeze.8} parent=0
    #allocation0 [shape = 'u8[12288]{0}', space=vmem, size = 0x3000, scoped, tag = 'operand span for operand 1']
    #allocation1 [shape = 's32[1]{0}', space=sflag, size = 0x4, scoped, tag = 'scoped memory for squeeze.8']
    #allocation2 [shape = 'u8[49152]{0}', space=vmem, size = 0xc000, scoped, tag = 'scoped mem for output reshape']
    #allocation3 [shape = 'u8[24576]{0}', space=vmem, size = 0x6000, scoped, tag = 'scoped mem for input reshape']
    %2 = vsyncpa [#allocation1], 0
    %s4 = sshllo.u32 0, 4
    %s5 = smul.addr 4, 5
    %s6 = scalar_lea.vmem %s0, %s5
    %v7 = vld [vmem:[%s6] sm:%s4]
    %s8 = scalar_lea.vmem [#allocation3], 40
    %9 = vst [vmem:[%s8] sm:%s4] %v7
    %s10 = smul.addr 4, 4
    %s11 = scalar_lea.vmem %s0, %s10
    %v12 = vld [vmem:[%s11] sm:%s4]
    %s13 = scalar_lea.vmem [#allocation3], 32
    %14 = vst [vmem:[%s13] sm:%s4] %v12
    %s15 = smul.addr 4, 3
    %s16 = scalar_lea.vmem %s0, %s15
    %v17 = vld [vmem:[%s16] sm:%s4]
    %s18 = scalar_lea.vmem [#allocation3], 24
    %19 = vst [vmem:[%s18] sm:%s4] %v17
    %s20 = smul.addr 4, 2
    %s21 = scalar_lea.vmem %s0, %s20
    %v22 = vld [vmem:[%s21] sm:%s4]
    %s23 = scalar_lea.vmem [#allocation3], 16
    %24 = vst [vmem:[%s23] sm:%s4] %v22
    %s25 = scalar_lea.vmem %s0, 4
    %v26 = vld [vmem:[%s25] sm:%s4]
    %s27 = scalar_lea.vmem [#allocation3], 8
    %28 = vst [vmem:[%s27] sm:%s4] %v26
    %v29 = vld [vmem:[%s0] sm:%s4]
    %30 = vst [vmem:[#allocation3] sm:%s4] %v29
    %v31 = vld [vmem:[#allocation3] sm:$0xf]
    %32 = vst [vmem:[#allocation2] sm:$0x3] %v31
    %s33 = scalar_lea.vmem [#allocation2], 46
    %34 = vst [vmem:[%s33] sm:$0xc] %v31
    %s35 = scalar_lea.vmem [#allocation3], 8
    %v36 = vld [vmem:[%s35] sm:$0xf]
    %s37 = scalar_lea.vmem [#allocation2], 8
    %38 = vst [vmem:[%s37] sm:$0x3] %v36
    %s39 = scalar_lea.vmem [#allocation2], 54
    %40 = vst [vmem:[%s39] sm:$0xc] %v36
    %s41 = scalar_lea.vmem [#allocation3], 16
    %v42 = vld [vmem:[%s41] sm:$0xf]
    %s43 = scalar_lea.vmem [#allocation2], 16
    %44 = vst [vmem:[%s43] sm:$0x3] %v42
    %s45 = scalar_lea.vmem [#allocation2], 62
    %46 = vst [vmem:[%s45] sm:$0xc] %v42
    %s47 = scalar_lea.vmem [#allocation3], 24
    %v48 = vld [vmem:[%s47] sm:$0xf]
    %s49 = scalar_lea.vmem [#allocation2], 24
    %50 = vst [vmem:[%s49] sm:$0x3] %v48
    %s51 = scalar_lea.vmem [#allocation2], 70
    %52 = vst [vmem:[%s51] sm:$0xc] %v48
    %s53 = scalar_lea.vmem [#allocation3], 32
    %v54 = vld [vmem:[%s53] sm:$0xf]
    %s55 = scalar_lea.vmem [#allocation2], 32
    %56 = vst [vmem:[%s55] sm:$0x3] %v54
    %s57 = scalar_lea.vmem [#allocation2], 78
    %58 = vst [vmem:[%s57] sm:$0xc] %v54
    %s59 = scalar_lea.vmem [#allocation3], 40
    %v60 = vld [vmem:[%s59] sm:$0xf]
    %s61 = scalar_lea.vmem [#allocation2], 40
    %62 = vst [vmem:[%s61] sm:$0x3] %v60
    %s63 = scalar_lea.vmem [#allocation2], 86
    %64 = vst [vmem:[%s63] sm:$0xc] %v60
    %s66 = sshllo.u32 0, 2
    %v68 = vld [vmem:[#allocation2] sm:%s66]
    %s69 = sshllo.u32 0, 2
    %70 = vst [vmem:[#allocation0] sm:%s69] %v68
    %s71 = scalar_lea.vmem [#allocation2], 8
    %v72 = vld [vmem:[%s71] sm:%s66]
    %s73 = sshllo.u32 0, 2
    %s74 = scalar_lea.vmem [#allocation0], 2
    %75 = vst [vmem:[%s74] sm:%s73] %v72
    %s76 = scalar_lea.vmem [#allocation2], 16
    %v77 = vld [vmem:[%s76] sm:%s66]
    %s78 = sshllo.u32 0, 2
    %s79 = smul.addr 2, 2
    %s80 = scalar_lea.vmem [#allocation0], %s79
    %81 = vst [vmem:[%s80] sm:%s78] %v77
    %s82 = scalar_lea.vmem [#allocation2], 24
    %v83 = vld [vmem:[%s82] sm:%s66]
    %s84 = sshllo.u32 0, 2
    %s85 = smul.addr 2, 3
    %s86 = scalar_lea.vmem [#allocation0], %s85
    %87 = vst [vmem:[%s86] sm:%s84] %v83
    %s88 = scalar_lea.vmem [#allocation2], 32
    %v89 = vld [vmem:[%s88] sm:%s66]
    %s90 = sshllo.u32 0, 2
    %s91 = smul.addr 2, 4
    %s92 = scalar_lea.vmem [#allocation0], %s91
    %93 = vst [vmem:[%s92] sm:%s90] %v89
    %s94 = scalar_lea.vmem [#allocation2], 40
    %v95 = vld [vmem:[%s94] sm:%s66]
    %s96 = sshllo.u32 0, 2
    %s97 = smul.addr 2, 5
    %s98 = scalar_lea.vmem [#allocation0], %s97
    %99 = vst [vmem:[%s98] sm:%s96] %v95
    %s100 = scalar_lea.vmem [#allocation2], 48
    %v101 = vld [vmem:[%s100] sm:%s66]
    %s102 = sshllo.u32 0, 2
    %s103 = smul.addr 2, 6
    %s104 = scalar_lea.vmem [#allocation0], %s103
    %105 = vst [vmem:[%s104] sm:%s102] %v101
    %s106 = scalar_lea.vmem [#allocation2], 56
    %v107 = vld [vmem:[%s106] sm:%s66]
    %s108 = sshllo.u32 0, 2
    %s109 = smul.addr 2, 7
    %s110 = scalar_lea.vmem [#allocation0], %s109
    %111 = vst [vmem:[%s110] sm:%s108] %v107
    %s112 = scalar_lea.vmem [#allocation2], 64
    %v113 = vld [vmem:[%s112] sm:%s66]
    %s114 = sshllo.u32 0, 2
    %s115 = smul.addr 2, 8
    %s116 = scalar_lea.vmem [#allocation0], %s115
    %117 = vst [vmem:[%s116] sm:%s114] %v113
    %s118 = scalar_lea.vmem [#allocation2], 72
    %v119 = vld [vmem:[%s118] sm:%s66]
    %s120 = sshllo.u32 0, 2
    %s121 = smul.addr 2, 9
    %s122 = scalar_lea.vmem [#allocation0], %s121
    %123 = vst [vmem:[%s122] sm:%s120] %v119
    %s124 = scalar_lea.vmem [#allocation2], 80
    %v125 = vld [vmem:[%s124] sm:%s66]
    %s126 = sshllo.u32 0, 2
    %s127 = smul.addr 2, 10
    %s128 = scalar_lea.vmem [#allocation0], %s127
    %129 = vst [vmem:[%s128] sm:%s126] %v125
    %s130 = scalar_lea.vmem [#allocation2], 88
    %v131 = vld [vmem:[%s130] sm:%s66]
    %s132 = sshllo.u32 0, 2
    %s133 = smul.addr 2, 11
    %s134 = scalar_lea.vmem [#allocation0], %s133
    %135 = vst [vmem:[%s134] sm:%s132] %v131
    %s137 = ssub.s32 384, 384
    %138 = vsyncadd [#allocation1], %s137
    %s140 = sshll.u32 [#allocation0], 4
    %s141 = int_to_ptr.vmem [resolvable:$true] %s140
    %143 = dma.vmem_to_hbm [thread:$0]  %s141, 384, %s1, [#allocation1]
    %144 = dma.done [#allocation1], 384
    %145 = vsyncpa [#allocation1], 1

// kernel: forward.1
$region0: #{forward.1}
  #allocation0 [shape = 'u32[]', space=smem, size = 0x4, offset = 0x4, fixed_abs, tag = 'smem constant byte address 0x4 - core index']
  #allocation1 [shape = 'u32[144,128]{1,0:T(1,128)}', space=vmem, size = 0x12000, scoped, tag = 'internal scratch']
  %s0 = inlined_call_operand.hbm [shape: f32[2,512], index: 0, kind: input, shape index: {}]
  %s1 = inlined_call_operand.vmem [shape: f32[2,512], index: 1, kind: input, shape index: {}]
  %s2 = inlined_call_operand.hbm [shape: f32[2,512], index: 2, kind: input, shape index: {}]
  %s3 = inlined_call_operand.hbm [shape: f32[2,2,512], index: 3, kind: input, shape index: {}]
  %s4 = inlined_call_operand.vmem [shape: bf16[512,32], index: 4, kind: input, shape index: {}]
  %s5 = inlined_call_operand.hbm [shape: f32[1,32], index: 5, kind: input, shape index: {}]
  %s6 = inlined_call_operand.hbm [shape: bf16[32,512], index: 6, kind: input, shape index: {}]
  %s7 = inlined_call_operand.hbm [shape: f32[1,512], index: 7, kind: input, shape index: {}]
  %s8 = inlined_call_operand.hbm [shape: bf16[512,768], index: 8, kind: input, shape index: {}]
  %s9 = inlined_call_operand.hbm [shape: f32[1,768], index: 9, kind: input, shape index: {}]
  %s10 = inlined_call_operand.hbm [shape: bf16[512,512], index: 10, kind: input, shape index: {}]
  %s11 = inlined_call_operand.hbm [shape: f32[1,512], index: 11, kind: input, shape index: {}]
  %s12 = inlined_call_operand.hbm [shape: bf16[2,512,768], index: 12, kind: input, shape index: {}]
  %s13 = inlined_call_operand.hbm [shape: f32[2,1,768], index: 13, kind: input, shape index: {}]
  %s14 = inlined_call_operand.vmem [shape: f32[4,512], index: 14, kind: output, shape index: {0}]
  %s15 = inlined_call_operand.hbm [shape: f32[2,768], index: 15, kind: output, shape index: {1}]
  %s16 = inlined_call_operand.vmem [shape: f32[2,4,768], index: 16, kind: output, shape index: {2}]
  %s17 = inlined_call_operand.vmem [shape: f32[2,1,1], index: 17, kind: output, shape index: {3}]
  %18 = xla_tuple %s14, %s15, %s16, %s17
  %s19 = sld [smem:[#allocation0]]
  $region138: #{forward.1} parent=0
    _
  %s21 = ssub.s32 1, %s19
  %s22 = scalar_select 0, %s21, %s19
  $region1: #{forward.1} parent=0
    #allocation2 [shape = 'u8[4096]{0}', space=vmem, size = 0x1000, scoped, tag = 'input window, operand 0, single buffered']
    #allocation3 [shape = 's32[1]{0}', space=sflag, size = 0x4, scoped, tag = 'scoped memory for forward.1']
    #allocation4 [shape = 's32[1]{0}', space=sflag, size = 0x4, scoped, tag = 'scoped memory for forward.1']
    #allocation5 [shape = 'u8[4096]{0}', space=vmem, size = 0x1000, scoped, tag = 'input window, operand 2, single buffered']
    #allocation6 [shape = 's32[1]{0}', space=sflag, size = 0x4, scoped, tag = 'scoped memory for forward.1']
    #allocation7 [shape = 'u8[8192]{0}', space=vmem, size = 0x2000, scoped, tag = 'input window, operand 3, single buffered']
    #allocation8 [shape = 'u8[512]{0}', space=vmem, size = 0x400, scoped, tag = 'input window, operand 5, single buffered']
    #allocation9 [shape = 's32[1]{0}', space=sflag, size = 0x4, scoped, tag = 'scoped memory for forward.1']
    #allocation10 [shape = 'u8[32768]{0}', space=vmem, size = 0x8000, scoped, tag = 'input window, operand 6, single buffered']
    #allocation11 [shape = 'u8[2048]{0}', space=vmem, size = 0x800, scoped, tag = 'input window, operand 7, single buffered']
    #allocation12 [shape = 's32[1]{0}', space=sflag, size = 0x4, scoped, tag = 'scoped memory for forward.1']
    #allocation13 [shape = 'u8[786432]{0}', space=vmem, size = 0xc0000, scoped, tag = 'input window, operand 8, single buffered']
    #allocation14 [shape = 'u8[3072]{0}', space=vmem, size = 0xc00, scoped, tag = 'input window, operand 9, single buffered']
    #allocation15 [shape = 's32[1]{0}', space=sflag, size = 0x4, scoped, tag = 'scoped memory for forward.1']
    #allocation16 [shape = 'u8[524288]{0}', space=vmem, size = 0x80000, scoped, tag = 'input window, operand 10, single buffered']
    #allocation17 [shape = 'u8[2048]{0}', space=vmem, size = 0x800, scoped, tag = 'input window, operand 11, single buffered']
    #allocation18 [shape = 's32[1]{0}', space=sflag, size = 0x4, scoped, tag = 'scoped memory for forward.1']
    #allocation19 [shape = 'u8[1572864]{0}', space=vmem, size = 0x180000, scoped, tag = 'input window, operand 12, single buffered']
    #allocation20 [shape = 'u8[6144]{0}', space=vmem, size = 0x1800, scoped, tag = 'input window, operand 13, single buffered']
    #allocation21 [shape = 's32[1]{0}', space=sflag, size = 0x4, scoped, tag = 'scoped memory for forward.1']
    #allocation22 [shape = 'u8[6144]{0}', space=vmem, size = 0x1800, scoped, tag = 'output window, operand 1, single buffered']
    %23 = vsyncpa [#allocation3], 0
    %24 = vsyncpa [#allocation6], 0
    %25 = vsyncpa [#allocation9], 0
    %26 = vsyncpa [#allocation12], 0
    %27 = vsyncpa [#allocation15], 0
    %28 = vsyncpa [#allocation18], 0
    %29 = vsyncpa [#allocation21], 0
    %30 = vsyncpa [#allocation4], 0
    // Predicated region
    $region2: #{forward.1} parent=1 // pred_check
      _
    $region3: #{forward.1} parent=1 // pred_check_branch
      %32 = sbr.rel (0) target = $region5
    $region4: #{forward.1} parent=1 // pred_region
      %s34 = ssub.s32 128, 128
      %35 = vsyncadd [#allocation3], %s34
      %s37 = sshll.u32 [#allocation2], 4
      %s38 = int_to_ptr.vmem [resolvable:$true] %s37
      %40 = dma.hbm_to_vmem [thread:$0]  %s0, 128, %s38, [#allocation3]
    $region5: #{forward.1} parent=1 // pred_fallthru
      _
    // Predicated region
    $region6: #{forward.1} parent=1 // pred_check
      _
    $region7: #{forward.1} parent=1 // pred_check_branch
      %42 = sbr.rel (0) target = $region9
    $region8: #{forward.1} parent=1 // pred_region
      _
    $region9: #{forward.1} parent=1 // pred_fallthru
      _
    // Predicated region
    $region10: #{forward.1} parent=1 // pred_check
      _
    $region11: #{forward.1} parent=1 // pred_check_branch
      %44 = sbr.rel (0) target = $region13
    $region12: #{forward.1} parent=1 // pred_region
      %s46 = ssub.s32 128, 128
      %47 = vsyncadd [#allocation6], %s46
      %s49 = sshll.u32 [#allocation5], 4
      %s50 = int_to_ptr.vmem [resolvable:$true] %s49
      %52 = dma.hbm_to_vmem [thread:$0]  %s2, 128, %s50, [#allocation6]
    $region13: #{forward.1} parent=1 // pred_fallthru
      _
    // Predicated region
    $region14: #{forward.1} parent=1 // pred_check
      _
    $region15: #{forward.1} parent=1 // pred_check_branch
      %54 = sbr.rel (0) target = $region17
    $region16: #{forward.1} parent=1 // pred_region
      %s56 = ssub.s32 256, 256
      %57 = vsyncadd [#allocation6], %s56
      %s58 = sshll.u32 [#allocation7], 4
      %s59 = int_to_ptr.vmem [resolvable:$true] %s58
      %64 = dma.hbm_to_vmem [thread:$0]  %s3, 256, %s59, [#allocation6], 128, 128, 8
    $region17: #{forward.1} parent=1 // pred_fallthru
      _
    // Predicated region
    $region18: #{forward.1} parent=1 // pred_check
      _
    $region19: #{forward.1} parent=1 // pred_check_branch
      %66 = sbr.rel (0) target = $region21
    $region20: #{forward.1} parent=1 // pred_region
      _
    $region21: #{forward.1} parent=1 // pred_fallthru
      _
    // Predicated region
    $region22: #{forward.1} parent=1 // pred_check
      _
    $region23: #{forward.1} parent=1 // pred_check_branch
      %68 = sbr.rel (0) target = $region25
    $region24: #{forward.1} parent=1 // pred_region
      %s70 = ssub.s32 16, 16
      %71 = vsyncadd [#allocation9], %s70
      %s73 = sshll.u32 [#allocation8], 4
      %s74 = int_to_ptr.vmem [resolvable:$true] %s73
      %76 = dma.hbm_to_vmem [thread:$0]  %s5, 16, %s74, [#allocation9]
    $region25: #{forward.1} parent=1 // pred_fallthru
      _
    // Predicated region
    $region26: #{forward.1} parent=1 // pred_check
      _
    $region27: #{forward.1} parent=1 // pred_check_branch
      %78 = sbr.rel (0) target = $region29
    $region28: #{forward.1} parent=1 // pred_region
      %s80 = ssub.s32 1024, 1024
      %81 = vsyncadd [#allocation9], %s80
      %s82 = sshll.u32 [#allocation10], 4
      %s83 = int_to_ptr.vmem [resolvable:$true] %s82
      %88 = dma.hbm_to_vmem [thread:$0]  %s6, 1024, %s83, [#allocation9], 256, 256, 16
    $region29: #{forward.1} parent=1 // pred_fallthru
      _
    // Predicated region
    $region30: #{forward.1} parent=1 // pred_check
      _
    $region31: #{forward.1} parent=1 // pred_check_branch
      %90 = sbr.rel (0) target = $region33
    $region32: #{forward.1} parent=1 // pred_region
      %s92 = ssub.s32 64, 64
      %93 = vsyncadd [#allocation12], %s92
      %s95 = sshll.u32 [#allocation11], 4
      %s96 = int_to_ptr.vmem [resolvable:$true] %s95
      %98 = dma.hbm_to_vmem [thread:$0]  %s7, 64, %s96, [#allocation12]
    $region33: #{forward.1} parent=1 // pred_fallthru
      _
    // Predicated region
    $region34: #{forward.1} parent=1 // pred_check
      _
    $region35: #{forward.1} parent=1 // pred_check_branch
      %100 = sbr.rel (0) target = $region37
    $region36: #{forward.1} parent=1 // pred_region
      %s102 = ssub.s32 24576, 24576
      %103 = vsyncadd [#allocation12], %s102
      %s104 = sshll.u32 [#allocation13], 4
      %s105 = int_to_ptr.vmem [resolvable:$true] %s104
      %110 = dma.hbm_to_vmem [thread:$0]  %s8, 24576, %s105, [#allocation12], 384, 384, 24
    $region37: #{forward.1} parent=1 // pred_fallthru
      _
    // Predicated region
    $region38: #{forward.1} parent=1 // pred_check
      _
    $region39: #{forward.1} parent=1 // pred_check_branch
      %112 = sbr.rel (0) target = $region41
    $region40: #{forward.1} parent=1 // pred_region
      %s114 = ssub.s32 96, 96
      %115 = vsyncadd [#allocation15], %s114
      %s117 = sshll.u32 [#allocation14], 4
      %s118 = int_to_ptr.vmem [resolvable:$true] %s117
      %120 = dma.hbm_to_vmem [thread:$0]  %s9, 96, %s118, [#allocation15]
    $region41: #{forward.1} parent=1 // pred_fallthru
      _
    // Predicated region
    $region42: #{forward.1} parent=1 // pred_check
      _
    $region43: #{forward.1} parent=1 // pred_check_branch
      %122 = sbr.rel (0) target = $region45
    $region44: #{forward.1} parent=1 // pred_region
      %s124 = ssub.s32 16384, 16384
      %125 = vsyncadd [#allocation15], %s124
      %s126 = sshll.u32 [#allocation16], 4
      %s127 = int_to_ptr.vmem [resolvable:$true] %s126
      %132 = dma.hbm_to_vmem [thread:$0]  %s10, 16384, %s127, [#allocation15], 256, 256, 16
    $region45: #{forward.1} parent=1 // pred_fallthru
      _
    // Predicated region
    $region46: #{forward.1} parent=1 // pred_check
      _
    $region47: #{forward.1} parent=1 // pred_check_branch
      %134 = sbr.rel (0) target = $region49
    $region48: #{forward.1} parent=1 // pred_region
      %s136 = ssub.s32 64, 64
      %137 = vsyncadd [#allocation18], %s136
      %s139 = sshll.u32 [#allocation17], 4
      %s140 = int_to_ptr.vmem [resolvable:$true] %s139
      %142 = dma.hbm_to_vmem [thread:$0]  %s11, 64, %s140, [#allocation18]
    $region49: #{forward.1} parent=1 // pred_fallthru
      _
    // Predicated region
    $region50: #{forward.1} parent=1 // pred_check
      _
    $region51: #{forward.1} parent=1 // pred_check_branch
      %144 = sbr.rel (0) target = $region53
    $region52: #{forward.1} parent=1 // pred_region
      %s146 = ssub.s32 49152, 49152
      %147 = vsyncadd [#allocation18], %s146
      %s148 = sshll.u32 [#allocation19], 4
      %s149 = int_to_ptr.vmem [resolvable:$true] %s148
      %154 = dma.hbm_to_vmem [thread:$0]  %s12, 49152, %s149, [#allocation18], 384, 384, 24
    $region53: #{forward.1} parent=1 // pred_fallthru
      _
    // Predicated region
    $region54: #{forward.1} parent=1 // pred_check
      _
    $region55: #{forward.1} parent=1 // pred_check_branch
      %156 = sbr.rel (0) target = $region57
    $region56: #{forward.1} parent=1 // pred_region
      %s158 = ssub.s32 192, 192
      %159 = vsyncadd [#allocation21], %s158
      %s160 = sshll.u32 [#allocation20], 4
      %s161 = int_to_ptr.vmem [resolvable:$true] %s160
      %166 = dma.hbm_to_vmem [thread:$0]  %s13, 192, %s161, [#allocation21], 96, 96, 6
    $region57: #{forward.1} parent=1 // pred_fallthru
      _
    // Predicated region
    $region58: #{forward.1} parent=1 // pred_check
      _
    $region59: #{forward.1} parent=1 // pred_check_branch
      %168 = sbr.rel (0) target = $region61
    $region60: #{forward.1} parent=1 // pred_region
      %169 = dma.done [#allocation3], 128
    $region61: #{forward.1} parent=1 // pred_fallthru
      _
    // Predicated region
    $region62: #{forward.1} parent=1 // pred_check
      _
    $region63: #{forward.1} parent=1 // pred_check_branch
      %171 = sbr.rel (0) target = $region65
    $region64: #{forward.1} parent=1 // pred_region
      %172 = dma.done [#allocation6], 128
    $region65: #{forward.1} parent=1 // pred_fallthru
      _
    // Predicated region
    $region66: #{forward.1} parent=1 // pred_check
      _
    $region67: #{forward.1} parent=1 // pred_check_branch
      %174 = sbr.rel (0) target = $region69
    $region68: #{forward.1} parent=1 // pred_region
      %175 = dma.done [#allocation6], 256
    $region69: #{forward.1} parent=1 // pred_fallthru
      _
    // Predicated region
    $region70: #{forward.1} parent=1 // pred_check
      _
    $region71: #{forward.1} parent=1 // pred_check_branch
      %177 = sbr.rel (0) target = $region73
    $region72: #{forward.1} parent=1 // pred_region
      %178 = dma.done [#allocation9], 16
    $region73: #{forward.1} parent=1 // pred_fallthru
      _
    // Predicated region
    $region74: #{forward.1} parent=1 // pred_check
      _
    $region75: #{forward.1} parent=1 // pred_check_branch
      %180 = sbr.rel (0) target = $region77
    $region76: #{forward.1} parent=1 // pred_region
      %181 = dma.done [#allocation9], 1024
    $region77: #{forward.1} parent=1 // pred_fallthru
      _
    // Predicated region
    $region78: #{forward.1} parent=1 // pred_check
      _
    $region79: #{forward.1} parent=1 // pred_check_branch
      %183 = sbr.rel (0) target = $region81
    $region80: #{forward.1} parent=1 // pred_region
      %184 = dma.done [#allocation12], 64
    $region81: #{forward.1} parent=1 // pred_fallthru
      _
    // Predicated region
    $region82: #{forward.1} parent=1 // pred_check
      _
    $region83: #{forward.1} parent=1 // pred_check_branch
      %186 = sbr.rel (0) target = $region85
    $region84: #{forward.1} parent=1 // pred_region
      %187 = dma.done [#allocation12], 24576
    $region85: #{forward.1} parent=1 // pred_fallthru
      _
    // Predicated region
    $region86: #{forward.1} parent=1 // pred_check
      _
    $region87: #{forward.1} parent=1 // pred_check_branch
      %189 = sbr.rel (0) target = $region89
    $region88: #{forward.1} parent=1 // pred_region
      %190 = dma.done [#allocation15], 96
    $region89: #{forward.1} parent=1 // pred_fallthru
      _
    // Predicated region
    $region90: #{forward.1} parent=1 // pred_check
      _
    $region91: #{forward.1} parent=1 // pred_check_branch
      %192 = sbr.rel (0) target = $region93
    $region92: #{forward.1} parent=1 // pred_region
      %193 = dma.done [#allocation15], 16384
    $region93: #{forward.1} parent=1 // pred_fallthru
      _
    // Predicated region
    $region94: #{forward.1} parent=1 // pred_check
      _
    $region95: #{forward.1} parent=1 // pred_check_branch
      %195 = sbr.rel (0) target = $region97
    $region96: #{forward.1} parent=1 // pred_region
      %196 = dma.done [#allocation18], 64
    $region97: #{forward.1} parent=1 // pred_fallthru
      _
    // Predicated region
    $region98: #{forward.1} parent=1 // pred_check
      _
    $region99: #{forward.1} parent=1 // pred_check_branch
      %198 = sbr.rel (0) target = $region101
    $region100: #{forward.1} parent=1 // pred_region
      %199 = dma.done [#allocation18], 49152
    $region101: #{forward.1} parent=1 // pred_fallthru
      _
    // Predicated region
    $region102: #{forward.1} parent=1 // pred_check
      _
    $region103: #{forward.1} parent=1 // pred_check_branch
      %201 = sbr.rel (0) target = $region105
    $region104: #{forward.1} parent=1 // pred_region
      %202 = dma.done [#allocation21], 192
    $region105: #{forward.1} parent=1 // pred_fallthru
      _
    %v204 = vld [vmem:[#allocation2] sm:$0xff]
    %v206 = vcombine.high %v204, %v204
    %v208 = vunpack.c.l.s4 1983009808
    %v209 = vunpack.c.0.s8 %v208
    %v210 = vlaneseq
    %v211 = vshrl.u32 %v210, 7
    %v212 = vsub.s32 %v209, %v211
    %v213 = vrot.slane %v204, %v212
    %v215 = vunpack.c.l.s4 1983009808
    %v216 = vunpack.c.0.s8 %v215
    %v217 = vlaneseq
    %v218 = vshrl.u32 %v217, 7
    %v219 = vsub.s32 %v216, %v218
    %v220 = vrot.slane %v206, %v219
    %v221 = vcombine.high %v213, %v213
    %v222 = vcombine.high %v220, %v220
    %v227 = vpack.c.bf16 %v213, %v213
    %v228 = vpack.c.bf16 %v221, %v221
    %v229 = vpack.c.bf16 %v220, %v220
    %v230 = vpack.c.bf16 %v222, %v222
    %v231 = vld [vmem:[%s4] sm:$0xf]
    %v232 = vld [vmem:[%s4 + $0x4] sm:$0xf]
    %v233 = vld [vmem:[%s4 + $0x8] sm:$0xf]
    %v234 = vld [vmem:[%s4 + $0xc] sm:$0xf]
    %v235 = vld [vmem:[%s4 + $0x10] sm:$0xf]
    %v236 = vld [vmem:[%s4 + $0x14] sm:$0xf]
    %v237 = vld [vmem:[%s4 + $0x18] sm:$0xf]
    %v238 = vld [vmem:[%s4 + $0x1c] sm:$0xf]
    %v239 = vld [vmem:[%s4 + $0x20] sm:$0xf]
    %v240 = vld [vmem:[%s4 + $0x24] sm:$0xf]
    %v241 = vld [vmem:[%s4 + $0x28] sm:$0xf]
    %v242 = vld [vmem:[%s4 + $0x2c] sm:$0xf]
    %v243 = vld [vmem:[%s4 + $0x30] sm:$0xf]
    %v244 = vld [vmem:[%s4 + $0x34] sm:$0xf]
    %v245 = vld [vmem:[%s4 + $0x38] sm:$0xf]
    %v246 = vld [vmem:[%s4 + $0x3c] sm:$0xf]
    %v247 = vld [vmem:[%s4 + $0x40] sm:$0xf]
    %v248 = vld [vmem:[%s4 + $0x44] sm:$0xf]
    %v249 = vld [vmem:[%s4 + $0x48] sm:$0xf]
    %v250 = vld [vmem:[%s4 + $0x4c] sm:$0xf]
    %v251 = vld [vmem:[%s4 + $0x50] sm:$0xf]
    %v252 = vld [vmem:[%s4 + $0x54] sm:$0xf]
    %v253 = vld [vmem:[%s4 + $0x58] sm:$0xf]
    %v254 = vld [vmem:[%s4 + $0x5c] sm:$0xf]
    %v255 = vld [vmem:[%s4 + $0x60] sm:$0xf]
    %v256 = vld [vmem:[%s4 + $0x64] sm:$0xf]
    %v257 = vld [vmem:[%s4 + $0x68] sm:$0xf]
    %v258 = vld [vmem:[%s4 + $0x6c] sm:$0xf]
    %v259 = vld [vmem:[%s4 + $0x70] sm:$0xf]
    %v260 = vld [vmem:[%s4 + $0x74] sm:$0xf]
    %v261 = vld [vmem:[%s4 + $0x78] sm:$0xf]
    %v262 = vld [vmem:[%s4 + $0x7c] sm:$0xf]
    %v263 = vld [vmem:[%s4 + $0x80] sm:$0xf]
    %v264 = vld [vmem:[%s4 + $0x84] sm:$0xf]
    %v265 = vld [vmem:[%s4 + $0x88] sm:$0xf]
    %v266 = vld [vmem:[%s4 + $0x8c] sm:$0xf]
    %v267 = vld [vmem:[%s4 + $0x90] sm:$0xf]
    %v268 = vld [vmem:[%s4 + $0x94] sm:$0xf]
    %v269 = vld [vmem:[%s4 + $0x98] sm:$0xf]
    %v270 = vld [vmem:[%s4 + $0x9c] sm:$0xf]
    %v271 = vld [vmem:[%s4 + $0xa0] sm:$0xf]
    %v272 = vld [vmem:[%s4 + $0xa4] sm:$0xf]
    %v273 = vld [vmem:[%s4 + $0xa8] sm:$0xf]
    %v274 = vld [vmem:[%s4 + $0xac] sm:$0xf]
    %v275 = vld [vmem:[%s4 + $0xb0] sm:$0xf]
    %v276 = vld [vmem:[%s4 + $0xb4] sm:$0xf]
    %v277 = vld [vmem:[%s4 + $0xb8] sm:$0xf]
    %v278 = vld [vmem:[%s4 + $0xbc] sm:$0xf]
    %v279 = vld [vmem:[%s4 + $0xc0] sm:$0xf]
    %v280 = vld [vmem:[%s4 + $0xc4] sm:$0xf]
    %v281 = vld [vmem:[%s4 + $0xc8] sm:$0xf]
    %v282 = vld [vmem:[%s4 + $0xcc] sm:$0xf]
    %v283 = vld [vmem:[%s4 + $0xd0] sm:$0xf]
    %v284 = vld [vmem:[%s4 + $0xd4] sm:$0xf]
    %v285 = vld [vmem:[%s4 + $0xd8] sm:$0xf]
    %v286 = vld [vmem:[%s4 + $0xdc] sm:$0xf]
    %v287 = vld [vmem:[%s4 + $0xe0] sm:$0xf]
    %v288 = vld [vmem:[%s4 + $0xe4] sm:$0xf]
    %v289 = vld [vmem:[%s4 + $0xe8] sm:$0xf]
    %v290 = vld [vmem:[%s4 + $0xec] sm:$0xf]
    %v291 = vld [vmem:[%s4 + $0xf0] sm:$0xf]
    %v292 = vld [vmem:[%s4 + $0xf4] sm:$0xf]
    %v293 = vld [vmem:[%s4 + $0xf8] sm:$0xf]
    %v294 = vld [vmem:[%s4 + $0xfc] sm:$0xf]
    %v295 = vld [vmem:[#allocation8] sm:$0x1]
    %v297 = vlaneseq
    %v298 = vshrl.u32 %v297, 7
    %v299 = vsub.s32 0, %v298
    %v300 = vrot.slane %v295, %v299
    %v366 = vunpack.c.l.b16 %v231
    %v367 = vunpack.c.l.b16 %v232
    %v368 = vunpack.c.l.b16 %v233
    %v369 = vunpack.c.l.b16 %v234
    %v370 = vunpack.c.l.b16 %v235
    %v371 = vunpack.c.l.b16 %v236
    %v372 = vunpack.c.l.b16 %v237
    %v373 = vunpack.c.l.b16 %v238
    %v374 = vunpack.c.l.b16 %v239
    %v375 = vunpack.c.l.b16 %v240
    %v376 = vunpack.c.l.b16 %v241
    %v377 = vunpack.c.l.b16 %v242
    %v378 = vunpack.c.l.b16 %v243
    %v379 = vunpack.c.l.b16 %v244
    %v380 = vunpack.c.l.b16 %v245
    %v381 = vunpack.c.l.b16 %v246
    %v382 = vunpack.c.l.b16 %v247
    %v383 = vunpack.c.l.b16 %v248
    %v384 = vunpack.c.l.b16 %v249
    %v385 = vunpack.c.l.b16 %v250
    %v386 = vunpack.c.l.b16 %v251
    %v387 = vunpack.c.l.b16 %v252
    %v388 = vunpack.c.l.b16 %v253
    %v389 = vunpack.c.l.b16 %v254
    %v390 = vunpack.c.l.b16 %v255
    %v391 = vunpack.c.l.b16 %v256
    %v392 = vunpack.c.l.b16 %v257
    %v393 = vunpack.c.l.b16 %v258
    %v394 = vunpack.c.l.b16 %v259
    %v395 = vunpack.c.l.b16 %v260
    %v396 = vunpack.c.l.b16 %v261
    %v397 = vunpack.c.l.b16 %v262
    %v398 = vunpack.c.l.b16 %v263
    %v399 = vunpack.c.l.b16 %v264
    %v400 = vunpack.c.l.b16 %v265
    %v401 = vunpack.c.l.b16 %v266
    %v402 = vunpack.c.l.b16 %v267
    %v403 = vunpack.c.l.b16 %v268
    %v404 = vunpack.c.l.b16 %v269
    %v405 = vunpack.c.l.b16 %v270
    %v406 = vunpack.c.l.b16 %v271
    %v407 = vunpack.c.l.b16 %v272
    %v408 = vunpack.c.l.b16 %v273
    %v409 = vunpack.c.l.b16 %v274
    %v410 = vunpack.c.l.b16 %v275
    %v411 = vunpack.c.l.b16 %v276
    %v412 = vunpack.c.l.b16 %v277
    %v413 = vunpack.c.l.b16 %v278
    %v414 = vunpack.c.l.b16 %v279
    %v415 = vunpack.c.l.b16 %v280
    %v416 = vunpack.c.l.b16 %v281
    %v417 = vunpack.c.l.b16 %v282
    %v418 = vunpack.c.l.b16 %v283
    %v419 = vunpack.c.l.b16 %v284
    %v420 = vunpack.c.l.b16 %v285
    %v421 = vunpack.c.l.b16 %v286
    %v422 = vunpack.c.l.b16 %v287
    %v423 = vunpack.c.l.b16 %v288
    %v424 = vunpack.c.l.b16 %v289
    %v425 = vunpack.c.l.b16 %v290
    %v426 = vunpack.c.l.b16 %v291
    %v427 = vunpack.c.l.b16 %v292
    %v428 = vunpack.c.l.b16 %v293
    %v429 = vunpack.c.l.b16 %v294
    %v430 = vpack.c.b16 %v367, %v366
    %v431 = vpack.c.b16 %v369, %v368
    %v432 = vpack.c.b16 %v371, %v370
    %v433 = vpack.c.b16 %v373, %v372
    %v434 = vpack.c.b16 %v375, %v374
    %v435 = vpack.c.b16 %v377, %v376
    %v436 = vpack.c.b16 %v379, %v378
    %v437 = vpack.c.b16 %v381, %v380
    %v438 = vpack.c.b16 %v383, %v382
    %v439 = vpack.c.b16 %v385, %v384
    %v440 = vpack.c.b16 %v387, %v386
    %v441 = vpack.c.b16 %v389, %v388
    %v442 = vpack.c.b16 %v391, %v390
    %v443 = vpack.c.b16 %v393, %v392
    %v444 = vpack.c.b16 %v395, %v394
    %v445 = vpack.c.b16 %v397, %v396
    %v446 = vpack.c.b16 %v399, %v398
    %v447 = vpack.c.b16 %v401, %v400
    %v448 = vpack.c.b16 %v403, %v402
    %v449 = vpack.c.b16 %v405, %v404
    %v450 = vpack.c.b16 %v407, %v406
    %v451 = vpack.c.b16 %v409, %v408
    %v452 = vpack.c.b16 %v411, %v410
    %v453 = vpack.c.b16 %v413, %v412
    %v454 = vpack.c.b16 %v415, %v414
    %v455 = vpack.c.b16 %v417, %v416
    %v456 = vpack.c.b16 %v419, %v418
    %v457 = vpack.c.b16 %v421, %v420
    %v458 = vpack.c.b16 %v423, %v422
    %v459 = vpack.c.b16 %v425, %v424
    %v460 = vpack.c.b16 %v427, %v426
    %v461 = vpack.c.b16 %v429, %v428
    %494 = vmatprep.subr.bf16.mxu0 0
    %495 = vmatpush1.bf16.msra.mxu0 %v430
    %496 = vmatprep.subr.bf16.mxu0 0
    %497 = vmatpush1.bf16.msra.mxu0 %v431
    %498 = vmatprep.subr.bf16.mxu0 0
    %499 = vmatpush1.bf16.msra.mxu0 %v432
    %500 = vmatprep.subr.bf16.mxu0 0
    %501 = vmatpush1.bf16.msra.mxu0 %v433
    %502 = vmatprep.subr.bf16.mxu0 0
    %503 = vmatpush1.bf16.msra.mxu0 %v434
    %504 = vmatprep.subr.bf16.mxu0 0
    %505 = vmatpush1.bf16.msra.mxu0 %v435
    %506 = vmatprep.subr.bf16.mxu0 0
    %507 = vmatpush1.bf16.msra.mxu0 %v436
    %508 = vmatprep.subr.bf16.mxu0 0
    %509 = vmatpush1.bf16.msra.mxu0 %v437
    %510 = vmatprep.subr.bf16.mxu0 0
    %511 = vmatpush1.bf16.msra.mxu0 %v438
    %512 = vmatprep.subr.bf16.mxu0 0
    %513 = vmatpush1.bf16.msra.mxu0 %v439
    %514 = vmatprep.subr.bf16.mxu0 0
    %515 = vmatpush1.bf16.msra.mxu0 %v440
    %516 = vmatprep.subr.bf16.mxu0 0
    %517 = vmatpush1.bf16.msra.mxu0 %v441
    %518 = vmatprep.subr.bf16.mxu0 0
    %519 = vmatpush1.bf16.msra.mxu0 %v442
    %520 = vmatprep.subr.bf16.mxu0 0
    %521 = vmatpush1.bf16.msra.mxu0 %v443
    %522 = vmatprep.subr.bf16.mxu0 0
    %523 = vmatpush1.bf16.msra.mxu0 %v444
    %524 = vmatprep.subr.bf16.mxu0 0
    %525 = vmatpush1.bf16.msra.mxu0 %v445
    %526 = vmatprep.mubr.bf16.mxu0 %v228
    %527 = vmatmul.mubr.bf16.gmra.mrb[0].mxu0 %v227
    %v528 = vpop.f32.mrb[0].mxu0
    %v529 = vadd.f32 %v300, %v528
    %v530 = vpop.f32.mrb[0].mxu0
    %v531 = vpop.f32.mrb[0].mxu0
    %v532 = vpop.f32.mrb[0].mxu0
    %533 = vdwg.mxu0
    %534 = vmatprep.subr.bf16.mxu0 0
    %535 = vmatpush1.bf16.msra.mxu0 %v446
    %536 = vmatprep.subr.bf16.mxu0 0
    %537 = vmatpush1.bf16.msra.mxu0 %v447
    %538 = vmatprep.subr.bf16.mxu0 0
    %539 = vmatpush1.bf16.msra.mxu0 %v448
    %540 = vmatprep.subr.bf16.mxu0 0
    %541 = vmatpush1.bf16.msra.mxu0 %v449
    %542 = vmatprep.subr.bf16.mxu0 0
    %543 = vmatpush1.bf16.msra.mxu0 %v450
    %544 = vmatprep.subr.bf16.mxu0 0
    %545 = vmatpush1.bf16.msra.mxu0 %v451
    %546 = vmatprep.subr.bf16.mxu0 0
    %547 = vmatpush1.bf16.msra.mxu0 %v452
    %548 = vmatprep.subr.bf16.mxu0 0
    %549 = vmatpush1.bf16.msra.mxu0 %v453
    %550 = vmatprep.subr.bf16.mxu0 0
    %551 = vmatpush1.bf16.msra.mxu0 %v454
    %552 = vmatprep.subr.bf16.mxu0 0
    %553 = vmatpush1.bf16.msra.mxu0 %v455
    %554 = vmatprep.subr.bf16.mxu0 0
    %555 = vmatpush1.bf16.msra.mxu0 %v456
    %556 = vmatprep.subr.bf16.mxu0 0
    %557 = vmatpush1.bf16.msra.mxu0 %v457
    %558 = vmatprep.subr.bf16.mxu0 0
    %559 = vmatpush1.bf16.msra.mxu0 %v458
    %560 = vmatprep.subr.bf16.mxu0 0
    %561 = vmatpush1.bf16.msra.mxu0 %v459
    %562 = vmatprep.subr.bf16.mxu0 0
    %563 = vmatpush1.bf16.msra.mxu0 %v460
    %564 = vmatprep.subr.bf16.mxu0 0
    %565 = vmatpush1.bf16.msra.mxu0 %v461
    %566 = vmatprep.mubr.bf16.mxu0 %v230
    %567 = vmatmul.mubr.bf16.gmra.mrb[0].mxu0 %v229
    %v568 = vpop.f32.mrb[0].mxu0
    %v569 = vadd.f32 %v529, %v568
    %v570 = vpop.f32.mrb[0].mxu0
    %v571 = vpop.f32.mrb[0].mxu0
    %v572 = vpop.f32.mrb[0].mxu0
    %573 = vdwg.mxu0
    %v574 = vmax.f32 %v569, 0.0
    %v575 = vpack.c.bf16 %v574, %v574
    %v576 = vld [vmem:[#allocation10] sm:$0xff]
    %v577 = vld [vmem:[#allocation10 + $0x8] sm:$0xff]
    %v578 = vld [vmem:[#allocation10 + $0x10] sm:$0xff]
    %v579 = vld [vmem:[#allocation10 + $0x18] sm:$0xff]
    %v580 = vld [vmem:[#allocation10 + $0x20] sm:$0xff]
    %v581 = vld [vmem:[#allocation10 + $0x28] sm:$0xff]
    %v582 = vld [vmem:[#allocation10 + $0x30] sm:$0xff]
    %v583 = vld [vmem:[#allocation10 + $0x38] sm:$0xff]
    %v584 = vld [vmem:[#allocation11] sm:$0xf]
    %v586 = vlaneseq
    %v587 = vshrl.u32 %v586, 7
    %v588 = vsub.s32 0, %v587
    %v589 = vrot.slane %v584, %v588
    %v590 = vlaneseq
    %v591 = vshrl.u32 %v590, 7
    %v592 = vsub.s32 1, %v591
    %v593 = vrot.slane %v584, %v592
    %v594 = vlaneseq
    %v595 = vshrl.u32 %v594, 7
    %v596 = vsub.s32 2, %v595
    %v597 = vrot.slane %v584, %v596
    %v598 = vlaneseq
    %v599 = vshrl.u32 %v598, 7
    %v600 = vsub.s32 3, %v599
    %v601 = vrot.slane %v584, %v600
    %v614 = vunpack.c.l.b16 %v576
    %v615 = vunpack.c.h.b16 %v576
    %v616 = vunpack.c.l.b16 %v577
    %v617 = vunpack.c.h.b16 %v577
    %v618 = vunpack.c.l.b16 %v578
    %v619 = vunpack.c.h.b16 %v578
    %v620 = vunpack.c.l.b16 %v579
    %v621 = vunpack.c.h.b16 %v579
    %v622 = vunpack.c.l.b16 %v580
    %v623 = vunpack.c.h.b16 %v580
    %v624 = vunpack.c.l.b16 %v581
    %v625 = vunpack.c.h.b16 %v581
    %v626 = vunpack.c.l.b16 %v582
    %v627 = vunpack.c.h.b16 %v582
    %v628 = vunpack.c.l.b16 %v583
    %v629 = vunpack.c.h.b16 %v583
    %v630 = vpack.c.b16 %v618, %v614
    %v631 = vpack.c.b16 %v619, %v615
    %v632 = vpack.c.b16 %v620, %v616
    %v633 = vpack.c.b16 %v621, %v617
    %v634 = vpack.c.b16 %v626, %v622
    %v635 = vpack.c.b16 %v627, %v623
    %v636 = vpack.c.b16 %v628, %v624
    %v637 = vpack.c.b16 %v629, %v625
    %vm646 = vcmask 261120
    %v648 = vsel %vm646, %v575, 0
    %650 = vmatprep.subr.bf16.mxu0 %v631
    %651 = vmatpush1.bf16.msra.mxu0 %v630
    %652 = vmatprep.subr.bf16.mxu0 %v635
    %653 = vmatpush1.bf16.msra.mxu0 %v634
    %654 = vmatprep.subr.bf16.mxu0 0
    %655 = vmatpush1.bf16.msra.mxu0 0
    %656 = vmatprep.subr.bf16.mxu0 0
    %657 = vmatpush1.bf16.msra.mxu0 0
    %658 = vmatprep.subr.bf16.mxu0 0
    %659 = vmatpush1.bf16.msra.mxu0 0
    %660 = vmatprep.subr.bf16.mxu0 0
    %661 = vmatpush1.bf16.msra.mxu0 0
    %662 = vmatprep.subr.bf16.mxu0 0
    %663 = vmatpush1.bf16.msra.mxu0 0
    %664 = vmatprep.subr.bf16.mxu0 0
    %665 = vmatpush1.bf16.msra.mxu0 0
    %666 = vmatprep.subr.bf16.mxu0 0
    %667 = vmatpush1.bf16.msra.mxu0 0
    %668 = vmatprep.subr.bf16.mxu0 0
    %669 = vmatpush1.bf16.msra.mxu0 0
    %670 = vmatprep.subr.bf16.mxu0 0
    %671 = vmatpush1.bf16.msra.mxu0 0
    %672 = vmatprep.subr.bf16.mxu0 0
    %673 = vmatpush1.bf16.msra.mxu0 0
    %674 = vmatprep.subr.bf16.mxu0 0
    %675 = vmatpush1.bf16.msra.mxu0 0
    %676 = vmatprep.subr.bf16.mxu0 0
    %677 = vmatpush1.bf16.msra.mxu0 0
    %678 = vmatprep.subr.bf16.mxu0 0
    %679 = vmatpush1.bf16.msra.mxu0 0
    %680 = vmatprep.subr.bf16.mxu0 0
    %681 = vmatpush1.bf16.msra.mxu0 0
    %682 = vmatprep.mubr.bf16.mxu0 0
    %683 = vmatmul.mubr.bf16.gmra.mrb[0].mxu0 %v648
    %v684 = vpop.f32.mrb[0].mxu0
    %v685 = vadd.f32 %v589, %v684
    %v686 = vpop.f32.mrb[0].mxu0
    %v687 = vadd.f32 %v593, %v686
    %v688 = vpop.f32.mrb[0].mxu0
    %v689 = vpop.f32.mrb[0].mxu0
    %690 = vdwg.mxu0
    %691 = vmatprep.subr.bf16.mxu0 %v633
    %692 = vmatpush1.bf16.msra.mxu0 %v632
    %693 = vmatprep.subr.bf16.mxu0 %v637
    %694 = vmatpush1.bf16.msra.mxu0 %v636
    %695 = vmatprep.subr.bf16.mxu0 0
    %696 = vmatpush1.bf16.msra.mxu0 0
    %697 = vmatprep.subr.bf16.mxu0 0
    %698 = vmatpush1.bf16.msra.mxu0 0
    %699 = vmatprep.subr.bf16.mxu0 0
    %700 = vmatpush1.bf16.msra.mxu0 0
    %701 = vmatprep.subr.bf16.mxu0 0
    %702 = vmatpush1.bf16.msra.mxu0 0
    %703 = vmatprep.subr.bf16.mxu0 0
    %704 = vmatpush1.bf16.msra.mxu0 0
    %705 = vmatprep.subr.bf16.mxu0 0
    %706 = vmatpush1.bf16.msra.mxu0 0
    %707 = vmatprep.subr.bf16.mxu0 0
    %708 = vmatpush1.bf16.msra.mxu0 0
    %709 = vmatprep.subr.bf16.mxu0 0
    %710 = vmatpush1.bf16.msra.mxu0 0
    %711 = vmatprep.subr.bf16.mxu0 0
    %712 = vmatpush1.bf16.msra.mxu0 0
    %713 = vmatprep.subr.bf16.mxu0 0
    %714 = vmatpush1.bf16.msra.mxu0 0
    %715 = vmatprep.subr.bf16.mxu0 0
    %716 = vmatpush1.bf16.msra.mxu0 0
    %717 = vmatprep.subr.bf16.mxu0 0
    %718 = vmatpush1.bf16.msra.mxu0 0
    %719 = vmatprep.subr.bf16.mxu0 0
    %720 = vmatpush1.bf16.msra.mxu0 0
    %721 = vmatprep.subr.bf16.mxu0 0
    %722 = vmatpush1.bf16.msra.mxu0 0
    %723 = vmatprep.mubr.bf16.mxu0 0
    %724 = vmatmul.mubr.bf16.gmra.mrb[0].mxu0 %v648
    %v725 = vpop.f32.mrb[0].mxu0
    %v726 = vadd.f32 %v597, %v725
    %v727 = vpop.f32.mrb[0].mxu0
    %v728 = vadd.f32 %v601, %v727
    %v729 = vpop.f32.mrb[0].mxu0
    %v730 = vpop.f32.mrb[0].mxu0
    %731 = vdwg.mxu0
    %vm732 = vcmask 1041408
    %v733 = vsel %vm732, %v213, 0.0
    %v734 = vsel %vm732, %v221, 0.0
    %v735 = vadd.f32 %v733, %v734
    %v736 = vsel %vm732, %v220, 0.0
    %v737 = vadd.f32 %v735, %v736
    %v738 = vsel %vm732, %v222, 0.0
    %v739 = vadd.f32 %v737, %v738
    %740 = vadd.xlane.f32.xlu0 %v739
    %v741 = vpop.xlane.xlu0 %740
    %v742 = vrot.slane %v741, 4
    %v743 = vadd.f32 %v741, %v742
    %v744 = vrot.slane %v743, 2
    %v745 = vadd.f32 %v743, %v744
    %v746 = vrot.slane %v745, 1
    %v747 = vadd.f32 %v745, %v746
    %s748 = vtos %v747
    %v749 = vstv %s748
    %v750 = vrcp.pop 1024.0
    %v751 = vmul.f32 %v749, %v750
    %v752 = vld [vmem:[%s1] sm:$0xff]
    %v753 = vmul.f32 %v752, %v751
    %v755 = vcombine.high %v753, %v753
    %v757 = vunpack.c.l.s4 1983009808
    %v758 = vunpack.c.0.s8 %v757
    %v759 = vlaneseq
    %v760 = vshrl.u32 %v759, 7
    %v761 = vsub.s32 %v758, %v760
    %v762 = vrot.slane %v753, %v761
    %v764 = vunpack.c.l.s4 1983009808
    %v765 = vunpack.c.0.s8 %v764
    %v766 = vlaneseq
    %v767 = vshrl.u32 %v766, 7
    %v768 = vsub.s32 %v765, %v767
    %v769 = vrot.slane %v755, %v768
    %v770 = vcombine.high %v762, %v762
    %v771 = vcombine.high %v769, %v769
    %v776 = vadd.f32 %v685, %v762
    %v777 = vadd.f32 %v687, %v770
    %v778 = vadd.f32 %v726, %v769
    %v779 = vadd.f32 %v728, %v771
    %v780 = vld [vmem:[#allocation5] sm:$0xff]
    %v781 = vlaneseq
    %v782 = vshrl.u32 %v781, 7
    %v783 = vsub.s32 0, %v782
    %v784 = vrot.slane %v776, %v783
    %v785 = vlaneseq
    %v786 = vshrl.u32 %v785, 7
    %v787 = vsub.s32 0, %v786
    %v788 = vrot.slane %v777, %v787
    %v789 = vlaneseq
    %v790 = vshrl.u32 %v789, 7
    %v791 = vsub.s32 0, %v790
    %v792 = vrot.slane %v778, %v791
    %v793 = vlaneseq
    %v794 = vshrl.u32 %v793, 7
    %v795 = vsub.s32 0, %v794
    %v796 = vrot.slane %v779, %v795
    %v801 = vcombine.low %v784, %v788
    %v802 = vcombine.low %v792, %v796
    %v804 = vunpack.c.l.s4 1983009808
    %v805 = vunpack.c.0.s8 %v804
    %v806 = vlaneseq
    %v807 = vshrl.u32 %v806, 7
    %v808 = vsub.s32 %v805, %v807
    %v809 = vrot.slane %v801, %v808
    %v811 = vunpack.c.l.s4 1983009808
    %v812 = vunpack.c.0.s8 %v811
    %v813 = vlaneseq
    %v814 = vshrl.u32 %v813, 7
    %v815 = vsub.s32 %v812, %v814
    %v816 = vrot.slane %v802, %v815
    %v817 = vcombine.low %v809, %v816
    %v819 = vadd.f32 %v780, %v817
    %v820 = vlaneseq
    %v821 = vshrl.u32 %v820, 7
    %v822 = vsub.s32 1, %v821
    %v823 = vrot.slane %v776, %v822
    %v824 = vlaneseq
    %v825 = vshrl.u32 %v824, 7
    %v826 = vsub.s32 1, %v825
    %v827 = vrot.slane %v777, %v826
    %v828 = vlaneseq
    %v829 = vshrl.u32 %v828, 7
    %v830 = vsub.s32 1, %v829
    %v831 = vrot.slane %v778, %v830
    %v832 = vlaneseq
    %v833 = vshrl.u32 %v832, 7
    %v834 = vsub.s32 1, %v833
    %v835 = vrot.slane %v779, %v834
    %v840 = vcombine.low %v823, %v827
    %v841 = vcombine.low %v831, %v835
    %v843 = vunpack.c.l.s4 1983009808
    %v844 = vunpack.c.0.s8 %v843
    %v845 = vlaneseq
    %v846 = vshrl.u32 %v845, 7
    %v847 = vsub.s32 %v844, %v846
    %v848 = vrot.slane %v840, %v847
    %v850 = vunpack.c.l.s4 1983009808
    %v851 = vunpack.c.0.s8 %v850
    %v852 = vlaneseq
    %v853 = vshrl.u32 %v852, 7
    %v854 = vsub.s32 %v851, %v853
    %v855 = vrot.slane %v841, %v854
    %v856 = vcombine.low %v848, %v855
    %v858 = vadd.f32 %v780, %v856
    %v860 = vcombine.high %v819, %v819
    %v862 = vunpack.c.l.s4 1983009808
    %v863 = vunpack.c.0.s8 %v862
    %v864 = vlaneseq
    %v865 = vshrl.u32 %v864, 7
    %v866 = vsub.s32 %v863, %v865
    %v867 = vrot.slane %v819, %v866
    %v869 = vunpack.c.l.s4 1983009808
    %v870 = vunpack.c.0.s8 %v869
    %v871 = vlaneseq
    %v872 = vshrl.u32 %v871, 7
    %v873 = vsub.s32 %v870, %v872
    %v874 = vrot.slane %v860, %v873
    %v875 = vcombine.high %v867, %v867
    %v876 = vcombine.high %v874, %v874
    %v882 = vcombine.low %v858, %v858
    %v884 = vunpack.c.l.s4 1983009808
    %v885 = vunpack.c.0.s8 %v884
    %v886 = vlaneseq
    %v887 = vshrl.u32 %v886, 7
    %v888 = vsub.s32 %v885, %v887
    %v889 = vrot.slane %v882, %v888
    %v891 = vunpack.c.l.s4 1983009808
    %v892 = vunpack.c.0.s8 %v891
    %v893 = vlaneseq
    %v894 = vshrl.u32 %v893, 7
    %v895 = vsub.s32 %v892, %v894
    %v896 = vrot.slane %v858, %v895
    %v897 = vcombine.high %v889, %v889
    %v898 = vcombine.high %v896, %v896
    %v903 = vsel %vm732, %v867, %v889
    %v904 = vsel %vm732, %v875, %v897
    %v905 = vsel %vm732, %v874, %v896
    %v906 = vsel %vm732, %v876, %v898
    %v907 = vpack.c.bf16 %v903, %v903
    %v908 = vpack.c.bf16 %v904, %v904
    %v909 = vpack.c.bf16 %v905, %v905
    %v910 = vpack.c.bf16 %v906, %v906
    %v911 = vld [vmem:[#allocation16] sm:$0xff]
    %v912 = vld [vmem:[#allocation16 + $0x8] sm:$0xff]
    %v913 = vld [vmem:[#allocation16 + $0x10] sm:$0xff]
    %v914 = vld [vmem:[#allocation16 + $0x18] sm:$0xff]
    %v915 = vld [vmem:[#allocation16 + $0x20] sm:$0xff]
    %v916 = vld [vmem:[#allocation16 + $0x28] sm:$0xff]
    %v917 = vld [vmem:[#allocation16 + $0x30] sm:$0xff]
    %v918 = vld [vmem:[#allocation16 + $0x38] sm:$0xff]
    %v919 = vld [vmem:[#allocation16 + $0x40] sm:$0xff]
    %v920 = vld [vmem:[#allocation16 + $0x48] sm:$0xff]
    %v921 = vld [vmem:[#allocation16 + $0x50] sm:$0xff]
    %v922 = vld [vmem:[#allocation16 + $0x58] sm:$0xff]
    %v923 = vld [vmem:[#allocation16 + $0x60] sm:$0xff]
    %v924 = vld [vmem:[#allocation16 + $0x68] sm:$0xff]
    %v925 = vld [vmem:[#allocation16 + $0x70] sm:$0xff]
    %v926 = vld [vmem:[#allocation16 + $0x78] sm:$0xff]
    %v927 = vld [vmem:[#allocation16 + $0x80] sm:$0xff]
    %v928 = vld [vmem:[#allocation16 + $0x88] sm:$0xff]
    %v929 = vld [vmem:[#allocation16 + $0x90] sm:$0xff]
    %v930 = vld [vmem:[#allocation16 + $0x98] sm:$0xff]
    %v931 = vld [vmem:[#allocation16 + $0xa0] sm:$0xff]
    %v932 = vld [vmem:[#allocation16 + $0xa8] sm:$0xff]
    %v933 = vld [vmem:[#allocation16 + $0xb0] sm:$0xff]
    %v934 = vld [vmem:[#allocation16 + $0xb8] sm:$0xff]
    %v935 = vld [vmem:[#allocation16 + $0xc0] sm:$0xff]
    %v936 = vld [vmem:[#allocation16 + $0xc8] sm:$0xff]
    %v937 = vld [vmem:[#allocation16 + $0xd0] sm:$0xff]
    %v938 = vld [vmem:[#allocation16 + $0xd8] sm:$0xff]
    %v939 = vld [vmem:[#allocation16 + $0xe0] sm:$0xff]
    %v940 = vld [vmem:[#allocation16 + $0xe8] sm:$0xff]
    %v941 = vld [vmem:[#allocation16 + $0xf0] sm:$0xff]
    %v942 = vld [vmem:[#allocation16 + $0xf8] sm:$0xff]
    %v943 = vld [vmem:[#allocation16 + $0x100] sm:$0xff]
    %v944 = vld [vmem:[#allocation16 + $0x108] sm:$0xff]
    %v945 = vld [vmem:[#allocation16 + $0x110] sm:$0xff]
    %v946 = vld [vmem:[#allocation16 + $0x118] sm:$0xff]
    %v947 = vld [vmem:[#allocation16 + $0x120] sm:$0xff]
    %v948 = vld [vmem:[#allocation16 + $0x128] sm:$0xff]
    %v949 = vld [vmem:[#allocation16 + $0x130] sm:$0xff]
    %v950 = vld [vmem:[#allocation16 + $0x138] sm:$0xff]
    %v951 = vld [vmem:[#allocation16 + $0x140] sm:$0xff]
    %v952 = vld [vmem:[#allocation16 + $0x148] sm:$0xff]
    %v953 = vld [vmem:[#allocation16 + $0x150] sm:$0xff]
    %v954 = vld [vmem:[#allocation16 + $0x158] sm:$0xff]
    %v955 = vld [vmem:[#allocation16 + $0x160] sm:$0xff]
    %v956 = vld [vmem:[#allocation16 + $0x168] sm:$0xff]
    %v957 = vld [vmem:[#allocation16 + $0x170] sm:$0xff]
    %v958 = vld [vmem:[#allocation16 + $0x178] sm:$0xff]
    %v959 = vld [vmem:[#allocation16 + $0x180] sm:$0xff]
    %v960 = vld [vmem:[#allocation16 + $0x188] sm:$0xff]
    %v961 = vld [vmem:[#allocation16 + $0x190] sm:$0xff]
    %v962 = vld [vmem:[#allocation16 + $0x198] sm:$0xff]
    %v963 = vld [vmem:[#allocation16 + $0x1a0] sm:$0xff]
    %v964 = vld [vmem:[#allocation16 + $0x1a8] sm:$0xff]
    %v965 = vld [vmem:[#allocation16 + $0x1b0] sm:$0xff]
    %v966 = vld [vmem:[#allocation16 + $0x1b8] sm:$0xff]
    %v967 = vld [vmem:[#allocation16 + $0x1c0] sm:$0xff]
    %v968 = vld [vmem:[#allocation16 + $0x1c8] sm:$0xff]
    %v969 = vld [vmem:[#allocation16 + $0x1d0] sm:$0xff]
    %v970 = vld [vmem:[#allocation16 + $0x1d8] sm:$0xff]
    %v971 = vld [vmem:[#allocation16 + $0x1e0] sm:$0xff]
    %v972 = vld [vmem:[#allocation16 + $0x1e8] sm:$0xff]
    %v973 = vld [vmem:[#allocation16 + $0x1f0] sm:$0xff]
    %v974 = vld [vmem:[#allocation16 + $0x1f8] sm:$0xff]
    %v975 = vld [vmem:[#allocation16 + $0x200] sm:$0xff]
    %v976 = vld [vmem:[#allocation16 + $0x208] sm:$0xff]
    %v977 = vld [vmem:[#allocation16 + $0x210] sm:$0xff]
    %v978 = vld [vmem:[#allocation16 + $0x218] sm:$0xff]
    %v979 = vld [vmem:[#allocation16 + $0x220] sm:$0xff]
    %v980 = vld [vmem:[#allocation16 + $0x228] sm:$0xff]
    %v981 = vld [vmem:[#allocation16 + $0x230] sm:$0xff]
    %v982 = vld [vmem:[#allocation16 + $0x238] sm:$0xff]
    %v983 = vld [vmem:[#allocation16 + $0x240] sm:$0xff]
    %v984 = vld [vmem:[#allocation16 + $0x248] sm:$0xff]
    %v985 = vld [vmem:[#allocation16 + $0x250] sm:$0xff]
    %v986 = vld [vmem:[#allocation16 + $0x258] sm:$0xff]
    %v987 = vld [vmem:[#allocation16 + $0x260] sm:$0xff]
    %v988 = vld [vmem:[#allocation16 + $0x268] sm:$0xff]
    %v989 = vld [vmem:[#allocation16 + $0x270] sm:$0xff]
    %v990 = vld [vmem:[#allocation16 + $0x278] sm:$0xff]
    %v991 = vld [vmem:[#allocation16 + $0x280] sm:$0xff]
    %v992 = vld [vmem:[#allocation16 + $0x288] sm:$0xff]
    %v993 = vld [vmem:[#allocation16 + $0x290] sm:$0xff]
    %v994 = vld [vmem:[#allocation16 + $0x298] sm:$0xff]
    %v995 = vld [vmem:[#allocation16 + $0x2a0] sm:$0xff]
    %v996 = vld [vmem:[#allocation16 + $0x2a8] sm:$0xff]
    %v997 = vld [vmem:[#allocation16 + $0x2b0] sm:$0xff]
    %v998 = vld [vmem:[#allocation16 + $0x2b8] sm:$0xff]
    %v999 = vld [vmem:[#allocation16 + $0x2c0] sm:$0xff]
    %v1000 = vld [vmem:[#allocation16 + $0x2c8] sm:$0xff]
    %v1001 = vld [vmem:[#allocation16 + $0x2d0] sm:$0xff]
    %v1002 = vld [vmem:[#allocation16 + $0x2d8] sm:$0xff]
    %v1003 = vld [vmem:[#allocation16 + $0x2e0] sm:$0xff]
    %v1004 = vld [vmem:[#allocation16 + $0x2e8] sm:$0xff]
    %v1005 = vld [vmem:[#allocation16 + $0x2f0] sm:$0xff]
    %v1006 = vld [vmem:[#allocation16 + $0x2f8] sm:$0xff]
    %v1007 = vld [vmem:[#allocation16 + $0x300] sm:$0xff]
    %v1008 = vld [vmem:[#allocation16 + $0x308] sm:$0xff]
    %v1009 = vld [vmem:[#allocation16 + $0x310] sm:$0xff]
    %v1010 = vld [vmem:[#allocation16 + $0x318] sm:$0xff]
    %v1011 = vld [vmem:[#allocation16 + $0x320] sm:$0xff]
    %v1012 = vld [vmem:[#allocation16 + $0x328] sm:$0xff]
    %v1013 = vld [vmem:[#allocation16 + $0x330] sm:$0xff]
    %v1014 = vld [vmem:[#allocation16 + $0x338] sm:$0xff]
    %v1015 = vld [vmem:[#allocation16 + $0x340] sm:$0xff]
    %v1016 = vld [vmem:[#allocation16 + $0x348] sm:$0xff]
    %v1017 = vld [vmem:[#allocation16 + $0x350] sm:$0xff]
    %v1018 = vld [vmem:[#allocation16 + $0x358] sm:$0xff]
    %v1019 = vld [vmem:[#allocation16 + $0x360] sm:$0xff]
    %v1020 = vld [vmem:[#allocation16 + $0x368] sm:$0xff]
    %v1021 = vld [vmem:[#allocation16 + $0x370] sm:$0xff]
    %v1022 = vld [vmem:[#allocation16 + $0x378] sm:$0xff]
    %v1023 = vld [vmem:[#allocation16 + $0x380] sm:$0xff]
    %v1024 = vld [vmem:[#allocation16 + $0x388] sm:$0xff]
    %v1025 = vld [vmem:[#allocation16 + $0x390] sm:$0xff]
    %v1026 = vld [vmem:[#allocation16 + $0x398] sm:$0xff]
    %v1027 = vld [vmem:[#allocation16 + $0x3a0] sm:$0xff]
    %v1028 = vld [vmem:[#allocation16 + $0x3a8] sm:$0xff]
    %v1029 = vld [vmem:[#allocation16 + $0x3b0] sm:$0xff]
    %v1030 = vld [vmem:[#allocation16 + $0x3b8] sm:$0xff]
    %v1031 = vld [vmem:[#allocation16 + $0x3c0] sm:$0xff]
    %v1032 = vld [vmem:[#allocation16 + $0x3c8] sm:$0xff]
    %v1033 = vld [vmem:[#allocation16 + $0x3d0] sm:$0xff]
    %v1034 = vld [vmem:[#allocation16 + $0x3d8] sm:$0xff]
    %v1035 = vld [vmem:[#allocation16 + $0x3e0] sm:$0xff]
    %v1036 = vld [vmem:[#allocation16 + $0x3e8] sm:$0xff]
    %v1037 = vld [vmem:[#allocation16 + $0x3f0] sm:$0xff]
    %v1038 = vld [vmem:[#allocation16 + $0x3f8] sm:$0xff]
    %v1039 = vld [vmem:[#allocation17] sm:$0xf]
    %v1041 = vlaneseq
    %v1042 = vshrl.u32 %v1041, 7
    %v1043 = vsub.s32 0, %v1042
    %v1044 = vrot.slane %v1039, %v1043
    %v1045 = vlaneseq
    %v1046 = vshrl.u32 %v1045, 7
    %v1047 = vsub.s32 1, %v1046
    %v1048 = vrot.slane %v1039, %v1047
    %v1049 = vlaneseq
    %v1050 = vshrl.u32 %v1049, 7
    %v1051 = vsub.s32 2, %v1050
    %v1052 = vrot.slane %v1039, %v1051
    %v1053 = vlaneseq
    %v1054 = vshrl.u32 %v1053, 7
    %v1055 = vsub.s32 3, %v1054
    %v1056 = vrot.slane %v1039, %v1055
    %v1189 = vunpack.c.l.b16 %v911
    %v1190 = vunpack.c.h.b16 %v911
    %v1191 = vunpack.c.l.b16 %v912
    %v1192 = vunpack.c.h.b16 %v912
    %v1193 = vunpack.c.l.b16 %v913
    %v1194 = vunpack.c.h.b16 %v913
    %v1195 = vunpack.c.l.b16 %v914
    %v1196 = vunpack.c.h.b16 %v914
    %v1197 = vunpack.c.l.b16 %v915
    %v1198 = vunpack.c.h.b16 %v915
    %v1199 = vunpack.c.l.b16 %v916
    %v1200 = vunpack.c.h.b16 %v916
    %v1201 = vunpack.c.l.b16 %v917
    %v1202 = vunpack.c.h.b16 %v917
    %v1203 = vunpack.c.l.b16 %v918
    %v1204 = vunpack.c.h.b16 %v918
    %v1205 = vunpack.c.l.b16 %v919
    %v1206 = vunpack.c.h.b16 %v919
    %v1207 = vunpack.c.l.b16 %v920
    %v1208 = vunpack.c.h.b16 %v920
    %v1209 = vunpack.c.l.b16 %v921
    %v1210 = vunpack.c.h.b16 %v921
    %v1211 = vunpack.c.l.b16 %v922
    %v1212 = vunpack.c.h.b16 %v922
    %v1213 = vunpack.c.l.b16 %v923
    %v1214 = vunpack.c.h.b16 %v923
    %v1215 = vunpack.c.l.b16 %v924
    %v1216 = vunpack.c.h.b16 %v924
    %v1217 = vunpack.c.l.b16 %v925
    %v1218 = vunpack.c.h.b16 %v925
    %v1219 = vunpack.c.l.b16 %v926
    %v1220 = vunpack.c.h.b16 %v926
    %v1221 = vunpack.c.l.b16 %v927
    %v1222 = vunpack.c.h.b16 %v927
    %v1223 = vunpack.c.l.b16 %v928
    %v1224 = vunpack.c.h.b16 %v928
    %v1225 = vunpack.c.l.b16 %v929
    %v1226 = vunpack.c.h.b16 %v929
    %v1227 = vunpack.c.l.b16 %v930
    %v1228 = vunpack.c.h.b16 %v930
    %v1229 = vunpack.c.l.b16 %v931
    %v1230 = vunpack.c.h.b16 %v931
    %v1231 = vunpack.c.l.b16 %v932
    %v1232 = vunpack.c.h.b16 %v932
    %v1233 = vunpack.c.l.b16 %v933
    %v1234 = vunpack.c.h.b16 %v933
    %v1235 = vunpack.c.l.b16 %v934
    %v1236 = vunpack.c.h.b16 %v934
    %v1237 = vunpack.c.l.b16 %v935
    %v1238 = vunpack.c.h.b16 %v935
    %v1239 = vunpack.c.l.b16 %v936
    %v1240 = vunpack.c.h.b16 %v936
    %v1241 = vunpack.c.l.b16 %v937
    %v1242 = vunpack.c.h.b16 %v937
    %v1243 = vunpack.c.l.b16 %v938
    %v1244 = vunpack.c.h.b16 %v938
    %v1245 = vunpack.c.l.b16 %v939
    %v1246 = vunpack.c.h.b16 %v939
    %v1247 = vunpack.c.l.b16 %v940
    %v1248 = vunpack.c.h.b16 %v940
    %v1249 = vunpack.c.l.b16 %v941
    %v1250 = vunpack.c.h.b16 %v941
    %v1251 = vunpack.c.l.b16 %v942
    %v1252 = vunpack.c.h.b16 %v942
    %v1253 = vunpack.c.l.b16 %v943
    %v1254 = vunpack.c.h.b16 %v943
    %v1255 = vunpack.c.l.b16 %v944
    %v1256 = vunpack.c.h.b16 %v944
    %v1257 = vunpack.c.l.b16 %v945
    %v1258 = vunpack.c.h.b16 %v945
    %v1259 = vunpack.c.l.b16 %v946
    %v1260 = vunpack.c.h.b16 %v946
    %v1261 = vunpack.c.l.b16 %v947
    %v1262 = vunpack.c.h.b16 %v947
    %v1263 = vunpack.c.l.b16 %v948
    %v1264 = vunpack.c.h.b16 %v948
    %v1265 = vunpack.c.l.b16 %v949
    %v1266 = vunpack.c.h.b16 %v949
    %v1267 = vunpack.c.l.b16 %v950
    %v1268 = vunpack.c.h.b16 %v950
    %v1269 = vunpack.c.l.b16 %v951
    %v1270 = vunpack.c.h.b16 %v951
    %v1271 = vunpack.c.l.b16 %v952
    %v1272 = vunpack.c.h.b16 %v952
    %v1273 = vunpack.c.l.b16 %v953
    %v1274 = vunpack.c.h.b16 %v953
    %v1275 = vunpack.c.l.b16 %v954
    %v1276 = vunpack.c.h.b16 %v954
    %v1277 = vunpack.c.l.b16 %v955
    %v1278 = vunpack.c.h.b16 %v955
    %v1279 = vunpack.c.l.b16 %v956
    %v1280 = vunpack.c.h.b16 %v956
    %v1281 = vunpack.c.l.b16 %v957
    %v1282 = vunpack.c.h.b16 %v957
    %v1283 = vunpack.c.l.b16 %v958
    %v1284 = vunpack.c.h.b16 %v958
    %v1285 = vunpack.c.l.b16 %v959
    %v1286 = vunpack.c.h.b16 %v959
    %v1287 = vunpack.c.l.b16 %v960
    %v1288 = vunpack.c.h.b16 %v960
    %v1289 = vunpack.c.l.b16 %v961
    %v1290 = vunpack.c.h.b16 %v961
    %v1291 = vunpack.c.l.b16 %v962
    %v1292 = vunpack.c.h.b16 %v962
    %v1293 = vunpack.c.l.b16 %v963
    %v1294 = vunpack.c.h.b16 %v963
    %v1295 = vunpack.c.l.b16 %v964
    %v1296 = vunpack.c.h.b16 %v964
    %v1297 = vunpack.c.l.b16 %v965
    %v1298 = vunpack.c.h.b16 %v965
    %v1299 = vunpack.c.l.b16 %v966
    %v1300 = vunpack.c.h.b16 %v966
    %v1301 = vunpack.c.l.b16 %v967
    %v1302 = vunpack.c.h.b16 %v967
    %v1303 = vunpack.c.l.b16 %v968
    %v1304 = vunpack.c.h.b16 %v968
    %v1305 = vunpack.c.l.b16 %v969
    %v1306 = vunpack.c.h.b16 %v969
    %v1307 = vunpack.c.l.b16 %v970
    %v1308 = vunpack.c.h.b16 %v970
    %v1309 = vunpack.c.l.b16 %v971
    %v1310 = vunpack.c.h.b16 %v971
    %v1311 = vunpack.c.l.b16 %v972
    %v1312 = vunpack.c.h.b16 %v972
    %v1313 = vunpack.c.l.b16 %v973
    %v1314 = vunpack.c.h.b16 %v973
    %v1315 = vunpack.c.l.b16 %v974
    %v1316 = vunpack.c.h.b16 %v974
    %v1317 = vunpack.c.l.b16 %v975
    %v1318 = vunpack.c.h.b16 %v975
    %v1319 = vunpack.c.l.b16 %v976
    %v1320 = vunpack.c.h.b16 %v976
    %v1321 = vunpack.c.l.b16 %v977
    %v1322 = vunpack.c.h.b16 %v977
    %v1323 = vunpack.c.l.b16 %v978
    %v1324 = vunpack.c.h.b16 %v978
    %v1325 = vunpack.c.l.b16 %v979
    %v1326 = vunpack.c.h.b16 %v979
    %v1327 = vunpack.c.l.b16 %v980
    %v1328 = vunpack.c.h.b16 %v980
    %v1329 = vunpack.c.l.b16 %v981
    %v1330 = vunpack.c.h.b16 %v981
    %v1331 = vunpack.c.l.b16 %v982
    %v1332 = vunpack.c.h.b16 %v982
    %v1333 = vunpack.c.l.b16 %v983
    %v1334 = vunpack.c.h.b16 %v983
    %v1335 = vunpack.c.l.b16 %v984
    %v1336 = vunpack.c.h.b16 %v984
    %v1337 = vunpack.c.l.b16 %v985
    %v1338 = vunpack.c.h.b16 %v985
    %v1339 = vunpack.c.l.b16 %v986
    %v1340 = vunpack.c.h.b16 %v986
    %v1341 = vunpack.c.l.b16 %v987
    %v1342 = vunpack.c.h.b16 %v987
    %v1343 = vunpack.c.l.b16 %v988
    %v1344 = vunpack.c.h.b16 %v988
    %v1345 = vunpack.c.l.b16 %v989
    %v1346 = vunpack.c.h.b16 %v989
    %v1347 = vunpack.c.l.b16 %v990
    %v1348 = vunpack.c.h.b16 %v990
    %v1349 = vunpack.c.l.b16 %v991
    %v1350 = vunpack.c.h.b16 %v991
    %v1351 = vunpack.c.l.b16 %v992
    %v1352 = vunpack.c.h.b16 %v992
    %v1353 = vunpack.c.l.b16 %v993
    %v1354 = vunpack.c.h.b16 %v993
    %v1355 = vunpack.c.l.b16 %v994
    %v1356 = vunpack.c.h.b16 %v994
    %v1357 = vunpack.c.l.b16 %v995
    %v1358 = vunpack.c.h.b16 %v995
    %v1359 = vunpack.c.l.b16 %v996
    %v1360 = vunpack.c.h.b16 %v996
    %v1361 = vunpack.c.l.b16 %v997
    %v1362 = vunpack.c.h.b16 %v997
    %v1363 = vunpack.c.l.b16 %v998
    %v1364 = vunpack.c.h.b16 %v998
    %v1365 = vunpack.c.l.b16 %v999
    %v1366 = vunpack.c.h.b16 %v999
    %v1367 = vunpack.c.l.b16 %v1000
    %v1368 = vunpack.c.h.b16 %v1000
    %v1369 = vunpack.c.l.b16 %v1001
    %v1370 = vunpack.c.h.b16 %v1001
    %v1371 = vunpack.c.l.b16 %v1002
    %v1372 = vunpack.c.h.b16 %v1002
    %v1373 = vunpack.c.l.b16 %v1003
    %v1374 = vunpack.c.h.b16 %v1003
    %v1375 = vunpack.c.l.b16 %v1004
    %v1376 = vunpack.c.h.b16 %v1004
    %v1377 = vunpack.c.l.b16 %v1005
    %v1378 = vunpack.c.h.b16 %v1005
    %v1379 = vunpack.c.l.b16 %v1006
    %v1380 = vunpack.c.h.b16 %v1006
    %v1381 = vunpack.c.l.b16 %v1007
    %v1382 = vunpack.c.h.b16 %v1007
    %v1383 = vunpack.c.l.b16 %v1008
    %v1384 = vunpack.c.h.b16 %v1008
    %v1385 = vunpack.c.l.b16 %v1009
    %v1386 = vunpack.c.h.b16 %v1009
    %v1387 = vunpack.c.l.b16 %v1010
    %v1388 = vunpack.c.h.b16 %v1010
    %v1389 = vunpack.c.l.b16 %v1011
    %v1390 = vunpack.c.h.b16 %v1011
    %v1391 = vunpack.c.l.b16 %v1012
    %v1392 = vunpack.c.h.b16 %v1012
    %v1393 = vunpack.c.l.b16 %v1013
    %v1394 = vunpack.c.h.b16 %v1013
    %v1395 = vunpack.c.l.b16 %v1014
    %v1396 = vunpack.c.h.b16 %v1014
    %v1397 = vunpack.c.l.b16 %v1015
    %v1398 = vunpack.c.h.b16 %v1015
    %v1399 = vunpack.c.l.b16 %v1016
    %v1400 = vunpack.c.h.b16 %v1016
    %v1401 = vunpack.c.l.b16 %v1017
    %v1402 = vunpack.c.h.b16 %v1017
    %v1403 = vunpack.c.l.b16 %v1018
    %v1404 = vunpack.c.h.b16 %v1018
    %v1405 = vunpack.c.l.b16 %v1019
    %v1406 = vunpack.c.h.b16 %v1019
    %v1407 = vunpack.c.l.b16 %v1020
    %v1408 = vunpack.c.h.b16 %v1020
    %v1409 = vunpack.c.l.b16 %v1021
    %v1410 = vunpack.c.h.b16 %v1021
    %v1411 = vunpack.c.l.b16 %v1022
    %v1412 = vunpack.c.h.b16 %v1022
    %v1413 = vunpack.c.l.b16 %v1023
    %v1414 = vunpack.c.h.b16 %v1023
    %v1415 = vunpack.c.l.b16 %v1024
    %v1416 = vunpack.c.h.b16 %v1024
    %v1417 = vunpack.c.l.b16 %v1025
    %v1418 = vunpack.c.h.b16 %v1025
    %v1419 = vunpack.c.l.b16 %v1026
    %v1420 = vunpack.c.h.b16 %v1026
    %v1421 = vunpack.c.l.b16 %v1027
    %v1422 = vunpack.c.h.b16 %v1027
    %v1423 = vunpack.c.l.b16 %v1028
    %v1424 = vunpack.c.h.b16 %v1028
    %v1425 = vunpack.c.l.b16 %v1029
    %v1426 = vunpack.c.h.b16 %v1029
    %v1427 = vunpack.c.l.b16 %v1030
    %v1428 = vunpack.c.h.b16 %v1030
    %v1429 = vunpack.c.l.b16 %v1031
    %v1430 = vunpack.c.h.b16 %v1031
    %v1431 = vunpack.c.l.b16 %v1032
    %v1432 = vunpack.c.h.b16 %v1032
    %v1433 = vunpack.c.l.b16 %v1033
    %v1434 = vunpack.c.h.b16 %v1033
    %v1435 = vunpack.c.l.b16 %v1034
    %v1436 = vunpack.c.h.b16 %v1034
    %v1437 = vunpack.c.l.b16 %v1035
    %v1438 = vunpack.c.h.b16 %v1035
    %v1439 = vunpack.c.l.b16 %v1036
    %v1440 = vunpack.c.h.b16 %v1036
    %v1441 = vunpack.c.l.b16 %v1037
    %v1442 = vunpack.c.h.b16 %v1037
    %v1443 = vunpack.c.l.b16 %v1038
    %v1444 = vunpack.c.h.b16 %v1038
    %v1445 = vpack.c.b16 %v1193, %v1189
    %v1446 = vpack.c.b16 %v1194, %v1190
    %v1447 = vpack.c.b16 %v1195, %v1191
    %v1448 = vpack.c.b16 %v1196, %v1192
    %v1449 = vpack.c.b16 %v1201, %v1197
    %v1450 = vpack.c.b16 %v1202, %v1198
    %v1451 = vpack.c.b16 %v1203, %v1199
    %v1452 = vpack.c.b16 %v1204, %v1200
    %v1453 = vpack.c.b16 %v1209, %v1205
    %v1454 = vpack.c.b16 %v1210, %v1206
    %v1455 = vpack.c.b16 %v1211, %v1207
    %v1456 = vpack.c.b16 %v1212, %v1208
    %v1457 = vpack.c.b16 %v1217, %v1213
    %v1458 = vpack.c.b16 %v1218, %v1214
    %v1459 = vpack.c.b16 %v1219, %v1215
    %v1460 = vpack.c.b16 %v1220, %v1216
    %v1461 = vpack.c.b16 %v1225, %v1221
    %v1462 = vpack.c.b16 %v1226, %v1222
    %v1463 = vpack.c.b16 %v1227, %v1223
    %v1464 = vpack.c.b16 %v1228, %v1224
    %v1465 = vpack.c.b16 %v1233, %v1229
    %v1466 = vpack.c.b16 %v1234, %v1230
    %v1467 = vpack.c.b16 %v1235, %v1231
    %v1468 = vpack.c.b16 %v1236, %v1232
    %v1469 = vpack.c.b16 %v1241, %v1237
    %v1470 = vpack.c.b16 %v1242, %v1238
    %v1471 = vpack.c.b16 %v1243, %v1239
    %v1472 = vpack.c.b16 %v1244, %v1240
    %v1473 = vpack.c.b16 %v1249, %v1245
    %v1474 = vpack.c.b16 %v1250, %v1246
    %v1475 = vpack.c.b16 %v1251, %v1247
    %v1476 = vpack.c.b16 %v1252, %v1248
    %v1477 = vpack.c.b16 %v1257, %v1253
    %v1478 = vpack.c.b16 %v1258, %v1254
    %v1479 = vpack.c.b16 %v1259, %v1255
    %v1480 = vpack.c.b16 %v1260, %v1256
    %v1481 = vpack.c.b16 %v1265, %v1261
    %v1482 = vpack.c.b16 %v1266, %v1262
    %v1483 = vpack.c.b16 %v1267, %v1263
    %v1484 = vpack.c.b16 %v1268, %v1264
    %v1485 = vpack.c.b16 %v1273, %v1269
    %v1486 = vpack.c.b16 %v1274, %v1270
    %v1487 = vpack.c.b16 %v1275, %v1271
    %v1488 = vpack.c.b16 %v1276, %v1272
    %v1489 = vpack.c.b16 %v1281, %v1277
    %v1490 = vpack.c.b16 %v1282, %v1278
    %v1491 = vpack.c.b16 %v1283, %v1279
    %v1492 = vpack.c.b16 %v1284, %v1280
    %v1493 = vpack.c.b16 %v1289, %v1285
    %v1494 = vpack.c.b16 %v1290, %v1286
    %v1495 = vpack.c.b16 %v1291, %v1287
    %v1496 = vpack.c.b16 %v1292, %v1288
    %v1497 = vpack.c.b16 %v1297, %v1293
    %v1498 = vpack.c.b16 %v1298, %v1294
    %v1499 = vpack.c.b16 %v1299, %v1295
    %v1500 = vpack.c.b16 %v1300, %v1296
    %v1501 = vpack.c.b16 %v1305, %v1301
    %v1502 = vpack.c.b16 %v1306, %v1302
    %v1503 = vpack.c.b16 %v1307, %v1303
    %v1504 = vpack.c.b16 %v1308, %v1304
    %v1505 = vpack.c.b16 %v1313, %v1309
    %v1506 = vpack.c.b16 %v1314, %v1310
    %v1507 = vpack.c.b16 %v1315, %v1311
    %v1508 = vpack.c.b16 %v1316, %v1312
    %v1509 = vpack.c.b16 %v1321, %v1317
    %v1510 = vpack.c.b16 %v1322, %v1318
    %v1511 = vpack.c.b16 %v1323, %v1319
    %v1512 = vpack.c.b16 %v1324, %v1320
    %v1513 = vpack.c.b16 %v1329, %v1325
    %v1514 = vpack.c.b16 %v1330, %v1326
    %v1515 = vpack.c.b16 %v1331, %v1327
    %v1516 = vpack.c.b16 %v1332, %v1328
    %v1517 = vpack.c.b16 %v1337, %v1333
    %v1518 = vpack.c.b16 %v1338, %v1334
    %v1519 = vpack.c.b16 %v1339, %v1335
    %v1520 = vpack.c.b16 %v1340, %v1336
    %v1521 = vpack.c.b16 %v1345, %v1341
    %v1522 = vpack.c.b16 %v1346, %v1342
    %v1523 = vpack.c.b16 %v1347, %v1343
    %v1524 = vpack.c.b16 %v1348, %v1344
    %v1525 = vpack.c.b16 %v1353, %v1349
    %v1526 = vpack.c.b16 %v1354, %v1350
    %v1527 = vpack.c.b16 %v1355, %v1351
    %v1528 = vpack.c.b16 %v1356, %v1352
    %v1529 = vpack.c.b16 %v1361, %v1357
    %v1530 = vpack.c.b16 %v1362, %v1358
    %v1531 = vpack.c.b16 %v1363, %v1359
    %v1532 = vpack.c.b16 %v1364, %v1360
    %v1533 = vpack.c.b16 %v1369, %v1365
    %v1534 = vpack.c.b16 %v1370, %v1366
    %v1535 = vpack.c.b16 %v1371, %v1367
    %v1536 = vpack.c.b16 %v1372, %v1368
    %v1537 = vpack.c.b16 %v1377, %v1373
    %v1538 = vpack.c.b16 %v1378, %v1374
    %v1539 = vpack.c.b16 %v1379, %v1375
    %v1540 = vpack.c.b16 %v1380, %v1376
    %v1541 = vpack.c.b16 %v1385, %v1381
    %v1542 = vpack.c.b16 %v1386, %v1382
    %v1543 = vpack.c.b16 %v1387, %v1383
    %v1544 = vpack.c.b16 %v1388, %v1384
    %v1545 = vpack.c.b16 %v1393, %v1389
    %v1546 = vpack.c.b16 %v1394, %v1390
    %v1547 = vpack.c.b16 %v1395, %v1391
    %v1548 = vpack.c.b16 %v1396, %v1392
    %v1549 = vpack.c.b16 %v1401, %v1397
    %v1550 = vpack.c.b16 %v1402, %v1398
    %v1551 = vpack.c.b16 %v1403, %v1399
    %v1552 = vpack.c.b16 %v1404, %v1400
    %v1553 = vpack.c.b16 %v1409, %v1405
    %v1554 = vpack.c.b16 %v1410, %v1406
    %v1555 = vpack.c.b16 %v1411, %v1407
    %v1556 = vpack.c.b16 %v1412, %v1408
    %v1557 = vpack.c.b16 %v1417, %v1413
    %v1558 = vpack.c.b16 %v1418, %v1414
    %v1559 = vpack.c.b16 %v1419, %v1415
    %v1560 = vpack.c.b16 %v1420, %v1416
    %v1561 = vpack.c.b16 %v1425, %v1421
    %v1562 = vpack.c.b16 %v1426, %v1422
    %v1563 = vpack.c.b16 %v1427, %v1423
    %v1564 = vpack.c.b16 %v1428, %v1424
    %v1565 = vpack.c.b16 %v1433, %v1429
    %v1566 = vpack.c.b16 %v1434, %v1430
    %v1567 = vpack.c.b16 %v1435, %v1431
    %v1568 = vpack.c.b16 %v1436, %v1432
    %v1569 = vpack.c.b16 %v1441, %v1437
    %v1570 = vpack.c.b16 %v1442, %v1438
    %v1571 = vpack.c.b16 %v1443, %v1439
    %v1572 = vpack.c.b16 %v1444, %v1440
    %1701 = vmatprep.subr.bf16.mxu0 %v1446
    %1702 = vmatpush1.bf16.msra.mxu0 %v1445
    %1703 = vmatprep.subr.bf16.mxu0 %v1450
    %1704 = vmatpush1.bf16.msra.mxu0 %v1449
    %1705 = vmatprep.subr.bf16.mxu0 %v1454
    %1706 = vmatpush1.bf16.msra.mxu0 %v1453
    %1707 = vmatprep.subr.bf16.mxu0 %v1458
    %1708 = vmatpush1.bf16.msra.mxu0 %v1457
    %1709 = vmatprep.subr.bf16.mxu0 %v1462
    %1710 = vmatpush1.bf16.msra.mxu0 %v1461
    %1711 = vmatprep.subr.bf16.mxu0 %v1466
    %1712 = vmatpush1.bf16.msra.mxu0 %v1465
    %1713 = vmatprep.subr.bf16.mxu0 %v1470
    %1714 = vmatpush1.bf16.msra.mxu0 %v1469
    %1715 = vmatprep.subr.bf16.mxu0 %v1474
    %1716 = vmatpush1.bf16.msra.mxu0 %v1473
    %1717 = vmatprep.subr.bf16.mxu0 %v1478
    %1718 = vmatpush1.bf16.msra.mxu0 %v1477
    %1719 = vmatprep.subr.bf16.mxu0 %v1482
    %1720 = vmatpush1.bf16.msra.mxu0 %v1481
    %1721 = vmatprep.subr.bf16.mxu0 %v1486
    %1722 = vmatpush1.bf16.msra.mxu0 %v1485
    %1723 = vmatprep.subr.bf16.mxu0 %v1490
    %1724 = vmatpush1.bf16.msra.mxu0 %v1489
    %1725 = vmatprep.subr.bf16.mxu0 %v1494
    %1726 = vmatpush1.bf16.msra.mxu0 %v1493
    %1727 = vmatprep.subr.bf16.mxu0 %v1498
    %1728 = vmatpush1.bf16.msra.mxu0 %v1497
    %1729 = vmatprep.subr.bf16.mxu0 %v1502
    %1730 = vmatpush1.bf16.msra.mxu0 %v1501
    %1731 = vmatprep.subr.bf16.mxu0 %v1506
    %1732 = vmatpush1.bf16.msra.mxu0 %v1505
    %1733 = vmatprep.mubr.bf16.mxu0 %v908
    %1734 = vmatmul.mubr.bf16.gmra.mrb[0].mxu0 %v907
    %v1735 = vpop.f32.mrb[0].mxu0
    %v1736 = vadd.f32 %v1044, %v1735
    %v1737 = vpop.f32.mrb[0].mxu0
    %v1738 = vadd.f32 %v1048, %v1737
    %v1739 = vpop.f32.mrb[0].mxu0
    %v1740 = vpop.f32.mrb[0].mxu0
    %1741 = vdwg.mxu0
    %1742 = vmatprep.subr.bf16.mxu0 %v1510
    %1743 = vmatpush1.bf16.msra.mxu0 %v1509
    %1744 = vmatprep.subr.bf16.mxu0 %v1514
    %1745 = vmatpush1.bf16.msra.mxu0 %v1513
    %1746 = vmatprep.subr.bf16.mxu0 %v1518
    %1747 = vmatpush1.bf16.msra.mxu0 %v1517
    %1748 = vmatprep.subr.bf16.mxu0 %v1522
    %1749 = vmatpush1.bf16.msra.mxu0 %v1521
    %1750 = vmatprep.subr.bf16.mxu0 %v1526
    %1751 = vmatpush1.bf16.msra.mxu0 %v1525
    %1752 = vmatprep.subr.bf16.mxu0 %v1530
    %1753 = vmatpush1.bf16.msra.mxu0 %v1529
    %1754 = vmatprep.subr.bf16.mxu0 %v1534
    %1755 = vmatpush1.bf16.msra.mxu0 %v1533
    %1756 = vmatprep.subr.bf16.mxu0 %v1538
    %1757 = vmatpush1.bf16.msra.mxu0 %v1537
    %1758 = vmatprep.subr.bf16.mxu0 %v1542
    %1759 = vmatpush1.bf16.msra.mxu0 %v1541
    %1760 = vmatprep.subr.bf16.mxu0 %v1546
    %1761 = vmatpush1.bf16.msra.mxu0 %v1545
    %1762 = vmatprep.subr.bf16.mxu0 %v1550
    %1763 = vmatpush1.bf16.msra.mxu0 %v1549
    %1764 = vmatprep.subr.bf16.mxu0 %v1554
    %1765 = vmatpush1.bf16.msra.mxu0 %v1553
    %1766 = vmatprep.subr.bf16.mxu0 %v1558
    %1767 = vmatpush1.bf16.msra.mxu0 %v1557
    %1768 = vmatprep.subr.bf16.mxu0 %v1562
    %1769 = vmatpush1.bf16.msra.mxu0 %v1561
    %1770 = vmatprep.subr.bf16.mxu0 %v1566
    %1771 = vmatpush1.bf16.msra.mxu0 %v1565
    %1772 = vmatprep.subr.bf16.mxu0 %v1570
    %1773 = vmatpush1.bf16.msra.mxu0 %v1569
    %1774 = vmatprep.mubr.bf16.mxu0 %v910
    %1775 = vmatmul.mubr.bf16.gmra.mrb[0].mxu0 %v909
    %v1776 = vpop.f32.mrb[0].mxu0
    %v1777 = vadd.f32 %v1736, %v1776
    %v1778 = vpop.f32.mrb[0].mxu0
    %v1779 = vadd.f32 %v1738, %v1778
    %v1780 = vpop.f32.mrb[0].mxu0
    %v1781 = vpop.f32.mrb[0].mxu0
    %1782 = vdwg.mxu0
    %1783 = vmatprep.subr.bf16.mxu0 %v1448
    %1784 = vmatpush1.bf16.msra.mxu0 %v1447
    %1785 = vmatprep.subr.bf16.mxu0 %v1452
    %1786 = vmatpush1.bf16.msra.mxu0 %v1451
    %1787 = vmatprep.subr.bf16.mxu0 %v1456
    %1788 = vmatpush1.bf16.msra.mxu0 %v1455
    %1789 = vmatprep.subr.bf16.mxu0 %v1460
    %1790 = vmatpush1.bf16.msra.mxu0 %v1459
    %1791 = vmatprep.subr.bf16.mxu0 %v1464
    %1792 = vmatpush1.bf16.msra.mxu0 %v1463
    %1793 = vmatprep.subr.bf16.mxu0 %v1468
    %1794 = vmatpush1.bf16.msra.mxu0 %v1467
    %1795 = vmatprep.subr.bf16.mxu0 %v1472
    %1796 = vmatpush1.bf16.msra.mxu0 %v1471
    %1797 = vmatprep.subr.bf16.mxu0 %v1476
    %1798 = vmatpush1.bf16.msra.mxu0 %v1475
    %1799 = vmatprep.subr.bf16.mxu0 %v1480
    %1800 = vmatpush1.bf16.msra.mxu0 %v1479
    %1801 = vmatprep.subr.bf16.mxu0 %v1484
    %1802 = vmatpush1.bf16.msra.mxu0 %v1483
    %1803 = vmatprep.subr.bf16.mxu0 %v1488
    %1804 = vmatpush1.bf16.msra.mxu0 %v1487
    %1805 = vmatprep.subr.bf16.mxu0 %v1492
    %1806 = vmatpush1.bf16.msra.mxu0 %v1491
    %1807 = vmatprep.subr.bf16.mxu0 %v1496
    %1808 = vmatpush1.bf16.msra.mxu0 %v1495
    %1809 = vmatprep.subr.bf16.mxu0 %v1500
    %1810 = vmatpush1.bf16.msra.mxu0 %v1499
    %1811 = vmatprep.subr.bf16.mxu0 %v1504
    %1812 = vmatpush1.bf16.msra.mxu0 %v1503
    %1813 = vmatprep.subr.bf16.mxu0 %v1508
    %1814 = vmatpush1.bf16.msra.mxu0 %v1507
    %1815 = vmatprep.mubr.bf16.mxu0 %v908
    %1816 = vmatmul.mubr.bf16.gmra.mrb[0].mxu0 %v907
    %v1817 = vpop.f32.mrb[0].mxu0
    %v1818 = vadd.f32 %v1052, %v1817
    %v1819 = vpop.f32.mrb[0].mxu0
    %v1820 = vadd.f32 %v1056, %v1819
    %v1821 = vpop.f32.mrb[0].mxu0
    %v1822 = vpop.f32.mrb[0].mxu0
    %1823 = vdwg.mxu0
    %1824 = vmatprep.subr.bf16.mxu0 %v1512
    %1825 = vmatpush1.bf16.msra.mxu0 %v1511
    %1826 = vmatprep.subr.bf16.mxu0 %v1516
    %1827 = vmatpush1.bf16.msra.mxu0 %v1515
    %1828 = vmatprep.subr.bf16.mxu0 %v1520
    %1829 = vmatpush1.bf16.msra.mxu0 %v1519
    %1830 = vmatprep.subr.bf16.mxu0 %v1524
    %1831 = vmatpush1.bf16.msra.mxu0 %v1523
    %1832 = vmatprep.subr.bf16.mxu0 %v1528
    %1833 = vmatpush1.bf16.msra.mxu0 %v1527
    %1834 = vmatprep.subr.bf16.mxu0 %v1532
    %1835 = vmatpush1.bf16.msra.mxu0 %v1531
    %1836 = vmatprep.subr.bf16.mxu0 %v1536
    %1837 = vmatpush1.bf16.msra.mxu0 %v1535
    %1838 = vmatprep.subr.bf16.mxu0 %v1540
    %1839 = vmatpush1.bf16.msra.mxu0 %v1539
    %1840 = vmatprep.subr.bf16.mxu0 %v1544
    %1841 = vmatpush1.bf16.msra.mxu0 %v1543
    %1842 = vmatprep.subr.bf16.mxu0 %v1548
    %1843 = vmatpush1.bf16.msra.mxu0 %v1547
    %1844 = vmatprep.subr.bf16.mxu0 %v1552
    %1845 = vmatpush1.bf16.msra.mxu0 %v1551
    %1846 = vmatprep.subr.bf16.mxu0 %v1556
    %1847 = vmatpush1.bf16.msra.mxu0 %v1555
    %1848 = vmatprep.subr.bf16.mxu0 %v1560
    %1849 = vmatpush1.bf16.msra.mxu0 %v1559
    %1850 = vmatprep.subr.bf16.mxu0 %v1564
    %1851 = vmatpush1.bf16.msra.mxu0 %v1563
    %1852 = vmatprep.subr.bf16.mxu0 %v1568
    %1853 = vmatpush1.bf16.msra.mxu0 %v1567
    %1854 = vmatprep.subr.bf16.mxu0 %v1572
    %1855 = vmatpush1.bf16.msra.mxu0 %v1571
    %1856 = vmatprep.mubr.bf16.mxu0 %v910
    %1857 = vmatmul.mubr.bf16.gmra.mrb[0].mxu0 %v909
    %v1858 = vpop.f32.mrb[0].mxu0
    %v1859 = vadd.f32 %v1818, %v1858
    %v1860 = vpop.f32.mrb[0].mxu0
    %v1861 = vadd.f32 %v1820, %v1860
    %v1862 = vpop.f32.mrb[0].mxu0
    %v1863 = vpop.f32.mrb[0].mxu0
    %1864 = vdwg.mxu0
    %v1869 = vcombine.low %v1777, %v1779
    %v1870 = vcombine.low %v1859, %v1861
    %1873 = vst [vmem:[%s14] sm:$0xff] %v1869
    %1874 = vst [vmem:[%s14 + $0x8] sm:$0xff] %v1870
    %v1876 = vcombine.high %v780, %v780
    %v1878 = vunpack.c.l.s4 1983009808
    %v1879 = vunpack.c.0.s8 %v1878
    %v1880 = vlaneseq
    %v1881 = vshrl.u32 %v1880, 7
    %v1882 = vsub.s32 %v1879, %v1881
    %v1883 = vrot.slane %v780, %v1882
    %v1885 = vunpack.c.l.s4 1983009808
    %v1886 = vunpack.c.0.s8 %v1885
    %v1887 = vlaneseq
    %v1888 = vshrl.u32 %v1887, 7
    %v1889 = vsub.s32 %v1886, %v1888
    %v1890 = vrot.slane %v1876, %v1889
    %v1891 = vcombine.high %v1883, %v1883
    %v1892 = vcombine.high %v1890, %v1890
    %v1897 = vpack.c.bf16 %v1883, %v1883
    %v1898 = vpack.c.bf16 %v1891, %v1891
    %v1899 = vpack.c.bf16 %v1890, %v1890
    %v1900 = vpack.c.bf16 %v1892, %v1892
    %v1901 = vld [vmem:[#allocation13] sm:$0xff]
    %v1902 = vld [vmem:[#allocation13 + $0x8] sm:$0xff]
    %v1903 = vld [vmem:[#allocation13 + $0x10] sm:$0xff]
    %v1904 = vld [vmem:[#allocation13 + $0x18] sm:$0xff]
    %v1905 = vld [vmem:[#allocation13 + $0x20] sm:$0xff]
    %v1906 = vld [vmem:[#allocation13 + $0x28] sm:$0xff]
    %v1907 = vld [vmem:[#allocation13 + $0x30] sm:$0xff]
    %v1908 = vld [vmem:[#allocation13 + $0x38] sm:$0xff]
    %v1909 = vld [vmem:[#allocation13 + $0x40] sm:$0xff]
    %v1910 = vld [vmem:[#allocation13 + $0x48] sm:$0xff]
    %v1911 = vld [vmem:[#allocation13 + $0x50] sm:$0xff]
    %v1912 = vld [vmem:[#allocation13 + $0x58] sm:$0xff]
    %v1913 = vld [vmem:[#allocation13 + $0x60] sm:$0xff]
    %v1914 = vld [vmem:[#allocation13 + $0x68] sm:$0xff]
    %v1915 = vld [vmem:[#allocation13 + $0x70] sm:$0xff]
    %v1916 = vld [vmem:[#allocation13 + $0x78] sm:$0xff]
    %v1917 = vld [vmem:[#allocation13 + $0x80] sm:$0xff]
    %v1918 = vld [vmem:[#allocation13 + $0x88] sm:$0xff]
    %v1919 = vld [vmem:[#allocation13 + $0x90] sm:$0xff]
    %v1920 = vld [vmem:[#allocation13 + $0x98] sm:$0xff]
    %v1921 = vld [vmem:[#allocation13 + $0xa0] sm:$0xff]
    %v1922 = vld [vmem:[#allocation13 + $0xa8] sm:$0xff]
    %v1923 = vld [vmem:[#allocation13 + $0xb0] sm:$0xff]
    %v1924 = vld [vmem:[#allocation13 + $0xb8] sm:$0xff]
    %v1925 = vld [vmem:[#allocation13 + $0xc0] sm:$0xff]
    %v1926 = vld [vmem:[#allocation13 + $0xc8] sm:$0xff]
    %v1927 = vld [vmem:[#allocation13 + $0xd0] sm:$0xff]
    %v1928 = vld [vmem:[#allocation13 + $0xd8] sm:$0xff]
    %v1929 = vld [vmem:[#allocation13 + $0xe0] sm:$0xff]
    %v1930 = vld [vmem:[#allocation13 + $0xe8] sm:$0xff]
    %v1931 = vld [vmem:[#allocation13 + $0xf0] sm:$0xff]
    %v1932 = vld [vmem:[#allocation13 + $0xf8] sm:$0xff]
    %v1933 = vld [vmem:[#allocation13 + $0x100] sm:$0xff]
    %v1934 = vld [vmem:[#allocation13 + $0x108] sm:$0xff]
    %v1935 = vld [vmem:[#allocation13 + $0x110] sm:$0xff]
    %v1936 = vld [vmem:[#allocation13 + $0x118] sm:$0xff]
    %v1937 = vld [vmem:[#allocation13 + $0x120] sm:$0xff]
    %v1938 = vld [vmem:[#allocation13 + $0x128] sm:$0xff]
    %v1939 = vld [vmem:[#allocation13 + $0x130] sm:$0xff]
    %v1940 = vld [vmem:[#allocation13 + $0x138] sm:$0xff]
    %v1941 = vld [vmem:[#allocation13 + $0x140] sm:$0xff]
    %v1942 = vld [vmem:[#allocation13 + $0x148] sm:$0xff]
    %v1943 = vld [vmem:[#allocation13 + $0x150] sm:$0xff]
    %v1944 = vld [vmem:[#allocation13 + $0x158] sm:$0xff]
    %v1945 = vld [vmem:[#allocation13 + $0x160] sm:$0xff]
    %v1946 = vld [vmem:[#allocation13 + $0x168] sm:$0xff]
    %v1947 = vld [vmem:[#allocation13 + $0x170] sm:$0xff]
    %v1948 = vld [vmem:[#allocation13 + $0x178] sm:$0xff]
    %v1949 = vld [vmem:[#allocation13 + $0x180] sm:$0xff]
    %v1950 = vld [vmem:[#allocation13 + $0x188] sm:$0xff]
    %v1951 = vld [vmem:[#allocation13 + $0x190] sm:$0xff]
    %v1952 = vld [vmem:[#allocation13 + $0x198] sm:$0xff]
    %v1953 = vld [vmem:[#allocation13 + $0x1a0] sm:$0xff]
    %v1954 = vld [vmem:[#allocation13 + $0x1a8] sm:$0xff]
    %v1955 = vld [vmem:[#allocation13 + $0x1b0] sm:$0xff]
    %v1956 = vld [vmem:[#allocation13 + $0x1b8] sm:$0xff]
    %v1957 = vld [vmem:[#allocation13 + $0x1c0] sm:$0xff]
    %v1958 = vld [vmem:[#allocation13 + $0x1c8] sm:$0xff]
    %v1959 = vld [vmem:[#allocation13 + $0x1d0] sm:$0xff]
    %v1960 = vld [vmem:[#allocation13 + $0x1d8] sm:$0xff]
    %v1961 = vld [vmem:[#allocation13 + $0x1e0] sm:$0xff]
    %v1962 = vld [vmem:[#allocation13 + $0x1e8] sm:$0xff]
    %v1963 = vld [vmem:[#allocation13 + $0x1f0] sm:$0xff]
    %v1964 = vld [vmem:[#allocation13 + $0x1f8] sm:$0xff]
    %v1965 = vld [vmem:[#allocation13 + $0x200] sm:$0xff]
    %v1966 = vld [vmem:[#allocation13 + $0x208] sm:$0xff]
    %v1967 = vld [vmem:[#allocation13 + $0x210] sm:$0xff]
    %v1968 = vld [vmem:[#allocation13 + $0x218] sm:$0xff]
    %v1969 = vld [vmem:[#allocation13 + $0x220] sm:$0xff]
    %v1970 = vld [vmem:[#allocation13 + $0x228] sm:$0xff]
    %v1971 = vld [vmem:[#allocation13 + $0x230] sm:$0xff]
    %v1972 = vld [vmem:[#allocation13 + $0x238] sm:$0xff]
    %v1973 = vld [vmem:[#allocation13 + $0x240] sm:$0xff]
    %v1974 = vld [vmem:[#allocation13 + $0x248] sm:$0xff]
    %v1975 = vld [vmem:[#allocation13 + $0x250] sm:$0xff]
    %v1976 = vld [vmem:[#allocation13 + $0x258] sm:$0xff]
    %v1977 = vld [vmem:[#allocation13 + $0x260] sm:$0xff]
    %v1978 = vld [vmem:[#allocation13 + $0x268] sm:$0xff]
    %v1979 = vld [vmem:[#allocation13 + $0x270] sm:$0xff]
    %v1980 = vld [vmem:[#allocation13 + $0x278] sm:$0xff]
    %v1981 = vld [vmem:[#allocation13 + $0x280] sm:$0xff]
    %v1982 = vld [vmem:[#allocation13 + $0x288] sm:$0xff]
    %v1983 = vld [vmem:[#allocation13 + $0x290] sm:$0xff]
    %v1984 = vld [vmem:[#allocation13 + $0x298] sm:$0xff]
    %v1985 = vld [vmem:[#allocation13 + $0x2a0] sm:$0xff]
    %v1986 = vld [vmem:[#allocation13 + $0x2a8] sm:$0xff]
    %v1987 = vld [vmem:[#allocation13 + $0x2b0] sm:$0xff]
    %v1988 = vld [vmem:[#allocation13 + $0x2b8] sm:$0xff]
    %v1989 = vld [vmem:[#allocation13 + $0x2c0] sm:$0xff]
    %v1990 = vld [vmem:[#allocation13 + $0x2c8] sm:$0xff]
    %v1991 = vld [vmem:[#allocation13 + $0x2d0] sm:$0xff]
    %v1992 = vld [vmem:[#allocation13 + $0x2d8] sm:$0xff]
    %v1993 = vld [vmem:[#allocation13 + $0x2e0] sm:$0xff]
    %v1994 = vld [vmem:[#allocation13 + $0x2e8] sm:$0xff]
    %v1995 = vld [vmem:[#allocation13 + $0x2f0] sm:$0xff]
    %v1996 = vld [vmem:[#allocation13 + $0x2f8] sm:$0xff]
    %v1997 = vld [vmem:[#allocation13 + $0x300] sm:$0xff]
    %v1998 = vld [vmem:[#allocation13 + $0x308] sm:$0xff]
    %v1999 = vld [vmem:[#allocation13 + $0x310] sm:$0xff]
    %v2000 = vld [vmem:[#allocation13 + $0x318] sm:$0xff]
    %v2001 = vld [vmem:[#allocation13 + $0x320] sm:$0xff]
    %v2002 = vld [vmem:[#allocation13 + $0x328] sm:$0xff]
    %v2003 = vld [vmem:[#allocation13 + $0x330] sm:$0xff]
    %v2004 = vld [vmem:[#allocation13 + $0x338] sm:$0xff]
    %v2005 = vld [vmem:[#allocation13 + $0x340] sm:$0xff]
    %v2006 = vld [vmem:[#allocation13 + $0x348] sm:$0xff]
    %v2007 = vld [vmem:[#allocation13 + $0x350] sm:$0xff]
    %v2008 = vld [vmem:[#allocation13 + $0x358] sm:$0xff]
    %v2009 = vld [vmem:[#allocation13 + $0x360] sm:$0xff]
    %v2010 = vld [vmem:[#allocation13 + $0x368] sm:$0xff]
    %v2011 = vld [vmem:[#allocation13 + $0x370] sm:$0xff]
    %v2012 = vld [vmem:[#allocation13 + $0x378] sm:$0xff]
    %v2013 = vld [vmem:[#allocation13 + $0x380] sm:$0xff]
    %v2014 = vld [vmem:[#allocation13 + $0x388] sm:$0xff]
    %v2015 = vld [vmem:[#allocation13 + $0x390] sm:$0xff]
    %v2016 = vld [vmem:[#allocation13 + $0x398] sm:$0xff]
    %v2017 = vld [vmem:[#allocation13 + $0x3a0] sm:$0xff]
    %v2018 = vld [vmem:[#allocation13 + $0x3a8] sm:$0xff]
    %v2019 = vld [vmem:[#allocation13 + $0x3b0] sm:$0xff]
    %v2020 = vld [vmem:[#allocation13 + $0x3b8] sm:$0xff]
    %v2021 = vld [vmem:[#allocation13 + $0x3c0] sm:$0xff]
    %v2022 = vld [vmem:[#allocation13 + $0x3c8] sm:$0xff]
    %v2023 = vld [vmem:[#allocation13 + $0x3d0] sm:$0xff]
    %v2024 = vld [vmem:[#allocation13 + $0x3d8] sm:$0xff]
    %v2025 = vld [vmem:[#allocation13 + $0x3e0] sm:$0xff]
    %v2026 = vld [vmem:[#allocation13 + $0x3e8] sm:$0xff]
    %v2027 = vld [vmem:[#allocation13 + $0x3f0] sm:$0xff]
    %v2028 = vld [vmem:[#allocation13 + $0x3f8] sm:$0xff]
    %v2029 = vld [vmem:[#allocation13 + $0x400] sm:$0xff]
    %v2030 = vld [vmem:[#allocation13 + $0x408] sm:$0xff]
    %v2031 = vld [vmem:[#allocation13 + $0x410] sm:$0xff]
    %v2032 = vld [vmem:[#allocation13 + $0x418] sm:$0xff]
    %v2033 = vld [vmem:[#allocation13 + $0x420] sm:$0xff]
    %v2034 = vld [vmem:[#allocation13 + $0x428] sm:$0xff]
    %v2035 = vld [vmem:[#allocation13 + $0x430] sm:$0xff]
    %v2036 = vld [vmem:[#allocation13 + $0x438] sm:$0xff]
    %v2037 = vld [vmem:[#allocation13 + $0x440] sm:$0xff]
    %v2038 = vld [vmem:[#allocation13 + $0x448] sm:$0xff]
    %v2039 = vld [vmem:[#allocation13 + $0x450] sm:$0xff]
    %v2040 = vld [vmem:[#allocation13 + $0x458] sm:$0xff]
    %v2041 = vld [vmem:[#allocation13 + $0x460] sm:$0xff]
    %v2042 = vld [vmem:[#allocation13 + $0x468] sm:$0xff]
    %v2043 = vld [vmem:[#allocation13 + $0x470] sm:$0xff]
    %v2044 = vld [vmem:[#allocation13 + $0x478] sm:$0xff]
    %v2045 = vld [vmem:[#allocation13 + $0x480] sm:$0xff]
    %v2046 = vld [vmem:[#allocation13 + $0x488] sm:$0xff]
    %v2047 = vld [vmem:[#allocation13 + $0x490] sm:$0xff]
    %v2048 = vld [vmem:[#allocation13 + $0x498] sm:$0xff]
    %v2049 = vld [vmem:[#allocation13 + $0x4a0] sm:$0xff]
    %v2050 = vld [vmem:[#allocation13 + $0x4a8] sm:$0xff]
    %v2051 = vld [vmem:[#allocation13 + $0x4b0] sm:$0xff]
    %v2052 = vld [vmem:[#allocation13 + $0x4b8] sm:$0xff]
    %v2053 = vld [vmem:[#allocation13 + $0x4c0] sm:$0xff]
    %v2054 = vld [vmem:[#allocation13 + $0x4c8] sm:$0xff]
    %v2055 = vld [vmem:[#allocation13 + $0x4d0] sm:$0xff]
    %v2056 = vld [vmem:[#allocation13 + $0x4d8] sm:$0xff]
    %v2057 = vld [vmem:[#allocation13 + $0x4e0] sm:$0xff]
    %v2058 = vld [vmem:[#allocation13 + $0x4e8] sm:$0xff]
    %v2059 = vld [vmem:[#allocation13 + $0x4f0] sm:$0xff]
    %v2060 = vld [vmem:[#allocation13 + $0x4f8] sm:$0xff]
    %v2061 = vld [vmem:[#allocation13 + $0x500] sm:$0xff]
    %v2062 = vld [vmem:[#allocation13 + $0x508] sm:$0xff]
    %v2063 = vld [vmem:[#allocation13 + $0x510] sm:$0xff]
    %v2064 = vld [vmem:[#allocation13 + $0x518] sm:$0xff]
    %v2065 = vld [vmem:[#allocation13 + $0x520] sm:$0xff]
    %v2066 = vld [vmem:[#allocation13 + $0x528] sm:$0xff]
    %v2067 = vld [vmem:[#allocation13 + $0x530] sm:$0xff]
    %v2068 = vld [vmem:[#allocation13 + $0x538] sm:$0xff]
    %v2069 = vld [vmem:[#allocation13 + $0x540] sm:$0xff]
    %v2070 = vld [vmem:[#allocation13 + $0x548] sm:$0xff]
    %v2071 = vld [vmem:[#allocation13 + $0x550] sm:$0xff]
    %v2072 = vld [vmem:[#allocation13 + $0x558] sm:$0xff]
    %v2073 = vld [vmem:[#allocation13 + $0x560] sm:$0xff]
    %v2074 = vld [vmem:[#allocation13 + $0x568] sm:$0xff]
    %v2075 = vld [vmem:[#allocation13 + $0x570] sm:$0xff]
    %v2076 = vld [vmem:[#allocation13 + $0x578] sm:$0xff]
    %v2077 = vld [vmem:[#allocation13 + $0x580] sm:$0xff]
    %v2078 = vld [vmem:[#allocation13 + $0x588] sm:$0xff]
    %v2079 = vld [vmem:[#allocation13 + $0x590] sm:$0xff]
    %v2080 = vld [vmem:[#allocation13 + $0x598] sm:$0xff]
    %v2081 = vld [vmem:[#allocation13 + $0x5a0] sm:$0xff]
    %v2082 = vld [vmem:[#allocation13 + $0x5a8] sm:$0xff]
    %v2083 = vld [vmem:[#allocation13 + $0x5b0] sm:$0xff]
    %v2084 = vld [vmem:[#allocation13 + $0x5b8] sm:$0xff]
    %v2085 = vld [vmem:[#allocation13 + $0x5c0] sm:$0xff]
    %v2086 = vld [vmem:[#allocation13 + $0x5c8] sm:$0xff]
    %v2087 = vld [vmem:[#allocation13 + $0x5d0] sm:$0xff]
    %v2088 = vld [vmem:[#allocation13 + $0x5d8] sm:$0xff]
    %v2089 = vld [vmem:[#allocation13 + $0x5e0] sm:$0xff]
    %v2090 = vld [vmem:[#allocation13 + $0x5e8] sm:$0xff]
    %v2091 = vld [vmem:[#allocation13 + $0x5f0] sm:$0xff]
    %v2092 = vld [vmem:[#allocation13 + $0x5f8] sm:$0xff]
    %v2093 = vld [vmem:[#allocation14] sm:$0x3f]
    %v2095 = vlaneseq
    %v2096 = vshrl.u32 %v2095, 7
    %v2097 = vsub.s32 0, %v2096
    %v2098 = vrot.slane %v2093, %v2097
    %v2099 = vlaneseq
    %v2100 = vshrl.u32 %v2099, 7
    %v2101 = vsub.s32 1, %v2100
    %v2102 = vrot.slane %v2093, %v2101
    %v2103 = vlaneseq
    %v2104 = vshrl.u32 %v2103, 7
    %v2105 = vsub.s32 2, %v2104
    %v2106 = vrot.slane %v2093, %v2105
    %v2107 = vlaneseq
    %v2108 = vshrl.u32 %v2107, 7
    %v2109 = vsub.s32 3, %v2108
    %v2110 = vrot.slane %v2093, %v2109
    %v2111 = vlaneseq
    %v2112 = vshrl.u32 %v2111, 7
    %v2113 = vsub.s32 4, %v2112
    %v2114 = vrot.slane %v2093, %v2113
    %v2115 = vlaneseq
    %v2116 = vshrl.u32 %v2115, 7
    %v2117 = vsub.s32 5, %v2116
    %v2118 = vrot.slane %v2093, %v2117
    %v2317 = vunpack.c.l.b16 %v1901
    %v2318 = vunpack.c.h.b16 %v1901
    %v2319 = vunpack.c.l.b16 %v1902
    %v2320 = vunpack.c.h.b16 %v1902
    %v2321 = vunpack.c.l.b16 %v1903
    %v2322 = vunpack.c.h.b16 %v1903
    %v2323 = vunpack.c.l.b16 %v1904
    %v2324 = vunpack.c.h.b16 %v1904
    %v2325 = vunpack.c.l.b16 %v1905
    %v2326 = vunpack.c.h.b16 %v1905
    %v2327 = vunpack.c.l.b16 %v1906
    %v2328 = vunpack.c.h.b16 %v1906
    %v2329 = vunpack.c.l.b16 %v1907
    %v2330 = vunpack.c.h.b16 %v1907
    %v2331 = vunpack.c.l.b16 %v1908
    %v2332 = vunpack.c.h.b16 %v1908
    %v2333 = vunpack.c.l.b16 %v1909
    %v2334 = vunpack.c.h.b16 %v1909
    %v2335 = vunpack.c.l.b16 %v1910
    %v2336 = vunpack.c.h.b16 %v1910
    %v2337 = vunpack.c.l.b16 %v1911
    %v2338 = vunpack.c.h.b16 %v1911
    %v2339 = vunpack.c.l.b16 %v1912
    %v2340 = vunpack.c.h.b16 %v1912
    %v2341 = vunpack.c.l.b16 %v1913
    %v2342 = vunpack.c.h.b16 %v1913
    %v2343 = vunpack.c.l.b16 %v1914
    %v2344 = vunpack.c.h.b16 %v1914
    %v2345 = vunpack.c.l.b16 %v1915
    %v2346 = vunpack.c.h.b16 %v1915
    %v2347 = vunpack.c.l.b16 %v1916
    %v2348 = vunpack.c.h.b16 %v1916
    %v2349 = vunpack.c.l.b16 %v1917
    %v2350 = vunpack.c.h.b16 %v1917
    %v2351 = vunpack.c.l.b16 %v1918
    %v2352 = vunpack.c.h.b16 %v1918
    %v2353 = vunpack.c.l.b16 %v1919
    %v2354 = vunpack.c.h.b16 %v1919
    %v2355 = vunpack.c.l.b16 %v1920
    %v2356 = vunpack.c.h.b16 %v1920
    %v2357 = vunpack.c.l.b16 %v1921
    %v2358 = vunpack.c.h.b16 %v1921
    %v2359 = vunpack.c.l.b16 %v1922
    %v2360 = vunpack.c.h.b16 %v1922
    %v2361 = vunpack.c.l.b16 %v1923
    %v2362 = vunpack.c.h.b16 %v1923
    %v2363 = vunpack.c.l.b16 %v1924
    %v2364 = vunpack.c.h.b16 %v1924
    %v2365 = vunpack.c.l.b16 %v1925
    %v2366 = vunpack.c.h.b16 %v1925
    %v2367 = vunpack.c.l.b16 %v1926
    %v2368 = vunpack.c.h.b16 %v1926
    %v2369 = vunpack.c.l.b16 %v1927
    %v2370 = vunpack.c.h.b16 %v1927
    %v2371 = vunpack.c.l.b16 %v1928
    %v2372 = vunpack.c.h.b16 %v1928
    %v2373 = vunpack.c.l.b16 %v1929
    %v2374 = vunpack.c.h.b16 %v1929
    %v2375 = vunpack.c.l.b16 %v1930
    %v2376 = vunpack.c.h.b16 %v1930
    %v2377 = vunpack.c.l.b16 %v1931
    %v2378 = vunpack.c.h.b16 %v1931
    %v2379 = vunpack.c.l.b16 %v1932
    %v2380 = vunpack.c.h.b16 %v1932
    %v2381 = vunpack.c.l.b16 %v1933
    %v2382 = vunpack.c.h.b16 %v1933
    %v2383 = vunpack.c.l.b16 %v1934
    %v2384 = vunpack.c.h.b16 %v1934
    %v2385 = vunpack.c.l.b16 %v1935
    %v2386 = vunpack.c.h.b16 %v1935
    %v2387 = vunpack.c.l.b16 %v1936
    %v2388 = vunpack.c.h.b16 %v1936
    %v2389 = vunpack.c.l.b16 %v1937
    %v2390 = vunpack.c.h.b16 %v1937
    %v2391 = vunpack.c.l.b16 %v1938
    %v2392 = vunpack.c.h.b16 %v1938
    %v2393 = vunpack.c.l.b16 %v1939
    %v2394 = vunpack.c.h.b16 %v1939
    %v2395 = vunpack.c.l.b16 %v1940
    %v2396 = vunpack.c.h.b16 %v1940
    %v2397 = vunpack.c.l.b16 %v1941
    %v2398 = vunpack.c.h.b16 %v1941
    %v2399 = vunpack.c.l.b16 %v1942
    %v2400 = vunpack.c.h.b16 %v1942
    %v2401 = vunpack.c.l.b16 %v1943
    %v2402 = vunpack.c.h.b16 %v1943
    %v2403 = vunpack.c.l.b16 %v1944
    %v2404 = vunpack.c.h.b16 %v1944
    %v2405 = vunpack.c.l.b16 %v1945
    %v2406 = vunpack.c.h.b16 %v1945
    %v2407 = vunpack.c.l.b16 %v1946
    %v2408 = vunpack.c.h.b16 %v1946
    %v2409 = vunpack.c.l.b16 %v1947
    %v2410 = vunpack.c.h.b16 %v1947
    %v2411 = vunpack.c.l.b16 %v1948
    %v2412 = vunpack.c.h.b16 %v1948
    %v2413 = vunpack.c.l.b16 %v1949
    %v2414 = vunpack.c.h.b16 %v1949
    %v2415 = vunpack.c.l.b16 %v1950
    %v2416 = vunpack.c.h.b16 %v1950
    %v2417 = vunpack.c.l.b16 %v1951
    %v2418 = vunpack.c.h.b16 %v1951
    %v2419 = vunpack.c.l.b16 %v1952
    %v2420 = vunpack.c.h.b16 %v1952
    %v2421 = vunpack.c.l.b16 %v1953
    %v2422 = vunpack.c.h.b16 %v1953
    %v2423 = vunpack.c.l.b16 %v1954
    %v2424 = vunpack.c.h.b16 %v1954
    %v2425 = vunpack.c.l.b16 %v1955
    %v2426 = vunpack.c.h.b16 %v1955
    %v2427 = vunpack.c.l.b16 %v1956
    %v2428 = vunpack.c.h.b16 %v1956
    %v2429 = vunpack.c.l.b16 %v1957
    %v2430 = vunpack.c.h.b16 %v1957
    %v2431 = vunpack.c.l.b16 %v1958
    %v2432 = vunpack.c.h.b16 %v1958
    %v2433 = vunpack.c.l.b16 %v1959
    %v2434 = vunpack.c.h.b16 %v1959
    %v2435 = vunpack.c.l.b16 %v1960
    %v2436 = vunpack.c.h.b16 %v1960
    %v2437 = vunpack.c.l.b16 %v1961
    %v2438 = vunpack.c.h.b16 %v1961
    %v2439 = vunpack.c.l.b16 %v1962
    %v2440 = vunpack.c.h.b16 %v1962
    %v2441 = vunpack.c.l.b16 %v1963
    %v2442 = vunpack.c.h.b16 %v1963
    %v2443 = vunpack.c.l.b16 %v1964
    %v2444 = vunpack.c.h.b16 %v1964
    %v2445 = vunpack.c.l.b16 %v1965
    %v2446 = vunpack.c.h.b16 %v1965
    %v2447 = vunpack.c.l.b16 %v1966
    %v2448 = vunpack.c.h.b16 %v1966
    %v2449 = vunpack.c.l.b16 %v1967
    %v2450 = vunpack.c.h.b16 %v1967
    %v2451 = vunpack.c.l.b16 %v1968
    %v2452 = vunpack.c.h.b16 %v1968
    %v2453 = vunpack.c.l.b16 %v1969
    %v2454 = vunpack.c.h.b16 %v1969
    %v2455 = vunpack.c.l.b16 %v1970
    %v2456 = vunpack.c.h.b16 %v1970
    %v2457 = vunpack.c.l.b16 %v1971
    %v2458 = vunpack.c.h.b16 %v1971
    %v2459 = vunpack.c.l.b16 %v1972
    %v2460 = vunpack.c.h.b16 %v1972
    %v2461 = vunpack.c.l.b16 %v1973
    %v2462 = vunpack.c.h.b16 %v1973
    %v2463 = vunpack.c.l.b16 %v1974
    %v2464 = vunpack.c.h.b16 %v1974
    %v2465 = vunpack.c.l.b16 %v1975
    %v2466 = vunpack.c.h.b16 %v1975
    %v2467 = vunpack.c.l.b16 %v1976
    %v2468 = vunpack.c.h.b16 %v1976
    %v2469 = vunpack.c.l.b16 %v1977
    %v2470 = vunpack.c.h.b16 %v1977
    %v2471 = vunpack.c.l.b16 %v1978
    %v2472 = vunpack.c.h.b16 %v1978
    %v2473 = vunpack.c.l.b16 %v1979
    %v2474 = vunpack.c.h.b16 %v1979
    %v2475 = vunpack.c.l.b16 %v1980
    %v2476 = vunpack.c.h.b16 %v1980
    %v2477 = vunpack.c.l.b16 %v1981
    %v2478 = vunpack.c.h.b16 %v1981
    %v2479 = vunpack.c.l.b16 %v1982
    %v2480 = vunpack.c.h.b16 %v1982
    %v2481 = vunpack.c.l.b16 %v1983
    %v2482 = vunpack.c.h.b16 %v1983
    %v2483 = vunpack.c.l.b16 %v1984
    %v2484 = vunpack.c.h.b16 %v1984
    %v2485 = vunpack.c.l.b16 %v1985
    %v2486 = vunpack.c.h.b16 %v1985
    %v2487 = vunpack.c.l.b16 %v1986
    %v2488 = vunpack.c.h.b16 %v1986
    %v2489 = vunpack.c.l.b16 %v1987
    %v2490 = vunpack.c.h.b16 %v1987
    %v2491 = vunpack.c.l.b16 %v1988
    %v2492 = vunpack.c.h.b16 %v1988
    %v2493 = vunpack.c.l.b16 %v1989
    %v2494 = vunpack.c.h.b16 %v1989
    %v2495 = vunpack.c.l.b16 %v1990
    %v2496 = vunpack.c.h.b16 %v1990
    %v2497 = vunpack.c.l.b16 %v1991
    %v2498 = vunpack.c.h.b16 %v1991
    %v2499 = vunpack.c.l.b16 %v1992
    %v2500 = vunpack.c.h.b16 %v1992
    %v2501 = vunpack.c.l.b16 %v1993
    %v2502 = vunpack.c.h.b16 %v1993
    %v2503 = vunpack.c.l.b16 %v1994
    %v2504 = vunpack.c.h.b16 %v1994
    %v2505 = vunpack.c.l.b16 %v1995
    %v2506 = vunpack.c.h.b16 %v1995
    %v2507 = vunpack.c.l.b16 %v1996
    %v2508 = vunpack.c.h.b16 %v1996
    %v2509 = vunpack.c.l.b16 %v1997
    %v2510 = vunpack.c.h.b16 %v1997
    %v2511 = vunpack.c.l.b16 %v1998
    %v2512 = vunpack.c.h.b16 %v1998
    %v2513 = vunpack.c.l.b16 %v1999
    %v2514 = vunpack.c.h.b16 %v1999
    %v2515 = vunpack.c.l.b16 %v2000
    %v2516 = vunpack.c.h.b16 %v2000
    %v2517 = vunpack.c.l.b16 %v2001
    %v2518 = vunpack.c.h.b16 %v2001
    %v2519 = vunpack.c.l.b16 %v2002
    %v2520 = vunpack.c.h.b16 %v2002
    %v2521 = vunpack.c.l.b16 %v2003
    %v2522 = vunpack.c.h.b16 %v2003
    %v2523 = vunpack.c.l.b16 %v2004
    %v2524 = vunpack.c.h.b16 %v2004
    %v2525 = vunpack.c.l.b16 %v2005
    %v2526 = vunpack.c.h.b16 %v2005
    %v2527 = vunpack.c.l.b16 %v2006
    %v2528 = vunpack.c.h.b16 %v2006
    %v2529 = vunpack.c.l.b16 %v2007
    %v2530 = vunpack.c.h.b16 %v2007
    %v2531 = vunpack.c.l.b16 %v2008
    %v2532 = vunpack.c.h.b16 %v2008
    %v2533 = vunpack.c.l.b16 %v2009
    %v2534 = vunpack.c.h.b16 %v2009
    %v2535 = vunpack.c.l.b16 %v2010
    %v2536 = vunpack.c.h.b16 %v2010
    %v2537 = vunpack.c.l.b16 %v2011
    %v2538 = vunpack.c.h.b16 %v2011
    %v2539 = vunpack.c.l.b16 %v2012
    %v2540 = vunpack.c.h.b16 %v2012
    %v2541 = vunpack.c.l.b16 %v2013
    %v2542 = vunpack.c.h.b16 %v2013
    %v2543 = vunpack.c.l.b16 %v2014
    %v2544 = vunpack.c.h.b16 %v2014
    %v2545 = vunpack.c.l.b16 %v2015
    %v2546 = vunpack.c.h.b16 %v2015
    %v2547 = vunpack.c.l.b16 %v2016
    %v2548 = vunpack.c.h.b16 %v2016
    %v2549 = vunpack.c.l.b16 %v2017
    %v2550 = vunpack.c.h.b16 %v2017
    %v2551 = vunpack.c.l.b16 %v2018
    %v2552 = vunpack.c.h.b16 %v2018
    %v2553 = vunpack.c.l.b16 %v2019
    %v2554 = vunpack.c.h.b16 %v2019
    %v2555 = vunpack.c.l.b16 %v2020
    %v2556 = vunpack.c.h.b16 %v2020
    %v2557 = vunpack.c.l.b16 %v2021
    %v2558 = vunpack.c.h.b16 %v2021
    %v2559 = vunpack.c.l.b16 %v2022
    %v2560 = vunpack.c.h.b16 %v2022
    %v2561 = vunpack.c.l.b16 %v2023
    %v2562 = vunpack.c.h.b16 %v2023
    %v2563 = vunpack.c.l.b16 %v2024
    %v2564 = vunpack.c.h.b16 %v2024
    %v2565 = vunpack.c.l.b16 %v2025
    %v2566 = vunpack.c.h.b16 %v2025
    %v2567 = vunpack.c.l.b16 %v2026
    %v2568 = vunpack.c.h.b16 %v2026
    %v2569 = vunpack.c.l.b16 %v2027
    %v2570 = vunpack.c.h.b16 %v2027
    %v2571 = vunpack.c.l.b16 %v2028
    %v2572 = vunpack.c.h.b16 %v2028
    %v2573 = vunpack.c.l.b16 %v2029
    %v2574 = vunpack.c.h.b16 %v2029
    %v2575 = vunpack.c.l.b16 %v2030
    %v2576 = vunpack.c.h.b16 %v2030
    %v2577 = vunpack.c.l.b16 %v2031
    %v2578 = vunpack.c.h.b16 %v2031
    %v2579 = vunpack.c.l.b16 %v2032
    %v2580 = vunpack.c.h.b16 %v2032
    %v2581 = vunpack.c.l.b16 %v2033
    %v2582 = vunpack.c.h.b16 %v2033
    %v2583 = vunpack.c.l.b16 %v2034
    %v2584 = vunpack.c.h.b16 %v2034
    %v2585 = vunpack.c.l.b16 %v2035
    %v2586 = vunpack.c.h.b16 %v2035
    %v2587 = vunpack.c.l.b16 %v2036
    %v2588 = vunpack.c.h.b16 %v2036
    %v2589 = vunpack.c.l.b16 %v2037
    %v2590 = vunpack.c.h.b16 %v2037
    %v2591 = vunpack.c.l.b16 %v2038
    %v2592 = vunpack.c.h.b16 %v2038
    %v2593 = vunpack.c.l.b16 %v2039
    %v2594 = vunpack.c.h.b16 %v2039
    %v2595 = vunpack.c.l.b16 %v2040
    %v2596 = vunpack.c.h.b16 %v2040
    %v2597 = vunpack.c.l.b16 %v2041
    %v2598 = vunpack.c.h.b16 %v2041
    %v2599 = vunpack.c.l.b16 %v2042
    %v2600 = vunpack.c.h.b16 %v2042
    %v2601 = vunpack.c.l.b16 %v2043
    %v2602 = vunpack.c.h.b16 %v2043
    %v2603 = vunpack.c.l.b16 %v2044
    %v2604 = vunpack.c.h.b16 %v2044
    %v2605 = vunpack.c.l.b16 %v2045
    %v2606 = vunpack.c.h.b16 %v2045
    %v2607 = vunpack.c.l.b16 %v2046
    %v2608 = vunpack.c.h.b16 %v2046
    %v2609 = vunpack.c.l.b16 %v2047
    %v2610 = vunpack.c.h.b16 %v2047
    %v2611 = vunpack.c.l.b16 %v2048
    %v2612 = vunpack.c.h.b16 %v2048
    %v2613 = vunpack.c.l.b16 %v2049
    %v2614 = vunpack.c.h.b16 %v2049
    %v2615 = vunpack.c.l.b16 %v2050
    %v2616 = vunpack.c.h.b16 %v2050
    %v2617 = vunpack.c.l.b16 %v2051
    %v2618 = vunpack.c.h.b16 %v2051
    %v2619 = vunpack.c.l.b16 %v2052
    %v2620 = vunpack.c.h.b16 %v2052
    %v2621 = vunpack.c.l.b16 %v2053
    %v2622 = vunpack.c.h.b16 %v2053
    %v2623 = vunpack.c.l.b16 %v2054
    %v2624 = vunpack.c.h.b16 %v2054
    %v2625 = vunpack.c.l.b16 %v2055
    %v2626 = vunpack.c.h.b16 %v2055
    %v2627 = vunpack.c.l.b16 %v2056
    %v2628 = vunpack.c.h.b16 %v2056
    %v2629 = vunpack.c.l.b16 %v2057
    %v2630 = vunpack.c.h.b16 %v2057
    %v2631 = vunpack.c.l.b16 %v2058
    %v2632 = vunpack.c.h.b16 %v2058
    %v2633 = vunpack.c.l.b16 %v2059
    %v2634 = vunpack.c.h.b16 %v2059
    %v2635 = vunpack.c.l.b16 %v2060
    %v2636 = vunpack.c.h.b16 %v2060
    %v2637 = vunpack.c.l.b16 %v2061
    %v2638 = vunpack.c.h.b16 %v2061
    %v2639 = vunpack.c.l.b16 %v2062
    %v2640 = vunpack.c.h.b16 %v2062
    %v2641 = vunpack.c.l.b16 %v2063
    %v2642 = vunpack.c.h.b16 %v2063
    %v2643 = vunpack.c.l.b16 %v2064
    %v2644 = vunpack.c.h.b16 %v2064
    %v2645 = vunpack.c.l.b16 %v2065
    %v2646 = vunpack.c.h.b16 %v2065
    %v2647 = vunpack.c.l.b16 %v2066
    %v2648 = vunpack.c.h.b16 %v2066
    %v2649 = vunpack.c.l.b16 %v2067
    %v2650 = vunpack.c.h.b16 %v2067
    %v2651 = vunpack.c.l.b16 %v2068
    %v2652 = vunpack.c.h.b16 %v2068
    %v2653 = vunpack.c.l.b16 %v2069
    %v2654 = vunpack.c.h.b16 %v2069
    %v2655 = vunpack.c.l.b16 %v2070
    %v2656 = vunpack.c.h.b16 %v2070
    %v2657 = vunpack.c.l.b16 %v2071
    %v2658 = vunpack.c.h.b16 %v2071
    %v2659 = vunpack.c.l.b16 %v2072
    %v2660 = vunpack.c.h.b16 %v2072
    %v2661 = vunpack.c.l.b16 %v2073
    %v2662 = vunpack.c.h.b16 %v2073
    %v2663 = vunpack.c.l.b16 %v2074
    %v2664 = vunpack.c.h.b16 %v2074
    %v2665 = vunpack.c.l.b16 %v2075
    %v2666 = vunpack.c.h.b16 %v2075
    %v2667 = vunpack.c.l.b16 %v2076
    %v2668 = vunpack.c.h.b16 %v2076
    %v2669 = vunpack.c.l.b16 %v2077
    %v2670 = vunpack.c.h.b16 %v2077
    %v2671 = vunpack.c.l.b16 %v2078
    %v2672 = vunpack.c.h.b16 %v2078
    %v2673 = vunpack.c.l.b16 %v2079
    %v2674 = vunpack.c.h.b16 %v2079
    %v2675 = vunpack.c.l.b16 %v2080
    %v2676 = vunpack.c.h.b16 %v2080
    %v2677 = vunpack.c.l.b16 %v2081
    %v2678 = vunpack.c.h.b16 %v2081
    %v2679 = vunpack.c.l.b16 %v2082
    %v2680 = vunpack.c.h.b16 %v2082
    %v2681 = vunpack.c.l.b16 %v2083
    %v2682 = vunpack.c.h.b16 %v2083
    %v2683 = vunpack.c.l.b16 %v2084
    %v2684 = vunpack.c.h.b16 %v2084
    %v2685 = vunpack.c.l.b16 %v2085
    %v2686 = vunpack.c.h.b16 %v2085
    %v2687 = vunpack.c.l.b16 %v2086
    %v2688 = vunpack.c.h.b16 %v2086
    %v2689 = vunpack.c.l.b16 %v2087
    %v2690 = vunpack.c.h.b16 %v2087
    %v2691 = vunpack.c.l.b16 %v2088
    %v2692 = vunpack.c.h.b16 %v2088
    %v2693 = vunpack.c.l.b16 %v2089
    %v2694 = vunpack.c.h.b16 %v2089
    %v2695 = vunpack.c.l.b16 %v2090
    %v2696 = vunpack.c.h.b16 %v2090
    %v2697 = vunpack.c.l.b16 %v2091
    %v2698 = vunpack.c.h.b16 %v2091
    %v2699 = vunpack.c.l.b16 %v2092
    %v2700 = vunpack.c.h.b16 %v2092
    %v2701 = vpack.c.b16 %v2323, %v2317
    %v2702 = vpack.c.b16 %v2324, %v2318
    %v2703 = vpack.c.b16 %v2325, %v2319
    %v2704 = vpack.c.b16 %v2326, %v2320
    %v2705 = vpack.c.b16 %v2327, %v2321
    %v2706 = vpack.c.b16 %v2328, %v2322
    %v2707 = vpack.c.b16 %v2335, %v2329
    %v2708 = vpack.c.b16 %v2336, %v2330
    %v2709 = vpack.c.b16 %v2337, %v2331
    %v2710 = vpack.c.b16 %v2338, %v2332
    %v2711 = vpack.c.b16 %v2339, %v2333
    %v2712 = vpack.c.b16 %v2340, %v2334
    %v2713 = vpack.c.b16 %v2347, %v2341
    %v2714 = vpack.c.b16 %v2348, %v2342
    %v2715 = vpack.c.b16 %v2349, %v2343
    %v2716 = vpack.c.b16 %v2350, %v2344
    %v2717 = vpack.c.b16 %v2351, %v2345
    %v2718 = vpack.c.b16 %v2352, %v2346
    %v2719 = vpack.c.b16 %v2359, %v2353
    %v2720 = vpack.c.b16 %v2360, %v2354
    %v2721 = vpack.c.b16 %v2361, %v2355
    %v2722 = vpack.c.b16 %v2362, %v2356
    %v2723 = vpack.c.b16 %v2363, %v2357
    %v2724 = vpack.c.b16 %v2364, %v2358
    %v2725 = vpack.c.b16 %v2371, %v2365
    %v2726 = vpack.c.b16 %v2372, %v2366
    %v2727 = vpack.c.b16 %v2373, %v2367
    %v2728 = vpack.c.b16 %v2374, %v2368
    %v2729 = vpack.c.b16 %v2375, %v2369
    %v2730 = vpack.c.b16 %v2376, %v2370
    %v2731 = vpack.c.b16 %v2383, %v2377
    %v2732 = vpack.c.b16 %v2384, %v2378
    %v2733 = vpack.c.b16 %v2385, %v2379
    %v2734 = vpack.c.b16 %v2386, %v2380
    %v2735 = vpack.c.b16 %v2387, %v2381
    %v2736 = vpack.c.b16 %v2388, %v2382
    %v2737 = vpack.c.b16 %v2395, %v2389
    %v2738 = vpack.c.b16 %v2396, %v2390
    %v2739 = vpack.c.b16 %v2397, %v2391
    %v2740 = vpack.c.b16 %v2398, %v2392
    %v2741 = vpack.c.b16 %v2399, %v2393
    %v2742 = vpack.c.b16 %v2400, %v2394
    %v2743 = vpack.c.b16 %v2407, %v2401
    %v2744 = vpack.c.b16 %v2408, %v2402
    %v2745 = vpack.c.b16 %v2409, %v2403
    %v2746 = vpack.c.b16 %v2410, %v2404
    %v2747 = vpack.c.b16 %v2411, %v2405
    %v2748 = vpack.c.b16 %v2412, %v2406
    %v2749 = vpack.c.b16 %v2419, %v2413
    %v2750 = vpack.c.b16 %v2420, %v2414
    %v2751 = vpack.c.b16 %v2421, %v2415
    %v2752 = vpack.c.b16 %v2422, %v2416
    %v2753 = vpack.c.b16 %v2423, %v2417
    %v2754 = vpack.c.b16 %v2424, %v2418
    %v2755 = vpack.c.b16 %v2431, %v2425
    %v2756 = vpack.c.b16 %v2432, %v2426
    %v2757 = vpack.c.b16 %v2433, %v2427
    %v2758 = vpack.c.b16 %v2434, %v2428
    %v2759 = vpack.c.b16 %v2435, %v2429
    %v2760 = vpack.c.b16 %v2436, %v2430
    %v2761 = vpack.c.b16 %v2443, %v2437
    %v2762 = vpack.c.b16 %v2444, %v2438
    %v2763 = vpack.c.b16 %v2445, %v2439
    %v2764 = vpack.c.b16 %v2446, %v2440
    %v2765 = vpack.c.b16 %v2447, %v2441
    %v2766 = vpack.c.b16 %v2448, %v2442
    %v2767 = vpack.c.b16 %v2455, %v2449
    %v2768 = vpack.c.b16 %v2456, %v2450
    %v2769 = vpack.c.b16 %v2457, %v2451
    %v2770 = vpack.c.b16 %v2458, %v2452
    %v2771 = vpack.c.b16 %v2459, %v2453
    %v2772 = vpack.c.b16 %v2460, %v2454
    %v2773 = vpack.c.b16 %v2467, %v2461
    %v2774 = vpack.c.b16 %v2468, %v2462
    %v2775 = vpack.c.b16 %v2469, %v2463
    %v2776 = vpack.c.b16 %v2470, %v2464
    %v2777 = vpack.c.b16 %v2471, %v2465
    %v2778 = vpack.c.b16 %v2472, %v2466
    %v2779 = vpack.c.b16 %v2479, %v2473
    %v2780 = vpack.c.b16 %v2480, %v2474
    %v2781 = vpack.c.b16 %v2481, %v2475
    %v2782 = vpack.c.b16 %v2482, %v2476
    %v2783 = vpack.c.b16 %v2483, %v2477
    %v2784 = vpack.c.b16 %v2484, %v2478
    %v2785 = vpack.c.b16 %v2491, %v2485
    %v2786 = vpack.c.b16 %v2492, %v2486
    %v2787 = vpack.c.b16 %v2493, %v2487
    %v2788 = vpack.c.b16 %v2494, %v2488
    %v2789 = vpack.c.b16 %v2495, %v2489
    %v2790 = vpack.c.b16 %v2496, %v2490
    %v2791 = vpack.c.b16 %v2503, %v2497
    %v2792 = vpack.c.b16 %v2504, %v2498
    %v2793 = vpack.c.b16 %v2505, %v2499
    %v2794 = vpack.c.b16 %v2506, %v2500
    %v2795 = vpack.c.b16 %v2507, %v2501
    %v2796 = vpack.c.b16 %v2508, %v2502
    %v2797 = vpack.c.b16 %v2515, %v2509
    %v2798 = vpack.c.b16 %v2516, %v2510
    %v2799 = vpack.c.b16 %v2517, %v2511
    %v2800 = vpack.c.b16 %v2518, %v2512
    %v2801 = vpack.c.b16 %v2519, %v2513
    %v2802 = vpack.c.b16 %v2520, %v2514
    %v2803 = vpack.c.b16 %v2527, %v2521
    %v2804 = vpack.c.b16 %v2528, %v2522
    %v2805 = vpack.c.b16 %v2529, %v2523
    %v2806 = vpack.c.b16 %v2530, %v2524
    %v2807 = vpack.c.b16 %v2531, %v2525
    %v2808 = vpack.c.b16 %v2532, %v2526
    %v2809 = vpack.c.b16 %v2539, %v2533
    %v2810 = vpack.c.b16 %v2540, %v2534
    %v2811 = vpack.c.b16 %v2541, %v2535
    %v2812 = vpack.c.b16 %v2542, %v2536
    %v2813 = vpack.c.b16 %v2543, %v2537
    %v2814 = vpack.c.b16 %v2544, %v2538
    %v2815 = vpack.c.b16 %v2551, %v2545
    %v2816 = vpack.c.b16 %v2552, %v2546
    %v2817 = vpack.c.b16 %v2553, %v2547
    %v2818 = vpack.c.b16 %v2554, %v2548
    %v2819 = vpack.c.b16 %v2555, %v2549
    %v2820 = vpack.c.b16 %v2556, %v2550
    %v2821 = vpack.c.b16 %v2563, %v2557
    %v2822 = vpack.c.b16 %v2564, %v2558
    %v2823 = vpack.c.b16 %v2565, %v2559
    %v2824 = vpack.c.b16 %v2566, %v2560
    %v2825 = vpack.c.b16 %v2567, %v2561
    %v2826 = vpack.c.b16 %v2568, %v2562
    %v2827 = vpack.c.b16 %v2575, %v2569
    %v2828 = vpack.c.b16 %v2576, %v2570
    %v2829 = vpack.c.b16 %v2577, %v2571
    %v2830 = vpack.c.b16 %v2578, %v2572
    %v2831 = vpack.c.b16 %v2579, %v2573
    %v2832 = vpack.c.b16 %v2580, %v2574
    %v2833 = vpack.c.b16 %v2587, %v2581
    %v2834 = vpack.c.b16 %v2588, %v2582
    %v2835 = vpack.c.b16 %v2589, %v2583
    %v2836 = vpack.c.b16 %v2590, %v2584
    %v2837 = vpack.c.b16 %v2591, %v2585
    %v2838 = vpack.c.b16 %v2592, %v2586
    %v2839 = vpack.c.b16 %v2599, %v2593
    %v2840 = vpack.c.b16 %v2600, %v2594
    %v2841 = vpack.c.b16 %v2601, %v2595
    %v2842 = vpack.c.b16 %v2602, %v2596
    %v2843 = vpack.c.b16 %v2603, %v2597
    %v2844 = vpack.c.b16 %v2604, %v2598
    %v2845 = vpack.c.b16 %v2611, %v2605
    %v2846 = vpack.c.b16 %v2612, %v2606
    %v2847 = vpack.c.b16 %v2613, %v2607
    %v2848 = vpack.c.b16 %v2614, %v2608
    %v2849 = vpack.c.b16 %v2615, %v2609
    %v2850 = vpack.c.b16 %v2616, %v2610
    %v2851 = vpack.c.b16 %v2623, %v2617
    %v2852 = vpack.c.b16 %v2624, %v2618
    %v2853 = vpack.c.b16 %v2625, %v2619
    %v2854 = vpack.c.b16 %v2626, %v2620
    %v2855 = vpack.c.b16 %v2627, %v2621
    %v2856 = vpack.c.b16 %v2628, %v2622
    %v2857 = vpack.c.b16 %v2635, %v2629
    %v2858 = vpack.c.b16 %v2636, %v2630
    %v2859 = vpack.c.b16 %v2637, %v2631
    %v2860 = vpack.c.b16 %v2638, %v2632
    %v2861 = vpack.c.b16 %v2639, %v2633
    %v2862 = vpack.c.b16 %v2640, %v2634
    %v2863 = vpack.c.b16 %v2647, %v2641
    %v2864 = vpack.c.b16 %v2648, %v2642
    %v2865 = vpack.c.b16 %v2649, %v2643
    %v2866 = vpack.c.b16 %v2650, %v2644
    %v2867 = vpack.c.b16 %v2651, %v2645
    %v2868 = vpack.c.b16 %v2652, %v2646
    %v2869 = vpack.c.b16 %v2659, %v2653
    %v2870 = vpack.c.b16 %v2660, %v2654
    %v2871 = vpack.c.b16 %v2661, %v2655
    %v2872 = vpack.c.b16 %v2662, %v2656
    %v2873 = vpack.c.b16 %v2663, %v2657
    %v2874 = vpack.c.b16 %v2664, %v2658
    %v2875 = vpack.c.b16 %v2671, %v2665
    %v2876 = vpack.c.b16 %v2672, %v2666
    %v2877 = vpack.c.b16 %v2673, %v2667
    %v2878 = vpack.c.b16 %v2674, %v2668
    %v2879 = vpack.c.b16 %v2675, %v2669
    %v2880 = vpack.c.b16 %v2676, %v2670
    %v2881 = vpack.c.b16 %v2683, %v2677
    %v2882 = vpack.c.b16 %v2684, %v2678
    %v2883 = vpack.c.b16 %v2685, %v2679
    %v2884 = vpack.c.b16 %v2686, %v2680
    %v2885 = vpack.c.b16 %v2687, %v2681
    %v2886 = vpack.c.b16 %v2688, %v2682
    %v2887 = vpack.c.b16 %v2695, %v2689
    %v2888 = vpack.c.b16 %v2696, %v2690
    %v2889 = vpack.c.b16 %v2697, %v2691
    %v2890 = vpack.c.b16 %v2698, %v2692
    %v2891 = vpack.c.b16 %v2699, %v2693
    %v2892 = vpack.c.b16 %v2700, %v2694
    %3085 = vmatprep.subr.bf16.mxu0 %v2702
    %3086 = vmatpush1.bf16.msra.mxu0 %v2701
    %3087 = vmatprep.subr.bf16.mxu0 %v2708
    %3088 = vmatpush1.bf16.msra.mxu0 %v2707
    %3089 = vmatprep.subr.bf16.mxu0 %v2714
    %3090 = vmatpush1.bf16.msra.mxu0 %v2713
    %3091 = vmatprep.subr.bf16.mxu0 %v2720
    %3092 = vmatpush1.bf16.msra.mxu0 %v2719
    %3093 = vmatprep.subr.bf16.mxu0 %v2726
    %3094 = vmatpush1.bf16.msra.mxu0 %v2725
    %3095 = vmatprep.subr.bf16.mxu0 %v2732
    %3096 = vmatpush1.bf16.msra.mxu0 %v2731
    %3097 = vmatprep.subr.bf16.mxu0 %v2738
    %3098 = vmatpush1.bf16.msra.mxu0 %v2737
    %3099 = vmatprep.subr.bf16.mxu0 %v2744
    %3100 = vmatpush1.bf16.msra.mxu0 %v2743
    %3101 = vmatprep.subr.bf16.mxu0 %v2750
    %3102 = vmatpush1.bf16.msra.mxu0 %v2749
    %3103 = vmatprep.subr.bf16.mxu0 %v2756
    %3104 = vmatpush1.bf16.msra.mxu0 %v2755
    %3105 = vmatprep.subr.bf16.mxu0 %v2762
    %3106 = vmatpush1.bf16.msra.mxu0 %v2761
    %3107 = vmatprep.subr.bf16.mxu0 %v2768
    %3108 = vmatpush1.bf16.msra.mxu0 %v2767
    %3109 = vmatprep.subr.bf16.mxu0 %v2774
    %3110 = vmatpush1.bf16.msra.mxu0 %v2773
    %3111 = vmatprep.subr.bf16.mxu0 %v2780
    %3112 = vmatpush1.bf16.msra.mxu0 %v2779
    %3113 = vmatprep.subr.bf16.mxu0 %v2786
    %3114 = vmatpush1.bf16.msra.mxu0 %v2785
    %3115 = vmatprep.subr.bf16.mxu0 %v2792
    %3116 = vmatpush1.bf16.msra.mxu0 %v2791
    %3117 = vmatprep.mubr.bf16.mxu0 %v1898
    %3118 = vmatmul.mubr.bf16.gmra.mrb[0].mxu0 %v1897
    %v3119 = vpop.f32.mrb[0].mxu0
    %v3120 = vadd.f32 %v2098, %v3119
    %v3121 = vpop.f32.mrb[0].mxu0
    %v3122 = vadd.f32 %v2102, %v3121
    %v3123 = vpop.f32.mrb[0].mxu0
    %v3124 = vpop.f32.mrb[0].mxu0
    %3125 = vdwg.mxu0
    %3126 = vmatprep.subr.bf16.mxu0 %v2798
    %3127 = vmatpush1.bf16.msra.mxu0 %v2797
    %3128 = vmatprep.subr.bf16.mxu0 %v2804
    %3129 = vmatpush1.bf16.msra.mxu0 %v2803
    %3130 = vmatprep.subr.bf16.mxu0 %v2810
    %3131 = vmatpush1.bf16.msra.mxu0 %v2809
    %3132 = vmatprep.subr.bf16.mxu0 %v2816
    %3133 = vmatpush1.bf16.msra.mxu0 %v2815
    %3134 = vmatprep.subr.bf16.mxu0 %v2822
    %3135 = vmatpush1.bf16.msra.mxu0 %v2821
    %3136 = vmatprep.subr.bf16.mxu0 %v2828
    %3137 = vmatpush1.bf16.msra.mxu0 %v2827
    %3138 = vmatprep.subr.bf16.mxu0 %v2834
    %3139 = vmatpush1.bf16.msra.mxu0 %v2833
    %3140 = vmatprep.subr.bf16.mxu0 %v2840
    %3141 = vmatpush1.bf16.msra.mxu0 %v2839
    %3142 = vmatprep.subr.bf16.mxu0 %v2846
    %3143 = vmatpush1.bf16.msra.mxu0 %v2845
    %3144 = vmatprep.subr.bf16.mxu0 %v2852
    %3145 = vmatpush1.bf16.msra.mxu0 %v2851
    %3146 = vmatprep.subr.bf16.mxu0 %v2858
    %3147 = vmatpush1.bf16.msra.mxu0 %v2857
    %3148 = vmatprep.subr.bf16.mxu0 %v2864
    %3149 = vmatpush1.bf16.msra.mxu0 %v2863
    %3150 = vmatprep.subr.bf16.mxu0 %v2870
    %3151 = vmatpush1.bf16.msra.mxu0 %v2869
    %3152 = vmatprep.subr.bf16.mxu0 %v2876
    %3153 = vmatpush1.bf16.msra.mxu0 %v2875
    %3154 = vmatprep.subr.bf16.mxu0 %v2882
    %3155 = vmatpush1.bf16.msra.mxu0 %v2881
    %3156 = vmatprep.subr.bf16.mxu0 %v2888
    %3157 = vmatpush1.bf16.msra.mxu0 %v2887
    %3158 = vmatprep.mubr.bf16.mxu0 %v1900
    %3159 = vmatmul.mubr.bf16.gmra.mrb[0].mxu0 %v1899
    %v3160 = vpop.f32.mrb[0].mxu0
    %v3161 = vadd.f32 %v3120, %v3160
    %v3162 = vpop.f32.mrb[0].mxu0
    %v3163 = vadd.f32 %v3122, %v3162
    %v3164 = vpop.f32.mrb[0].mxu0
    %v3165 = vpop.f32.mrb[0].mxu0
    %3166 = vdwg.mxu0
    %3167 = vmatprep.subr.bf16.mxu0 %v2704
    %3168 = vmatpush1.bf16.msra.mxu0 %v2703
    %3169 = vmatprep.subr.bf16.mxu0 %v2710
    %3170 = vmatpush1.bf16.msra.mxu0 %v2709
    %3171 = vmatprep.subr.bf16.mxu0 %v2716
    %3172 = vmatpush1.bf16.msra.mxu0 %v2715
    %3173 = vmatprep.subr.bf16.mxu0 %v2722
    %3174 = vmatpush1.bf16.msra.mxu0 %v2721
    %3175 = vmatprep.subr.bf16.mxu0 %v2728
    %3176 = vmatpush1.bf16.msra.mxu0 %v2727
    %3177 = vmatprep.subr.bf16.mxu0 %v2734
    %3178 = vmatpush1.bf16.msra.mxu0 %v2733
    %3179 = vmatprep.subr.bf16.mxu0 %v2740
    %3180 = vmatpush1.bf16.msra.mxu0 %v2739
    %3181 = vmatprep.subr.bf16.mxu0 %v2746
    %3182 = vmatpush1.bf16.msra.mxu0 %v2745
    %3183 = vmatprep.subr.bf16.mxu0 %v2752
    %3184 = vmatpush1.bf16.msra.mxu0 %v2751
    %3185 = vmatprep.subr.bf16.mxu0 %v2758
    %3186 = vmatpush1.bf16.msra.mxu0 %v2757
    %3187 = vmatprep.subr.bf16.mxu0 %v2764
    %3188 = vmatpush1.bf16.msra.mxu0 %v2763
    %3189 = vmatprep.subr.bf16.mxu0 %v2770
    %3190 = vmatpush1.bf16.msra.mxu0 %v2769
    %3191 = vmatprep.subr.bf16.mxu0 %v2776
    %3192 = vmatpush1.bf16.msra.mxu0 %v2775
    %3193 = vmatprep.subr.bf16.mxu0 %v2782
    %3194 = vmatpush1.bf16.msra.mxu0 %v2781
    %3195 = vmatprep.subr.bf16.mxu0 %v2788
    %3196 = vmatpush1.bf16.msra.mxu0 %v2787
    %3197 = vmatprep.subr.bf16.mxu0 %v2794
    %3198 = vmatpush1.bf16.msra.mxu0 %v2793
    %3199 = vmatprep.mubr.bf16.mxu0 %v1898
    %3200 = vmatmul.mubr.bf16.gmra.mrb[0].mxu0 %v1897
    %v3201 = vpop.f32.mrb[0].mxu0
    %v3202 = vadd.f32 %v2106, %v3201
    %v3203 = vpop.f32.mrb[0].mxu0
    %v3204 = vadd.f32 %v2110, %v3203
    %v3205 = vpop.f32.mrb[0].mxu0
    %v3206 = vpop.f32.mrb[0].mxu0
    %3207 = vdwg.mxu0
    %3208 = vmatprep.subr.bf16.mxu0 %v2800
    %3209 = vmatpush1.bf16.msra.mxu0 %v2799
    %3210 = vmatprep.subr.bf16.mxu0 %v2806
    %3211 = vmatpush1.bf16.msra.mxu0 %v2805
    %3212 = vmatprep.subr.bf16.mxu0 %v2812
    %3213 = vmatpush1.bf16.msra.mxu0 %v2811
    %3214 = vmatprep.subr.bf16.mxu0 %v2818
    %3215 = vmatpush1.bf16.msra.mxu0 %v2817
    %3216 = vmatprep.subr.bf16.mxu0 %v2824
    %3217 = vmatpush1.bf16.msra.mxu0 %v2823
    %3218 = vmatprep.subr.bf16.mxu0 %v2830
    %3219 = vmatpush1.bf16.msra.mxu0 %v2829
    %3220 = vmatprep.subr.bf16.mxu0 %v2836
    %3221 = vmatpush1.bf16.msra.mxu0 %v2835
    %3222 = vmatprep.subr.bf16.mxu0 %v2842
    %3223 = vmatpush1.bf16.msra.mxu0 %v2841
    %3224 = vmatprep.subr.bf16.mxu0 %v2848
    %3225 = vmatpush1.bf16.msra.mxu0 %v2847
    %3226 = vmatprep.subr.bf16.mxu0 %v2854
    %3227 = vmatpush1.bf16.msra.mxu0 %v2853
    %3228 = vmatprep.subr.bf16.mxu0 %v2860
    %3229 = vmatpush1.bf16.msra.mxu0 %v2859
    %3230 = vmatprep.subr.bf16.mxu0 %v2866
    %3231 = vmatpush1.bf16.msra.mxu0 %v2865
    %3232 = vmatprep.subr.bf16.mxu0 %v2872
    %3233 = vmatpush1.bf16.msra.mxu0 %v2871
    %3234 = vmatprep.subr.bf16.mxu0 %v2878
    %3235 = vmatpush1.bf16.msra.mxu0 %v2877
    %3236 = vmatprep.subr.bf16.mxu0 %v2884
    %3237 = vmatpush1.bf16.msra.mxu0 %v2883
    %3238 = vmatprep.subr.bf16.mxu0 %v2890
    %3239 = vmatpush1.bf16.msra.mxu0 %v2889
    %3240 = vmatprep.mubr.bf16.mxu0 %v1900
    %3241 = vmatmul.mubr.bf16.gmra.mrb[0].mxu0 %v1899
    %v3242 = vpop.f32.mrb[0].mxu0
    %v3243 = vadd.f32 %v3202, %v3242
    %v3244 = vpop.f32.mrb[0].mxu0
    %v3245 = vadd.f32 %v3204, %v3244
    %v3246 = vpop.f32.mrb[0].mxu0
    %v3247 = vpop.f32.mrb[0].mxu0
    %3248 = vdwg.mxu0
    %3249 = vmatprep.subr.bf16.mxu0 %v2706
    %3250 = vmatpush1.bf16.msra.mxu0 %v2705
    %3251 = vmatprep.subr.bf16.mxu0 %v2712
    %3252 = vmatpush1.bf16.msra.mxu0 %v2711
    %3253 = vmatprep.subr.bf16.mxu0 %v2718
    %3254 = vmatpush1.bf16.msra.mxu0 %v2717
    %3255 = vmatprep.subr.bf16.mxu0 %v2724
    %3256 = vmatpush1.bf16.msra.mxu0 %v2723
    %3257 = vmatprep.subr.bf16.mxu0 %v2730
    %3258 = vmatpush1.bf16.msra.mxu0 %v2729
    %3259 = vmatprep.subr.bf16.mxu0 %v2736
    %3260 = vmatpush1.bf16.msra.mxu0 %v2735
    %3261 = vmatprep.subr.bf16.mxu0 %v2742
    %3262 = vmatpush1.bf16.msra.mxu0 %v2741
    %3263 = vmatprep.subr.bf16.mxu0 %v2748
    %3264 = vmatpush1.bf16.msra.mxu0 %v2747
    %3265 = vmatprep.subr.bf16.mxu0 %v2754
    %3266 = vmatpush1.bf16.msra.mxu0 %v2753
    %3267 = vmatprep.subr.bf16.mxu0 %v2760
    %3268 = vmatpush1.bf16.msra.mxu0 %v2759
    %3269 = vmatprep.subr.bf16.mxu0 %v2766
    %3270 = vmatpush1.bf16.msra.mxu0 %v2765
    %3271 = vmatprep.subr.bf16.mxu0 %v2772
    %3272 = vmatpush1.bf16.msra.mxu0 %v2771
    %3273 = vmatprep.subr.bf16.mxu0 %v2778
    %3274 = vmatpush1.bf16.msra.mxu0 %v2777
    %3275 = vmatprep.subr.bf16.mxu0 %v2784
    %3276 = vmatpush1.bf16.msra.mxu0 %v2783
    %3277 = vmatprep.subr.bf16.mxu0 %v2790
    %3278 = vmatpush1.bf16.msra.mxu0 %v2789
    %3279 = vmatprep.subr.bf16.mxu0 %v2796
    %3280 = vmatpush1.bf16.msra.mxu0 %v2795
    %3281 = vmatprep.mubr.bf16.mxu0 %v1898
    %3282 = vmatmul.mubr.bf16.gmra.mrb[0].mxu0 %v1897
    %v3283 = vpop.f32.mrb[0].mxu0
    %v3284 = vadd.f32 %v2114, %v3283
    %v3285 = vpop.f32.mrb[0].mxu0
    %v3286 = vadd.f32 %v2118, %v3285
    %v3287 = vpop.f32.mrb[0].mxu0
    %v3288 = vpop.f32.mrb[0].mxu0
    %3289 = vdwg.mxu0
    %3290 = vmatprep.subr.bf16.mxu0 %v2802
    %3291 = vmatpush1.bf16.msra.mxu0 %v2801
    %3292 = vmatprep.subr.bf16.mxu0 %v2808
    %3293 = vmatpush1.bf16.msra.mxu0 %v2807
    %3294 = vmatprep.subr.bf16.mxu0 %v2814
    %3295 = vmatpush1.bf16.msra.mxu0 %v2813
    %3296 = vmatprep.subr.bf16.mxu0 %v2820
    %3297 = vmatpush1.bf16.msra.mxu0 %v2819
    %3298 = vmatprep.subr.bf16.mxu0 %v2826
    %3299 = vmatpush1.bf16.msra.mxu0 %v2825
    %3300 = vmatprep.subr.bf16.mxu0 %v2832
    %3301 = vmatpush1.bf16.msra.mxu0 %v2831
    %3302 = vmatprep.subr.bf16.mxu0 %v2838
    %3303 = vmatpush1.bf16.msra.mxu0 %v2837
    %3304 = vmatprep.subr.bf16.mxu0 %v2844
    %3305 = vmatpush1.bf16.msra.mxu0 %v2843
    %3306 = vmatprep.subr.bf16.mxu0 %v2850
    %3307 = vmatpush1.bf16.msra.mxu0 %v2849
    %3308 = vmatprep.subr.bf16.mxu0 %v2856
    %3309 = vmatpush1.bf16.msra.mxu0 %v2855
    %3310 = vmatprep.subr.bf16.mxu0 %v2862
    %3311 = vmatpush1.bf16.msra.mxu0 %v2861
    %3312 = vmatprep.subr.bf16.mxu0 %v2868
    %3313 = vmatpush1.bf16.msra.mxu0 %v2867
    %3314 = vmatprep.subr.bf16.mxu0 %v2874
    %3315 = vmatpush1.bf16.msra.mxu0 %v2873
    %3316 = vmatprep.subr.bf16.mxu0 %v2880
    %3317 = vmatpush1.bf16.msra.mxu0 %v2879
    %3318 = vmatprep.subr.bf16.mxu0 %v2886
    %3319 = vmatpush1.bf16.msra.mxu0 %v2885
    %3320 = vmatprep.subr.bf16.mxu0 %v2892
    %3321 = vmatpush1.bf16.msra.mxu0 %v2891
    %3322 = vmatprep.mubr.bf16.mxu0 %v1900
    %3323 = vmatmul.mubr.bf16.gmra.mrb[0].mxu0 %v1899
    %v3324 = vpop.f32.mrb[0].mxu0
    %v3325 = vadd.f32 %v3284, %v3324
    %v3326 = vpop.f32.mrb[0].mxu0
    %v3327 = vadd.f32 %v3286, %v3326
    %v3328 = vpop.f32.mrb[0].mxu0
    %v3329 = vpop.f32.mrb[0].mxu0
    %3330 = vdwg.mxu0
    %v3337 = vcombine.low %v3161, %v3163
    %v3338 = vcombine.low %v3243, %v3245
    %v3340 = vunpack.c.l.s4 1983009808
    %v3341 = vunpack.c.0.s8 %v3340
    %v3342 = vlaneseq
    %v3343 = vshrl.u32 %v3342, 7
    %v3344 = vsub.s32 %v3341, %v3343
    %v3345 = vrot.slane %v3337, %v3344
    %v3347 = vunpack.c.l.s4 1983009808
    %v3348 = vunpack.c.0.s8 %v3347
    %v3349 = vlaneseq
    %v3350 = vshrl.u32 %v3349, 7
    %v3351 = vsub.s32 %v3348, %v3350
    %v3352 = vrot.slane %v3338, %v3351
    %v3353 = vcombine.low %v3345, %v3352
    %v3354 = vcombine.low %v3325, %v3327
    %v3356 = vunpack.c.l.s4 1983009808
    %v3357 = vunpack.c.0.s8 %v3356
    %v3358 = vlaneseq
    %v3359 = vshrl.u32 %v3358, 7
    %v3360 = vsub.s32 %v3357, %v3359
    %v3361 = vrot.slane %v3354, %v3360
    %3364 = vst [vmem:[#allocation22] sm:$0xff] %v3353
    %3365 = vst [vmem:[#allocation22 + $0x8] sm:$0xf] %v3361
    %v3366 = vld [vmem:[#allocation7] sm:$0xff]
    %v3367 = vlaneseq
    %v3368 = vshrl.u32 %v3367, 7
    %v3369 = vsub.s32 0, %v3368
    %v3370 = vrot.slane %v685, %v3369
    %v3371 = vlaneseq
    %v3372 = vshrl.u32 %v3371, 7
    %v3373 = vsub.s32 0, %v3372
    %v3374 = vrot.slane %v687, %v3373
    %v3375 = vlaneseq
    %v3376 = vshrl.u32 %v3375, 7
    %v3377 = vsub.s32 0, %v3376
    %v3378 = vrot.slane %v726, %v3377
    %v3379 = vlaneseq
    %v3380 = vshrl.u32 %v3379, 7
    %v3381 = vsub.s32 0, %v3380
    %v3382 = vrot.slane %v728, %v3381
    %v3387 = vcombine.low %v3370, %v3374
    %v3388 = vcombine.low %v3378, %v3382
    %v3390 = vunpack.c.l.s4 1983009808
    %v3391 = vunpack.c.0.s8 %v3390
    %v3392 = vlaneseq
    %v3393 = vshrl.u32 %v3392, 7
    %v3394 = vsub.s32 %v3391, %v3393
    %v3395 = vrot.slane %v3387, %v3394
    %v3397 = vunpack.c.l.s4 1983009808
    %v3398 = vunpack.c.0.s8 %v3397
    %v3399 = vlaneseq
    %v3400 = vshrl.u32 %v3399, 7
    %v3401 = vsub.s32 %v3398, %v3400
    %v3402 = vrot.slane %v3388, %v3401
    %v3403 = vcombine.low %v3395, %v3402
    %v3405 = vadd.f32 %v3366, %v3403
    %v3406 = vlaneseq
    %v3407 = vshrl.u32 %v3406, 7
    %v3408 = vsub.s32 1, %v3407
    %v3409 = vrot.slane %v685, %v3408
    %v3410 = vlaneseq
    %v3411 = vshrl.u32 %v3410, 7
    %v3412 = vsub.s32 1, %v3411
    %v3413 = vrot.slane %v687, %v3412
    %v3414 = vlaneseq
    %v3415 = vshrl.u32 %v3414, 7
    %v3416 = vsub.s32 1, %v3415
    %v3417 = vrot.slane %v726, %v3416
    %v3418 = vlaneseq
    %v3419 = vshrl.u32 %v3418, 7
    %v3420 = vsub.s32 1, %v3419
    %v3421 = vrot.slane %v728, %v3420
    %v3426 = vcombine.low %v3409, %v3413
    %v3427 = vcombine.low %v3417, %v3421
    %v3429 = vunpack.c.l.s4 1983009808
    %v3430 = vunpack.c.0.s8 %v3429
    %v3431 = vlaneseq
    %v3432 = vshrl.u32 %v3431, 7
    %v3433 = vsub.s32 %v3430, %v3432
    %v3434 = vrot.slane %v3426, %v3433
    %v3436 = vunpack.c.l.s4 1983009808
    %v3437 = vunpack.c.0.s8 %v3436
    %v3438 = vlaneseq
    %v3439 = vshrl.u32 %v3438, 7
    %v3440 = vsub.s32 %v3437, %v3439
    %v3441 = vrot.slane %v3427, %v3440
    %v3442 = vcombine.low %v3434, %v3441
    %v3444 = vadd.f32 %v3366, %v3442
    %v3446 = vcombine.high %v3405, %v3405
    %v3448 = vunpack.c.l.s4 1983009808
    %v3449 = vunpack.c.0.s8 %v3448
    %v3450 = vlaneseq
    %v3451 = vshrl.u32 %v3450, 7
    %v3452 = vsub.s32 %v3449, %v3451
    %v3453 = vrot.slane %v3405, %v3452
    %v3455 = vunpack.c.l.s4 1983009808
    %v3456 = vunpack.c.0.s8 %v3455
    %v3457 = vlaneseq
    %v3458 = vshrl.u32 %v3457, 7
    %v3459 = vsub.s32 %v3456, %v3458
    %v3460 = vrot.slane %v3446, %v3459
    %v3461 = vcombine.high %v3453, %v3453
    %v3462 = vcombine.high %v3460, %v3460
    %v3468 = vcombine.low %v3444, %v3444
    %v3470 = vunpack.c.l.s4 1983009808
    %v3471 = vunpack.c.0.s8 %v3470
    %v3472 = vlaneseq
    %v3473 = vshrl.u32 %v3472, 7
    %v3474 = vsub.s32 %v3471, %v3473
    %v3475 = vrot.slane %v3468, %v3474
    %v3477 = vunpack.c.l.s4 1983009808
    %v3478 = vunpack.c.0.s8 %v3477
    %v3479 = vlaneseq
    %v3480 = vshrl.u32 %v3479, 7
    %v3481 = vsub.s32 %v3478, %v3480
    %v3482 = vrot.slane %v3444, %v3481
    %v3483 = vcombine.high %v3475, %v3475
    %v3484 = vcombine.high %v3482, %v3482
    %v3489 = vsel %vm732, %v3453, %v3475
    %v3490 = vsel %vm732, %v3461, %v3483
    %v3491 = vsel %vm732, %v3460, %v3482
    %v3492 = vsel %vm732, %v3462, %v3484
    %v3493 = vmul.f32 %v3489, %v3491
    %v3494 = vmul.f32 %v3490, %v3492
    %vm3495 = vcmask 1043456
    %v3496 = vsel %vm3495, %v3493, 0.0
    %v3497 = vsel %vm3495, %v3494, 0.0
    %v3498 = vadd.f32 %v3496, %v3497
    %3499 = vadd.xlane.f32.xlu0 %v3498
    %v3500 = vpop.xlane.xlu0 %3499
    %v3501 = vmul.f32 %v3489, %v3489
    %v3502 = vmul.f32 %v3490, %v3490
    %v3503 = vsel %vm3495, %v3501, 0.0
    %v3504 = vsel %vm3495, %v3502, 0.0
    %v3505 = vadd.f32 %v3503, %v3504
    %3506 = vadd.xlane.f32.xlu0 %v3505
    %v3507 = vpop.xlane.xlu0 %3506
    %v3508 = vrsqrt.pop %v3507
    %v3509 = vmul.f32 %v3507, %v3508
    %vm3510 = vcmp.eq.f32.partialorder %v3507, inf
    %v3511 = vsel %vm3510, %v3507, %v3509
    %vm3512 = vcmp.eq.f32.partialorder %v3507, 0.0
    %v3513 = vand.u32 %v3507, 2147483648
    %v3514 = vsel %vm3512, %v3513, %v3511
    %v3515 = vmul.f32 %v3491, %v3491
    %v3516 = vmul.f32 %v3492, %v3492
    %v3517 = vsel %vm3495, %v3515, 0.0
    %v3518 = vsel %vm3495, %v3516, 0.0
    %v3519 = vadd.f32 %v3517, %v3518
    %3520 = vadd.xlane.f32.xlu0 %v3519
    %v3521 = vpop.xlane.xlu0 %3520
    %v3522 = vrsqrt.pop %v3521
    %v3523 = vmul.f32 %v3521, %v3522
    %vm3524 = vcmp.eq.f32.partialorder %v3521, inf
    %v3525 = vsel %vm3524, %v3521, %v3523
    %vm3526 = vcmp.eq.f32.partialorder %v3521, 0.0
    %v3527 = vand.u32 %v3521, 2147483648
    %v3528 = vsel %vm3526, %v3527, %v3525
    %v3529 = vmul.f32 %v3514, %v3528
    %v3530 = vmax.f32 %v3529, 1e-08
    %v3531 = vrcp.pop %v3530
    %v3532 = vmul.f32 %v3500, %v3531
    %v3533 = vsel %vm3495, %v3532, 0.0
    %v3534 = vrot.slane %v3533, 4
    %v3535 = vadd.f32 %v3533, %v3534
    %v3536 = vrot.slane %v3535, 2
    %v3537 = vadd.f32 %v3535, %v3536
    %v3538 = vrot.slane %v3537, 1
    %v3539 = vadd.f32 %v3537, %v3538
    %v3540 = vrcp.pop 4.0
    %v3541 = vmul.f32 %v3539, %v3540
    %vm3542 = vcmask 0
    %3543 = vst.msk [vmem:[%s17] sm:$0x1] %vm3542, %v3541
    %v3544 = vpack.c.bf16 %v3489, %v3489
    %v3545 = vpack.c.bf16 %v3490, %v3490
    %v3546 = vpack.c.bf16 %v3491, %v3491
    %v3547 = vpack.c.bf16 %v3492, %v3492
    %v3548 = vld [vmem:[#allocation19] sm:$0xff]
    %v3549 = vld [vmem:[#allocation19 + $0x8] sm:$0xff]
    %v3550 = vld [vmem:[#allocation19 + $0x10] sm:$0xff]
    %v3551 = vld [vmem:[#allocation19 + $0x18] sm:$0xff]
    %v3552 = vld [vmem:[#allocation19 + $0x20] sm:$0xff]
    %v3553 = vld [vmem:[#allocation19 + $0x28] sm:$0xff]
    %v3554 = vld [vmem:[#allocation19 + $0x30] sm:$0xff]
    %v3555 = vld [vmem:[#allocation19 + $0x38] sm:$0xff]
    %v3556 = vld [vmem:[#allocation19 + $0x40] sm:$0xff]
    %v3557 = vld [vmem:[#allocation19 + $0x48] sm:$0xff]
    %v3558 = vld [vmem:[#allocation19 + $0x50] sm:$0xff]
    %v3559 = vld [vmem:[#allocation19 + $0x58] sm:$0xff]
    %v3560 = vld [vmem:[#allocation19 + $0x60] sm:$0xff]
    %v3561 = vld [vmem:[#allocation19 + $0x68] sm:$0xff]
    %v3562 = vld [vmem:[#allocation19 + $0x70] sm:$0xff]
    %v3563 = vld [vmem:[#allocation19 + $0x78] sm:$0xff]
    %v3564 = vld [vmem:[#allocation19 + $0x80] sm:$0xff]
    %v3565 = vld [vmem:[#allocation19 + $0x88] sm:$0xff]
    %v3566 = vld [vmem:[#allocation19 + $0x90] sm:$0xff]
    %v3567 = vld [vmem:[#allocation19 + $0x98] sm:$0xff]
    %v3568 = vld [vmem:[#allocation19 + $0xa0] sm:$0xff]
    %v3569 = vld [vmem:[#allocation19 + $0xa8] sm:$0xff]
    %v3570 = vld [vmem:[#allocation19 + $0xb0] sm:$0xff]
    %v3571 = vld [vmem:[#allocation19 + $0xb8] sm:$0xff]
    %v3572 = vld [vmem:[#allocation19 + $0xc0] sm:$0xff]
    %v3573 = vld [vmem:[#allocation19 + $0xc8] sm:$0xff]
    %v3574 = vld [vmem:[#allocation19 + $0xd0] sm:$0xff]
    %v3575 = vld [vmem:[#allocation19 + $0xd8] sm:$0xff]
    %v3576 = vld [vmem:[#allocation19 + $0xe0] sm:$0xff]
    %v3577 = vld [vmem:[#allocation19 + $0xe8] sm:$0xff]
    %v3578 = vld [vmem:[#allocation19 + $0xf0] sm:$0xff]
    %v3579 = vld [vmem:[#allocation19 + $0xf8] sm:$0xff]
    %v3580 = vld [vmem:[#allocation19 + $0x100] sm:$0xff]
    %v3581 = vld [vmem:[#allocation19 + $0x108] sm:$0xff]
    %v3582 = vld [vmem:[#allocation19 + $0x110] sm:$0xff]
    %v3583 = vld [vmem:[#allocation19 + $0x118] sm:$0xff]
    %v3584 = vld [vmem:[#allocation19 + $0x120] sm:$0xff]
    %v3585 = vld [vmem:[#allocation19 + $0x128] sm:$0xff]
    %v3586 = vld [vmem:[#allocation19 + $0x130] sm:$0xff]
    %v3587 = vld [vmem:[#allocation19 + $0x138] sm:$0xff]
    %v3588 = vld [vmem:[#allocation19 + $0x140] sm:$0xff]
    %v3589 = vld [vmem:[#allocation19 + $0x148] sm:$0xff]
    %v3590 = vld [vmem:[#allocation19 + $0x150] sm:$0xff]
    %v3591 = vld [vmem:[#allocation19 + $0x158] sm:$0xff]
    %v3592 = vld [vmem:[#allocation19 + $0x160] sm:$0xff]
    %v3593 = vld [vmem:[#allocation19 + $0x168] sm:$0xff]
    %v3594 = vld [vmem:[#allocation19 + $0x170] sm:$0xff]
    %v3595 = vld [vmem:[#allocation19 + $0x178] sm:$0xff]
    %v3596 = vld [vmem:[#allocation19 + $0x180] sm:$0xff]
    %v3597 = vld [vmem:[#allocation19 + $0x188] sm:$0xff]
    %v3598 = vld [vmem:[#allocation19 + $0x190] sm:$0xff]
    %v3599 = vld [vmem:[#allocation19 + $0x198] sm:$0xff]
    %v3600 = vld [vmem:[#allocation19 + $0x1a0] sm:$0xff]
    %v3601 = vld [vmem:[#allocation19 + $0x1a8] sm:$0xff]
    %v3602 = vld [vmem:[#allocation19 + $0x1b0] sm:$0xff]
    %v3603 = vld [vmem:[#allocation19 + $0x1b8] sm:$0xff]
    %v3604 = vld [vmem:[#allocation19 + $0x1c0] sm:$0xff]
    %v3605 = vld [vmem:[#allocation19 + $0x1c8] sm:$0xff]
    %v3606 = vld [vmem:[#allocation19 + $0x1d0] sm:$0xff]
    %v3607 = vld [vmem:[#allocation19 + $0x1d8] sm:$0xff]
    %v3608 = vld [vmem:[#allocation19 + $0x1e0] sm:$0xff]
    %v3609 = vld [vmem:[#allocation19 + $0x1e8] sm:$0xff]
    %v3610 = vld [vmem:[#allocation19 + $0x1f0] sm:$0xff]
    %v3611 = vld [vmem:[#allocation19 + $0x1f8] sm:$0xff]
    %v3612 = vld [vmem:[#allocation19 + $0x200] sm:$0xff]
    %v3613 = vld [vmem:[#allocation19 + $0x208] sm:$0xff]
    %v3614 = vld [vmem:[#allocation19 + $0x210] sm:$0xff]
    %v3615 = vld [vmem:[#allocation19 + $0x218] sm:$0xff]
    %v3616 = vld [vmem:[#allocation19 + $0x220] sm:$0xff]
    %v3617 = vld [vmem:[#allocation19 + $0x228] sm:$0xff]
    %v3618 = vld [vmem:[#allocation19 + $0x230] sm:$0xff]
    %v3619 = vld [vmem:[#allocation19 + $0x238] sm:$0xff]
    %v3620 = vld [vmem:[#allocation19 + $0x240] sm:$0xff]
    %v3621 = vld [vmem:[#allocation19 + $0x248] sm:$0xff]
    %v3622 = vld [vmem:[#allocation19 + $0x250] sm:$0xff]
    %v3623 = vld [vmem:[#allocation19 + $0x258] sm:$0xff]
    %v3624 = vld [vmem:[#allocation19 + $0x260] sm:$0xff]
    %v3625 = vld [vmem:[#allocation19 + $0x268] sm:$0xff]
    %v3626 = vld [vmem:[#allocation19 + $0x270] sm:$0xff]
    %v3627 = vld [vmem:[#allocation19 + $0x278] sm:$0xff]
    %v3628 = vld [vmem:[#allocation19 + $0x280] sm:$0xff]
    %v3629 = vld [vmem:[#allocation19 + $0x288] sm:$0xff]
    %v3630 = vld [vmem:[#allocation19 + $0x290] sm:$0xff]
    %v3631 = vld [vmem:[#allocation19 + $0x298] sm:$0xff]
    %v3632 = vld [vmem:[#allocation19 + $0x2a0] sm:$0xff]
    %v3633 = vld [vmem:[#allocation19 + $0x2a8] sm:$0xff]
    %v3634 = vld [vmem:[#allocation19 + $0x2b0] sm:$0xff]
    %v3635 = vld [vmem:[#allocation19 + $0x2b8] sm:$0xff]
    %v3636 = vld [vmem:[#allocation19 + $0x2c0] sm:$0xff]
    %v3637 = vld [vmem:[#allocation19 + $0x2c8] sm:$0xff]
    %v3638 = vld [vmem:[#allocation19 + $0x2d0] sm:$0xff]
    %v3639 = vld [vmem:[#allocation19 + $0x2d8] sm:$0xff]
    %v3640 = vld [vmem:[#allocation19 + $0x2e0] sm:$0xff]
    %v3641 = vld [vmem:[#allocation19 + $0x2e8] sm:$0xff]
    %v3642 = vld [vmem:[#allocation19 + $0x2f0] sm:$0xff]
    %v3643 = vld [vmem:[#allocation19 + $0x2f8] sm:$0xff]
    %v3644 = vld [vmem:[#allocation19 + $0x300] sm:$0xff]
    %v3645 = vld [vmem:[#allocation19 + $0x308] sm:$0xff]
    %v3646 = vld [vmem:[#allocation19 + $0x310] sm:$0xff]
    %v3647 = vld [vmem:[#allocation19 + $0x318] sm:$0xff]
    %v3648 = vld [vmem:[#allocation19 + $0x320] sm:$0xff]
    %v3649 = vld [vmem:[#allocation19 + $0x328] sm:$0xff]
    %v3650 = vld [vmem:[#allocation19 + $0x330] sm:$0xff]
    %v3651 = vld [vmem:[#allocation19 + $0x338] sm:$0xff]
    %v3652 = vld [vmem:[#allocation19 + $0x340] sm:$0xff]
    %v3653 = vld [vmem:[#allocation19 + $0x348] sm:$0xff]
    %v3654 = vld [vmem:[#allocation19 + $0x350] sm:$0xff]
    %v3655 = vld [vmem:[#allocation19 + $0x358] sm:$0xff]
    %v3656 = vld [vmem:[#allocation19 + $0x360] sm:$0xff]
    %v3657 = vld [vmem:[#allocation19 + $0x368] sm:$0xff]
    %v3658 = vld [vmem:[#allocation19 + $0x370] sm:$0xff]
    %v3659 = vld [vmem:[#allocation19 + $0x378] sm:$0xff]
    %v3660 = vld [vmem:[#allocation19 + $0x380] sm:$0xff]
    %v3661 = vld [vmem:[#allocation19 + $0x388] sm:$0xff]
    %v3662 = vld [vmem:[#allocation19 + $0x390] sm:$0xff]
    %v3663 = vld [vmem:[#allocation19 + $0x398] sm:$0xff]
    %v3664 = vld [vmem:[#allocation19 + $0x3a0] sm:$0xff]
    %v3665 = vld [vmem:[#allocation19 + $0x3a8] sm:$0xff]
    %v3666 = vld [vmem:[#allocation19 + $0x3b0] sm:$0xff]
    %v3667 = vld [vmem:[#allocation19 + $0x3b8] sm:$0xff]
    %v3668 = vld [vmem:[#allocation19 + $0x3c0] sm:$0xff]
    %v3669 = vld [vmem:[#allocation19 + $0x3c8] sm:$0xff]
    %v3670 = vld [vmem:[#allocation19 + $0x3d0] sm:$0xff]
    %v3671 = vld [vmem:[#allocation19 + $0x3d8] sm:$0xff]
    %v3672 = vld [vmem:[#allocation19 + $0x3e0] sm:$0xff]
    %v3673 = vld [vmem:[#allocation19 + $0x3e8] sm:$0xff]
    %v3674 = vld [vmem:[#allocation19 + $0x3f0] sm:$0xff]
    %v3675 = vld [vmem:[#allocation19 + $0x3f8] sm:$0xff]
    %v3676 = vld [vmem:[#allocation19 + $0x400] sm:$0xff]
    %v3677 = vld [vmem:[#allocation19 + $0x408] sm:$0xff]
    %v3678 = vld [vmem:[#allocation19 + $0x410] sm:$0xff]
    %v3679 = vld [vmem:[#allocation19 + $0x418] sm:$0xff]
    %v3680 = vld [vmem:[#allocation19 + $0x420] sm:$0xff]
    %v3681 = vld [vmem:[#allocation19 + $0x428] sm:$0xff]
    %v3682 = vld [vmem:[#allocation19 + $0x430] sm:$0xff]
    %v3683 = vld [vmem:[#allocation19 + $0x438] sm:$0xff]
    %v3684 = vld [vmem:[#allocation19 + $0x440] sm:$0xff]
    %v3685 = vld [vmem:[#allocation19 + $0x448] sm:$0xff]
    %v3686 = vld [vmem:[#allocation19 + $0x450] sm:$0xff]
    %v3687 = vld [vmem:[#allocation19 + $0x458] sm:$0xff]
    %v3688 = vld [vmem:[#allocation19 + $0x460] sm:$0xff]
    %v3689 = vld [vmem:[#allocation19 + $0x468] sm:$0xff]
    %v3690 = vld [vmem:[#allocation19 + $0x470] sm:$0xff]
    %v3691 = vld [vmem:[#allocation19 + $0x478] sm:$0xff]
    %v3692 = vld [vmem:[#allocation19 + $0x480] sm:$0xff]
    %v3693 = vld [vmem:[#allocation19 + $0x488] sm:$0xff]
    %v3694 = vld [vmem:[#allocation19 + $0x490] sm:$0xff]
    %v3695 = vld [vmem:[#allocation19 + $0x498] sm:$0xff]
    %v3696 = vld [vmem:[#allocation19 + $0x4a0] sm:$0xff]
    %v3697 = vld [vmem:[#allocation19 + $0x4a8] sm:$0xff]
    %v3698 = vld [vmem:[#allocation19 + $0x4b0] sm:$0xff]
    %v3699 = vld [vmem:[#allocation19 + $0x4b8] sm:$0xff]
    %v3700 = vld [vmem:[#allocation19 + $0x4c0] sm:$0xff]
    %v3701 = vld [vmem:[#allocation19 + $0x4c8] sm:$0xff]
    %v3702 = vld [vmem:[#allocation19 + $0x4d0] sm:$0xff]
    %v3703 = vld [vmem:[#allocation19 + $0x4d8] sm:$0xff]
    %v3704 = vld [vmem:[#allocation19 + $0x4e0] sm:$0xff]
    %v3705 = vld [vmem:[#allocation19 + $0x4e8] sm:$0xff]
    %v3706 = vld [vmem:[#allocation19 + $0x4f0] sm:$0xff]
    %v3707 = vld [vmem:[#allocation19 + $0x4f8] sm:$0xff]
    %v3708 = vld [vmem:[#allocation19 + $0x500] sm:$0xff]
    %v3709 = vld [vmem:[#allocation19 + $0x508] sm:$0xff]
    %v3710 = vld [vmem:[#allocation19 + $0x510] sm:$0xff]
    %v3711 = vld [vmem:[#allocation19 + $0x518] sm:$0xff]
    %v3712 = vld [vmem:[#allocation19 + $0x520] sm:$0xff]
    %v3713 = vld [vmem:[#allocation19 + $0x528] sm:$0xff]
    %v3714 = vld [vmem:[#allocation19 + $0x530] sm:$0xff]
    %v3715 = vld [vmem:[#allocation19 + $0x538] sm:$0xff]
    %v3716 = vld [vmem:[#allocation19 + $0x540] sm:$0xff]
    %v3717 = vld [vmem:[#allocation19 + $0x548] sm:$0xff]
    %v3718 = vld [vmem:[#allocation19 + $0x550] sm:$0xff]
    %v3719 = vld [vmem:[#allocation19 + $0x558] sm:$0xff]
    %v3720 = vld [vmem:[#allocation19 + $0x560] sm:$0xff]
    %v3721 = vld [vmem:[#allocation19 + $0x568] sm:$0xff]
    %v3722 = vld [vmem:[#allocation19 + $0x570] sm:$0xff]
    %v3723 = vld [vmem:[#allocation19 + $0x578] sm:$0xff]
    %v3724 = vld [vmem:[#allocation19 + $0x580] sm:$0xff]
    %v3725 = vld [vmem:[#allocation19 + $0x588] sm:$0xff]
    %v3726 = vld [vmem:[#allocation19 + $0x590] sm:$0xff]
    %v3727 = vld [vmem:[#allocation19 + $0x598] sm:$0xff]
    %v3728 = vld [vmem:[#allocation19 + $0x5a0] sm:$0xff]
    %v3729 = vld [vmem:[#allocation19 + $0x5a8] sm:$0xff]
    %v3730 = vld [vmem:[#allocation19 + $0x5b0] sm:$0xff]
    %v3731 = vld [vmem:[#allocation19 + $0x5b8] sm:$0xff]
    %v3732 = vld [vmem:[#allocation19 + $0x5c0] sm:$0xff]
    %v3733 = vld [vmem:[#allocation19 + $0x5c8] sm:$0xff]
    %v3734 = vld [vmem:[#allocation19 + $0x5d0] sm:$0xff]
    %v3735 = vld [vmem:[#allocation19 + $0x5d8] sm:$0xff]
    %v3736 = vld [vmem:[#allocation19 + $0x5e0] sm:$0xff]
    %v3737 = vld [vmem:[#allocation19 + $0x5e8] sm:$0xff]
    %v3738 = vld [vmem:[#allocation19 + $0x5f0] sm:$0xff]
    %v3739 = vld [vmem:[#allocation19 + $0x5f8] sm:$0xff]
    %v3740 = vld [vmem:[#allocation20] sm:$0x3f]
    %v3742 = vlaneseq
    %v3743 = vshrl.u32 %v3742, 7
    %v3744 = vsub.s32 0, %v3743
    %v3745 = vrot.slane %v3740, %v3744
    %v3746 = vlaneseq
    %v3747 = vshrl.u32 %v3746, 7
    %v3748 = vsub.s32 1, %v3747
    %v3749 = vrot.slane %v3740, %v3748
    %v3750 = vlaneseq
    %v3751 = vshrl.u32 %v3750, 7
    %v3752 = vsub.s32 2, %v3751
    %v3753 = vrot.slane %v3740, %v3752
    %v3754 = vlaneseq
    %v3755 = vshrl.u32 %v3754, 7
    %v3756 = vsub.s32 3, %v3755
    %v3757 = vrot.slane %v3740, %v3756
    %v3758 = vlaneseq
    %v3759 = vshrl.u32 %v3758, 7
    %v3760 = vsub.s32 4, %v3759
    %v3761 = vrot.slane %v3740, %v3760
    %v3762 = vlaneseq
    %v3763 = vshrl.u32 %v3762, 7
    %v3764 = vsub.s32 5, %v3763
    %v3765 = vrot.slane %v3740, %v3764
    %v3964 = vunpack.c.l.b16 %v3548
    %v3965 = vunpack.c.h.b16 %v3548
    %v3966 = vunpack.c.l.b16 %v3549
    %v3967 = vunpack.c.h.b16 %v3549
    %v3968 = vunpack.c.l.b16 %v3550
    %v3969 = vunpack.c.h.b16 %v3550
    %v3970 = vunpack.c.l.b16 %v3551
    %v3971 = vunpack.c.h.b16 %v3551
    %v3972 = vunpack.c.l.b16 %v3552
    %v3973 = vunpack.c.h.b16 %v3552
    %v3974 = vunpack.c.l.b16 %v3553
    %v3975 = vunpack.c.h.b16 %v3553
    %v3976 = vunpack.c.l.b16 %v3554
    %v3977 = vunpack.c.h.b16 %v3554
    %v3978 = vunpack.c.l.b16 %v3555
    %v3979 = vunpack.c.h.b16 %v3555
    %v3980 = vunpack.c.l.b16 %v3556
    %v3981 = vunpack.c.h.b16 %v3556
    %v3982 = vunpack.c.l.b16 %v3557
    %v3983 = vunpack.c.h.b16 %v3557
    %v3984 = vunpack.c.l.b16 %v3558
    %v3985 = vunpack.c.h.b16 %v3558
    %v3986 = vunpack.c.l.b16 %v3559
    %v3987 = vunpack.c.h.b16 %v3559
    %v3988 = vunpack.c.l.b16 %v3560
    %v3989 = vunpack.c.h.b16 %v3560
    %v3990 = vunpack.c.l.b16 %v3561
    %v3991 = vunpack.c.h.b16 %v3561
    %v3992 = vunpack.c.l.b16 %v3562
    %v3993 = vunpack.c.h.b16 %v3562
    %v3994 = vunpack.c.l.b16 %v3563
    %v3995 = vunpack.c.h.b16 %v3563
    %v3996 = vunpack.c.l.b16 %v3564
    %v3997 = vunpack.c.h.b16 %v3564
    %v3998 = vunpack.c.l.b16 %v3565
    %v3999 = vunpack.c.h.b16 %v3565
    %v4000 = vunpack.c.l.b16 %v3566
    %v4001 = vunpack.c.h.b16 %v3566
    %v4002 = vunpack.c.l.b16 %v3567
    %v4003 = vunpack.c.h.b16 %v3567
    %v4004 = vunpack.c.l.b16 %v3568
    %v4005 = vunpack.c.h.b16 %v3568
    %v4006 = vunpack.c.l.b16 %v3569
    %v4007 = vunpack.c.h.b16 %v3569
    %v4008 = vunpack.c.l.b16 %v3570
    %v4009 = vunpack.c.h.b16 %v3570
    %v4010 = vunpack.c.l.b16 %v3571
    %v4011 = vunpack.c.h.b16 %v3571
    %v4012 = vunpack.c.l.b16 %v3572
    %v4013 = vunpack.c.h.b16 %v3572
    %v4014 = vunpack.c.l.b16 %v3573
    %v4015 = vunpack.c.h.b16 %v3573
    %v4016 = vunpack.c.l.b16 %v3574
    %v4017 = vunpack.c.h.b16 %v3574
    %v4018 = vunpack.c.l.b16 %v3575
    %v4019 = vunpack.c.h.b16 %v3575
    %v4020 = vunpack.c.l.b16 %v3576
    %v4021 = vunpack.c.h.b16 %v3576
    %v4022 = vunpack.c.l.b16 %v3577
    %v4023 = vunpack.c.h.b16 %v3577
    %v4024 = vunpack.c.l.b16 %v3578
    %v4025 = vunpack.c.h.b16 %v3578
    %v4026 = vunpack.c.l.b16 %v3579
    %v4027 = vunpack.c.h.b16 %v3579
    %v4028 = vunpack.c.l.b16 %v3580
    %v4029 = vunpack.c.h.b16 %v3580
    %v4030 = vunpack.c.l.b16 %v3581
    %v4031 = vunpack.c.h.b16 %v3581
    %v4032 = vunpack.c.l.b16 %v3582
    %v4033 = vunpack.c.h.b16 %v3582
    %v4034 = vunpack.c.l.b16 %v3583
    %v4035 = vunpack.c.h.b16 %v3583
    %v4036 = vunpack.c.l.b16 %v3584
    %v4037 = vunpack.c.h.b16 %v3584
    %v4038 = vunpack.c.l.b16 %v3585
    %v4039 = vunpack.c.h.b16 %v3585
    %v4040 = vunpack.c.l.b16 %v3586
    %v4041 = vunpack.c.h.b16 %v3586
    %v4042 = vunpack.c.l.b16 %v3587
    %v4043 = vunpack.c.h.b16 %v3587
    %v4044 = vunpack.c.l.b16 %v3588
    %v4045 = vunpack.c.h.b16 %v3588
    %v4046 = vunpack.c.l.b16 %v3589
    %v4047 = vunpack.c.h.b16 %v3589
    %v4048 = vunpack.c.l.b16 %v3590
    %v4049 = vunpack.c.h.b16 %v3590
    %v4050 = vunpack.c.l.b16 %v3591
    %v4051 = vunpack.c.h.b16 %v3591
    %v4052 = vunpack.c.l.b16 %v3592
    %v4053 = vunpack.c.h.b16 %v3592
    %v4054 = vunpack.c.l.b16 %v3593
    %v4055 = vunpack.c.h.b16 %v3593
    %v4056 = vunpack.c.l.b16 %v3594
    %v4057 = vunpack.c.h.b16 %v3594
    %v4058 = vunpack.c.l.b16 %v3595
    %v4059 = vunpack.c.h.b16 %v3595
    %v4060 = vunpack.c.l.b16 %v3596
    %v4061 = vunpack.c.h.b16 %v3596
    %v4062 = vunpack.c.l.b16 %v3597
    %v4063 = vunpack.c.h.b16 %v3597
    %v4064 = vunpack.c.l.b16 %v3598
    %v4065 = vunpack.c.h.b16 %v3598
    %v4066 = vunpack.c.l.b16 %v3599
    %v4067 = vunpack.c.h.b16 %v3599
    %v4068 = vunpack.c.l.b16 %v3600
    %v4069 = vunpack.c.h.b16 %v3600
    %v4070 = vunpack.c.l.b16 %v3601
    %v4071 = vunpack.c.h.b16 %v3601
    %v4072 = vunpack.c.l.b16 %v3602
    %v4073 = vunpack.c.h.b16 %v3602
    %v4074 = vunpack.c.l.b16 %v3603
    %v4075 = vunpack.c.h.b16 %v3603
    %v4076 = vunpack.c.l.b16 %v3604
    %v4077 = vunpack.c.h.b16 %v3604
    %v4078 = vunpack.c.l.b16 %v3605
    %v4079 = vunpack.c.h.b16 %v3605
    %v4080 = vunpack.c.l.b16 %v3606
    %v4081 = vunpack.c.h.b16 %v3606
    %v4082 = vunpack.c.l.b16 %v3607
    %v4083 = vunpack.c.h.b16 %v3607
    %v4084 = vunpack.c.l.b16 %v3608
    %v4085 = vunpack.c.h.b16 %v3608
    %v4086 = vunpack.c.l.b16 %v3609
    %v4087 = vunpack.c.h.b16 %v3609
    %v4088 = vunpack.c.l.b16 %v3610
    %v4089 = vunpack.c.h.b16 %v3610
    %v4090 = vunpack.c.l.b16 %v3611
    %v4091 = vunpack.c.h.b16 %v3611
    %v4092 = vunpack.c.l.b16 %v3612
    %v4093 = vunpack.c.h.b16 %v3612
    %v4094 = vunpack.c.l.b16 %v3613
    %v4095 = vunpack.c.h.b16 %v3613
    %v4096 = vunpack.c.l.b16 %v3614
    %v4097 = vunpack.c.h.b16 %v3614
    %v4098 = vunpack.c.l.b16 %v3615
    %v4099 = vunpack.c.h.b16 %v3615
    %v4100 = vunpack.c.l.b16 %v3616
    %v4101 = vunpack.c.h.b16 %v3616
    %v4102 = vunpack.c.l.b16 %v3617
    %v4103 = vunpack.c.h.b16 %v3617
    %v4104 = vunpack.c.l.b16 %v3618
    %v4105 = vunpack.c.h.b16 %v3618
    %v4106 = vunpack.c.l.b16 %v3619
    %v4107 = vunpack.c.h.b16 %v3619
    %v4108 = vunpack.c.l.b16 %v3620
    %v4109 = vunpack.c.h.b16 %v3620
    %v4110 = vunpack.c.l.b16 %v3621
    %v4111 = vunpack.c.h.b16 %v3621
    %v4112 = vunpack.c.l.b16 %v3622
    %v4113 = vunpack.c.h.b16 %v3622
    %v4114 = vunpack.c.l.b16 %v3623
    %v4115 = vunpack.c.h.b16 %v3623
    %v4116 = vunpack.c.l.b16 %v3624
    %v4117 = vunpack.c.h.b16 %v3624
    %v4118 = vunpack.c.l.b16 %v3625
    %v4119 = vunpack.c.h.b16 %v3625
    %v4120 = vunpack.c.l.b16 %v3626
    %v4121 = vunpack.c.h.b16 %v3626
    %v4122 = vunpack.c.l.b16 %v3627
    %v4123 = vunpack.c.h.b16 %v3627
    %v4124 = vunpack.c.l.b16 %v3628
    %v4125 = vunpack.c.h.b16 %v3628
    %v4126 = vunpack.c.l.b16 %v3629
    %v4127 = vunpack.c.h.b16 %v3629
    %v4128 = vunpack.c.l.b16 %v3630
    %v4129 = vunpack.c.h.b16 %v3630
    %v4130 = vunpack.c.l.b16 %v3631
    %v4131 = vunpack.c.h.b16 %v3631
    %v4132 = vunpack.c.l.b16 %v3632
    %v4133 = vunpack.c.h.b16 %v3632
    %v4134 = vunpack.c.l.b16 %v3633
    %v4135 = vunpack.c.h.b16 %v3633
    %v4136 = vunpack.c.l.b16 %v3634
    %v4137 = vunpack.c.h.b16 %v3634
    %v4138 = vunpack.c.l.b16 %v3635
    %v4139 = vunpack.c.h.b16 %v3635
    %v4140 = vunpack.c.l.b16 %v3636
    %v4141 = vunpack.c.h.b16 %v3636
    %v4142 = vunpack.c.l.b16 %v3637
    %v4143 = vunpack.c.h.b16 %v3637
    %v4144 = vunpack.c.l.b16 %v3638
    %v4145 = vunpack.c.h.b16 %v3638
    %v4146 = vunpack.c.l.b16 %v3639
    %v4147 = vunpack.c.h.b16 %v3639
    %v4148 = vunpack.c.l.b16 %v3640
    %v4149 = vunpack.c.h.b16 %v3640
    %v4150 = vunpack.c.l.b16 %v3641
    %v4151 = vunpack.c.h.b16 %v3641
    %v4152 = vunpack.c.l.b16 %v3642
    %v4153 = vunpack.c.h.b16 %v3642
    %v4154 = vunpack.c.l.b16 %v3643
    %v4155 = vunpack.c.h.b16 %v3643
    %v4156 = vunpack.c.l.b16 %v3644
    %v4157 = vunpack.c.h.b16 %v3644
    %v4158 = vunpack.c.l.b16 %v3645
    %v4159 = vunpack.c.h.b16 %v3645
    %v4160 = vunpack.c.l.b16 %v3646
    %v4161 = vunpack.c.h.b16 %v3646
    %v4162 = vunpack.c.l.b16 %v3647
    %v4163 = vunpack.c.h.b16 %v3647
    %v4164 = vunpack.c.l.b16 %v3648
    %v4165 = vunpack.c.h.b16 %v3648
    %v4166 = vunpack.c.l.b16 %v3649
    %v4167 = vunpack.c.h.b16 %v3649
    %v4168 = vunpack.c.l.b16 %v3650
    %v4169 = vunpack.c.h.b16 %v3650
    %v4170 = vunpack.c.l.b16 %v3651
    %v4171 = vunpack.c.h.b16 %v3651
    %v4172 = vunpack.c.l.b16 %v3652
    %v4173 = vunpack.c.h.b16 %v3652
    %v4174 = vunpack.c.l.b16 %v3653
    %v4175 = vunpack.c.h.b16 %v3653
    %v4176 = vunpack.c.l.b16 %v3654
    %v4177 = vunpack.c.h.b16 %v3654
    %v4178 = vunpack.c.l.b16 %v3655
    %v4179 = vunpack.c.h.b16 %v3655
    %v4180 = vunpack.c.l.b16 %v3656
    %v4181 = vunpack.c.h.b16 %v3656
    %v4182 = vunpack.c.l.b16 %v3657
    %v4183 = vunpack.c.h.b16 %v3657
    %v4184 = vunpack.c.l.b16 %v3658
    %v4185 = vunpack.c.h.b16 %v3658
    %v4186 = vunpack.c.l.b16 %v3659
    %v4187 = vunpack.c.h.b16 %v3659
    %v4188 = vunpack.c.l.b16 %v3660
    %v4189 = vunpack.c.h.b16 %v3660
    %v4190 = vunpack.c.l.b16 %v3661
    %v4191 = vunpack.c.h.b16 %v3661
    %v4192 = vunpack.c.l.b16 %v3662
    %v4193 = vunpack.c.h.b16 %v3662
    %v4194 = vunpack.c.l.b16 %v3663
    %v4195 = vunpack.c.h.b16 %v3663
    %v4196 = vunpack.c.l.b16 %v3664
    %v4197 = vunpack.c.h.b16 %v3664
    %v4198 = vunpack.c.l.b16 %v3665
    %v4199 = vunpack.c.h.b16 %v3665
    %v4200 = vunpack.c.l.b16 %v3666
    %v4201 = vunpack.c.h.b16 %v3666
    %v4202 = vunpack.c.l.b16 %v3667
    %v4203 = vunpack.c.h.b16 %v3667
    %v4204 = vunpack.c.l.b16 %v3668
    %v4205 = vunpack.c.h.b16 %v3668
    %v4206 = vunpack.c.l.b16 %v3669
    %v4207 = vunpack.c.h.b16 %v3669
    %v4208 = vunpack.c.l.b16 %v3670
    %v4209 = vunpack.c.h.b16 %v3670
    %v4210 = vunpack.c.l.b16 %v3671
    %v4211 = vunpack.c.h.b16 %v3671
    %v4212 = vunpack.c.l.b16 %v3672
    %v4213 = vunpack.c.h.b16 %v3672
    %v4214 = vunpack.c.l.b16 %v3673
    %v4215 = vunpack.c.h.b16 %v3673
    %v4216 = vunpack.c.l.b16 %v3674
    %v4217 = vunpack.c.h.b16 %v3674
    %v4218 = vunpack.c.l.b16 %v3675
    %v4219 = vunpack.c.h.b16 %v3675
    %v4220 = vunpack.c.l.b16 %v3676
    %v4221 = vunpack.c.h.b16 %v3676
    %v4222 = vunpack.c.l.b16 %v3677
    %v4223 = vunpack.c.h.b16 %v3677
    %v4224 = vunpack.c.l.b16 %v3678
    %v4225 = vunpack.c.h.b16 %v3678
    %v4226 = vunpack.c.l.b16 %v3679
    %v4227 = vunpack.c.h.b16 %v3679
    %v4228 = vunpack.c.l.b16 %v3680
    %v4229 = vunpack.c.h.b16 %v3680
    %v4230 = vunpack.c.l.b16 %v3681
    %v4231 = vunpack.c.h.b16 %v3681
    %v4232 = vunpack.c.l.b16 %v3682
    %v4233 = vunpack.c.h.b16 %v3682
    %v4234 = vunpack.c.l.b16 %v3683
    %v4235 = vunpack.c.h.b16 %v3683
    %v4236 = vunpack.c.l.b16 %v3684
    %v4237 = vunpack.c.h.b16 %v3684
    %v4238 = vunpack.c.l.b16 %v3685
    %v4239 = vunpack.c.h.b16 %v3685
    %v4240 = vunpack.c.l.b16 %v3686
    %v4241 = vunpack.c.h.b16 %v3686
    %v4242 = vunpack.c.l.b16 %v3687
    %v4243 = vunpack.c.h.b16 %v3687
    %v4244 = vunpack.c.l.b16 %v3688
    %v4245 = vunpack.c.h.b16 %v3688
    %v4246 = vunpack.c.l.b16 %v3689
    %v4247 = vunpack.c.h.b16 %v3689
    %v4248 = vunpack.c.l.b16 %v3690
    %v4249 = vunpack.c.h.b16 %v3690
    %v4250 = vunpack.c.l.b16 %v3691
    %v4251 = vunpack.c.h.b16 %v3691
    %v4252 = vunpack.c.l.b16 %v3692
    %v4253 = vunpack.c.h.b16 %v3692
    %v4254 = vunpack.c.l.b16 %v3693
    %v4255 = vunpack.c.h.b16 %v3693
    %v4256 = vunpack.c.l.b16 %v3694
    %v4257 = vunpack.c.h.b16 %v3694
    %v4258 = vunpack.c.l.b16 %v3695
    %v4259 = vunpack.c.h.b16 %v3695
    %v4260 = vunpack.c.l.b16 %v3696
    %v4261 = vunpack.c.h.b16 %v3696
    %v4262 = vunpack.c.l.b16 %v3697
    %v4263 = vunpack.c.h.b16 %v3697
    %v4264 = vunpack.c.l.b16 %v3698
    %v4265 = vunpack.c.h.b16 %v3698
    %v4266 = vunpack.c.l.b16 %v3699
    %v4267 = vunpack.c.h.b16 %v3699
    %v4268 = vunpack.c.l.b16 %v3700
    %v4269 = vunpack.c.h.b16 %v3700
    %v4270 = vunpack.c.l.b16 %v3701
    %v4271 = vunpack.c.h.b16 %v3701
    %v4272 = vunpack.c.l.b16 %v3702
    %v4273 = vunpack.c.h.b16 %v3702
    %v4274 = vunpack.c.l.b16 %v3703
    %v4275 = vunpack.c.h.b16 %v3703
    %v4276 = vunpack.c.l.b16 %v3704
    %v4277 = vunpack.c.h.b16 %v3704
    %v4278 = vunpack.c.l.b16 %v3705
    %v4279 = vunpack.c.h.b16 %v3705
    %v4280 = vunpack.c.l.b16 %v3706
    %v4281 = vunpack.c.h.b16 %v3706
    %v4282 = vunpack.c.l.b16 %v3707
    %v4283 = vunpack.c.h.b16 %v3707
    %v4284 = vunpack.c.l.b16 %v3708
    %v4285 = vunpack.c.h.b16 %v3708
    %v4286 = vunpack.c.l.b16 %v3709
    %v4287 = vunpack.c.h.b16 %v3709
    %v4288 = vunpack.c.l.b16 %v3710
    %v4289 = vunpack.c.h.b16 %v3710
    %v4290 = vunpack.c.l.b16 %v3711
    %v4291 = vunpack.c.h.b16 %v3711
    %v4292 = vunpack.c.l.b16 %v3712
    %v4293 = vunpack.c.h.b16 %v3712
    %v4294 = vunpack.c.l.b16 %v3713
    %v4295 = vunpack.c.h.b16 %v3713
    %v4296 = vunpack.c.l.b16 %v3714
    %v4297 = vunpack.c.h.b16 %v3714
    %v4298 = vunpack.c.l.b16 %v3715
    %v4299 = vunpack.c.h.b16 %v3715
    %v4300 = vunpack.c.l.b16 %v3716
    %v4301 = vunpack.c.h.b16 %v3716
    %v4302 = vunpack.c.l.b16 %v3717
    %v4303 = vunpack.c.h.b16 %v3717
    %v4304 = vunpack.c.l.b16 %v3718
    %v4305 = vunpack.c.h.b16 %v3718
    %v4306 = vunpack.c.l.b16 %v3719
    %v4307 = vunpack.c.h.b16 %v3719
    %v4308 = vunpack.c.l.b16 %v3720
    %v4309 = vunpack.c.h.b16 %v3720
    %v4310 = vunpack.c.l.b16 %v3721
    %v4311 = vunpack.c.h.b16 %v3721
    %v4312 = vunpack.c.l.b16 %v3722
    %v4313 = vunpack.c.h.b16 %v3722
    %v4314 = vunpack.c.l.b16 %v3723
    %v4315 = vunpack.c.h.b16 %v3723
    %v4316 = vunpack.c.l.b16 %v3724
    %v4317 = vunpack.c.h.b16 %v3724
    %v4318 = vunpack.c.l.b16 %v3725
    %v4319 = vunpack.c.h.b16 %v3725
    %v4320 = vunpack.c.l.b16 %v3726
    %v4321 = vunpack.c.h.b16 %v3726
    %v4322 = vunpack.c.l.b16 %v3727
    %v4323 = vunpack.c.h.b16 %v3727
    %v4324 = vunpack.c.l.b16 %v3728
    %v4325 = vunpack.c.h.b16 %v3728
    %v4326 = vunpack.c.l.b16 %v3729
    %v4327 = vunpack.c.h.b16 %v3729
    %v4328 = vunpack.c.l.b16 %v3730
    %v4329 = vunpack.c.h.b16 %v3730
    %v4330 = vunpack.c.l.b16 %v3731
    %v4331 = vunpack.c.h.b16 %v3731
    %v4332 = vunpack.c.l.b16 %v3732
    %v4333 = vunpack.c.h.b16 %v3732
    %v4334 = vunpack.c.l.b16 %v3733
    %v4335 = vunpack.c.h.b16 %v3733
    %v4336 = vunpack.c.l.b16 %v3734
    %v4337 = vunpack.c.h.b16 %v3734
    %v4338 = vunpack.c.l.b16 %v3735
    %v4339 = vunpack.c.h.b16 %v3735
    %v4340 = vunpack.c.l.b16 %v3736
    %v4341 = vunpack.c.h.b16 %v3736
    %v4342 = vunpack.c.l.b16 %v3737
    %v4343 = vunpack.c.h.b16 %v3737
    %v4344 = vunpack.c.l.b16 %v3738
    %v4345 = vunpack.c.h.b16 %v3738
    %v4346 = vunpack.c.l.b16 %v3739
    %v4347 = vunpack.c.h.b16 %v3739
    %v4348 = vpack.c.b16 %v3970, %v3964
    %v4349 = vpack.c.b16 %v3971, %v3965
    %v4350 = vpack.c.b16 %v3972, %v3966
    %v4351 = vpack.c.b16 %v3973, %v3967
    %v4352 = vpack.c.b16 %v3974, %v3968
    %v4353 = vpack.c.b16 %v3975, %v3969
    %v4354 = vpack.c.b16 %v3982, %v3976
    %v4355 = vpack.c.b16 %v3983, %v3977
    %v4356 = vpack.c.b16 %v3984, %v3978
    %v4357 = vpack.c.b16 %v3985, %v3979
    %v4358 = vpack.c.b16 %v3986, %v3980
    %v4359 = vpack.c.b16 %v3987, %v3981
    %v4360 = vpack.c.b16 %v3994, %v3988
    %v4361 = vpack.c.b16 %v3995, %v3989
    %v4362 = vpack.c.b16 %v3996, %v3990
    %v4363 = vpack.c.b16 %v3997, %v3991
    %v4364 = vpack.c.b16 %v3998, %v3992
    %v4365 = vpack.c.b16 %v3999, %v3993
    %v4366 = vpack.c.b16 %v4006, %v4000
    %v4367 = vpack.c.b16 %v4007, %v4001
    %v4368 = vpack.c.b16 %v4008, %v4002
    %v4369 = vpack.c.b16 %v4009, %v4003
    %v4370 = vpack.c.b16 %v4010, %v4004
    %v4371 = vpack.c.b16 %v4011, %v4005
    %v4372 = vpack.c.b16 %v4018, %v4012
    %v4373 = vpack.c.b16 %v4019, %v4013
    %v4374 = vpack.c.b16 %v4020, %v4014
    %v4375 = vpack.c.b16 %v4021, %v4015
    %v4376 = vpack.c.b16 %v4022, %v4016
    %v4377 = vpack.c.b16 %v4023, %v4017
    %v4378 = vpack.c.b16 %v4030, %v4024
    %v4379 = vpack.c.b16 %v4031, %v4025
    %v4380 = vpack.c.b16 %v4032, %v4026
    %v4381 = vpack.c.b16 %v4033, %v4027
    %v4382 = vpack.c.b16 %v4034, %v4028
    %v4383 = vpack.c.b16 %v4035, %v4029
    %v4384 = vpack.c.b16 %v4042, %v4036
    %v4385 = vpack.c.b16 %v4043, %v4037
    %v4386 = vpack.c.b16 %v4044, %v4038
    %v4387 = vpack.c.b16 %v4045, %v4039
    %v4388 = vpack.c.b16 %v4046, %v4040
    %v4389 = vpack.c.b16 %v4047, %v4041
    %v4390 = vpack.c.b16 %v4054, %v4048
    %v4391 = vpack.c.b16 %v4055, %v4049
    %v4392 = vpack.c.b16 %v4056, %v4050
    %v4393 = vpack.c.b16 %v4057, %v4051
    %v4394 = vpack.c.b16 %v4058, %v4052
    %v4395 = vpack.c.b16 %v4059, %v4053
    %v4396 = vpack.c.b16 %v4066, %v4060
    %v4397 = vpack.c.b16 %v4067, %v4061
    %v4398 = vpack.c.b16 %v4068, %v4062
    %v4399 = vpack.c.b16 %v4069, %v4063
    %v4400 = vpack.c.b16 %v4070, %v4064
    %v4401 = vpack.c.b16 %v4071, %v4065
    %v4402 = vpack.c.b16 %v4078, %v4072
    %v4403 = vpack.c.b16 %v4079, %v4073
    %v4404 = vpack.c.b16 %v4080, %v4074
    %v4405 = vpack.c.b16 %v4081, %v4075
    %v4406 = vpack.c.b16 %v4082, %v4076
    %v4407 = vpack.c.b16 %v4083, %v4077
    %v4408 = vpack.c.b16 %v4090, %v4084
    %v4409 = vpack.c.b16 %v4091, %v4085
    %v4410 = vpack.c.b16 %v4092, %v4086
    %v4411 = vpack.c.b16 %v4093, %v4087
    %v4412 = vpack.c.b16 %v4094, %v4088
    %v4413 = vpack.c.b16 %v4095, %v4089
    %v4414 = vpack.c.b16 %v4102, %v4096
    %v4415 = vpack.c.b16 %v4103, %v4097
    %v4416 = vpack.c.b16 %v4104, %v4098
    %v4417 = vpack.c.b16 %v4105, %v4099
    %v4418 = vpack.c.b16 %v4106, %v4100
    %v4419 = vpack.c.b16 %v4107, %v4101
    %v4420 = vpack.c.b16 %v4114, %v4108
    %v4421 = vpack.c.b16 %v4115, %v4109
    %v4422 = vpack.c.b16 %v4116, %v4110
    %v4423 = vpack.c.b16 %v4117, %v4111
    %v4424 = vpack.c.b16 %v4118, %v4112
    %v4425 = vpack.c.b16 %v4119, %v4113
    %v4426 = vpack.c.b16 %v4126, %v4120
    %v4427 = vpack.c.b16 %v4127, %v4121
    %v4428 = vpack.c.b16 %v4128, %v4122
    %v4429 = vpack.c.b16 %v4129, %v4123
    %v4430 = vpack.c.b16 %v4130, %v4124
    %v4431 = vpack.c.b16 %v4131, %v4125
    %v4432 = vpack.c.b16 %v4138, %v4132
    %v4433 = vpack.c.b16 %v4139, %v4133
    %v4434 = vpack.c.b16 %v4140, %v4134
    %v4435 = vpack.c.b16 %v4141, %v4135
    %v4436 = vpack.c.b16 %v4142, %v4136
    %v4437 = vpack.c.b16 %v4143, %v4137
    %v4438 = vpack.c.b16 %v4150, %v4144
    %v4439 = vpack.c.b16 %v4151, %v4145
    %v4440 = vpack.c.b16 %v4152, %v4146
    %v4441 = vpack.c.b16 %v4153, %v4147
    %v4442 = vpack.c.b16 %v4154, %v4148
    %v4443 = vpack.c.b16 %v4155, %v4149
    %v4444 = vpack.c.b16 %v4162, %v4156
    %v4445 = vpack.c.b16 %v4163, %v4157
    %v4446 = vpack.c.b16 %v4164, %v4158
    %v4447 = vpack.c.b16 %v4165, %v4159
    %v4448 = vpack.c.b16 %v4166, %v4160
    %v4449 = vpack.c.b16 %v4167, %v4161
    %v4450 = vpack.c.b16 %v4174, %v4168
    %v4451 = vpack.c.b16 %v4175, %v4169
    %v4452 = vpack.c.b16 %v4176, %v4170
    %v4453 = vpack.c.b16 %v4177, %v4171
    %v4454 = vpack.c.b16 %v4178, %v4172
    %v4455 = vpack.c.b16 %v4179, %v4173
    %v4456 = vpack.c.b16 %v4186, %v4180
    %v4457 = vpack.c.b16 %v4187, %v4181
    %v4458 = vpack.c.b16 %v4188, %v4182
    %v4459 = vpack.c.b16 %v4189, %v4183
    %v4460 = vpack.c.b16 %v4190, %v4184
    %v4461 = vpack.c.b16 %v4191, %v4185
    %v4462 = vpack.c.b16 %v4198, %v4192
    %v4463 = vpack.c.b16 %v4199, %v4193
    %v4464 = vpack.c.b16 %v4200, %v4194
    %v4465 = vpack.c.b16 %v4201, %v4195
    %v4466 = vpack.c.b16 %v4202, %v4196
    %v4467 = vpack.c.b16 %v4203, %v4197
    %v4468 = vpack.c.b16 %v4210, %v4204
    %v4469 = vpack.c.b16 %v4211, %v4205
    %v4470 = vpack.c.b16 %v4212, %v4206
    %v4471 = vpack.c.b16 %v4213, %v4207
    %v4472 = vpack.c.b16 %v4214, %v4208
    %v4473 = vpack.c.b16 %v4215, %v4209
    %v4474 = vpack.c.b16 %v4222, %v4216
    %v4475 = vpack.c.b16 %v4223, %v4217
    %v4476 = vpack.c.b16 %v4224, %v4218
    %v4477 = vpack.c.b16 %v4225, %v4219
    %v4478 = vpack.c.b16 %v4226, %v4220
    %v4479 = vpack.c.b16 %v4227, %v4221
    %v4480 = vpack.c.b16 %v4234, %v4228
    %v4481 = vpack.c.b16 %v4235, %v4229
    %v4482 = vpack.c.b16 %v4236, %v4230
    %v4483 = vpack.c.b16 %v4237, %v4231
    %v4484 = vpack.c.b16 %v4238, %v4232
    %v4485 = vpack.c.b16 %v4239, %v4233
    %v4486 = vpack.c.b16 %v4246, %v4240
    %v4487 = vpack.c.b16 %v4247, %v4241
    %v4488 = vpack.c.b16 %v4248, %v4242
    %v4489 = vpack.c.b16 %v4249, %v4243
    %v4490 = vpack.c.b16 %v4250, %v4244
    %v4491 = vpack.c.b16 %v4251, %v4245
    %v4492 = vpack.c.b16 %v4258, %v4252
    %v4493 = vpack.c.b16 %v4259, %v4253
    %v4494 = vpack.c.b16 %v4260, %v4254
    %v4495 = vpack.c.b16 %v4261, %v4255
    %v4496 = vpack.c.b16 %v4262, %v4256
    %v4497 = vpack.c.b16 %v4263, %v4257
    %v4498 = vpack.c.b16 %v4270, %v4264
    %v4499 = vpack.c.b16 %v4271, %v4265
    %v4500 = vpack.c.b16 %v4272, %v4266
    %v4501 = vpack.c.b16 %v4273, %v4267
    %v4502 = vpack.c.b16 %v4274, %v4268
    %v4503 = vpack.c.b16 %v4275, %v4269
    %v4504 = vpack.c.b16 %v4282, %v4276
    %v4505 = vpack.c.b16 %v4283, %v4277
    %v4506 = vpack.c.b16 %v4284, %v4278
    %v4507 = vpack.c.b16 %v4285, %v4279
    %v4508 = vpack.c.b16 %v4286, %v4280
    %v4509 = vpack.c.b16 %v4287, %v4281
    %v4510 = vpack.c.b16 %v4294, %v4288
    %v4511 = vpack.c.b16 %v4295, %v4289
    %v4512 = vpack.c.b16 %v4296, %v4290
    %v4513 = vpack.c.b16 %v4297, %v4291
    %v4514 = vpack.c.b16 %v4298, %v4292
    %v4515 = vpack.c.b16 %v4299, %v4293
    %v4516 = vpack.c.b16 %v4306, %v4300
    %v4517 = vpack.c.b16 %v4307, %v4301
    %v4518 = vpack.c.b16 %v4308, %v4302
    %v4519 = vpack.c.b16 %v4309, %v4303
    %v4520 = vpack.c.b16 %v4310, %v4304
    %v4521 = vpack.c.b16 %v4311, %v4305
    %v4522 = vpack.c.b16 %v4318, %v4312
    %v4523 = vpack.c.b16 %v4319, %v4313
    %v4524 = vpack.c.b16 %v4320, %v4314
    %v4525 = vpack.c.b16 %v4321, %v4315
    %v4526 = vpack.c.b16 %v4322, %v4316
    %v4527 = vpack.c.b16 %v4323, %v4317
    %v4528 = vpack.c.b16 %v4330, %v4324
    %v4529 = vpack.c.b16 %v4331, %v4325
    %v4530 = vpack.c.b16 %v4332, %v4326
    %v4531 = vpack.c.b16 %v4333, %v4327
    %v4532 = vpack.c.b16 %v4334, %v4328
    %v4533 = vpack.c.b16 %v4335, %v4329
    %v4534 = vpack.c.b16 %v4342, %v4336
    %v4535 = vpack.c.b16 %v4343, %v4337
    %v4536 = vpack.c.b16 %v4344, %v4338
    %v4537 = vpack.c.b16 %v4345, %v4339
    %v4538 = vpack.c.b16 %v4346, %v4340
    %v4539 = vpack.c.b16 %v4347, %v4341
    %4732 = vmatprep.subr.bf16.mxu0 %v4349
    %4733 = vmatpush1.bf16.msra.mxu0 %v4348
    %4734 = vmatprep.subr.bf16.mxu0 %v4355
    %4735 = vmatpush1.bf16.msra.mxu0 %v4354
    %4736 = vmatprep.subr.bf16.mxu0 %v4361
    %4737 = vmatpush1.bf16.msra.mxu0 %v4360
    %4738 = vmatprep.subr.bf16.mxu0 %v4367
    %4739 = vmatpush1.bf16.msra.mxu0 %v4366
    %4740 = vmatprep.subr.bf16.mxu0 %v4373
    %4741 = vmatpush1.bf16.msra.mxu0 %v4372
    %4742 = vmatprep.subr.bf16.mxu0 %v4379
    %4743 = vmatpush1.bf16.msra.mxu0 %v4378
    %4744 = vmatprep.subr.bf16.mxu0 %v4385
    %4745 = vmatpush1.bf16.msra.mxu0 %v4384
    %4746 = vmatprep.subr.bf16.mxu0 %v4391
    %4747 = vmatpush1.bf16.msra.mxu0 %v4390
    %4748 = vmatprep.subr.bf16.mxu0 %v4397
    %4749 = vmatpush1.bf16.msra.mxu0 %v4396
    %4750 = vmatprep.subr.bf16.mxu0 %v4403
    %4751 = vmatpush1.bf16.msra.mxu0 %v4402
    %4752 = vmatprep.subr.bf16.mxu0 %v4409
    %4753 = vmatpush1.bf16.msra.mxu0 %v4408
    %4754 = vmatprep.subr.bf16.mxu0 %v4415
    %4755 = vmatpush1.bf16.msra.mxu0 %v4414
    %4756 = vmatprep.subr.bf16.mxu0 %v4421
    %4757 = vmatpush1.bf16.msra.mxu0 %v4420
    %4758 = vmatprep.subr.bf16.mxu0 %v4427
    %4759 = vmatpush1.bf16.msra.mxu0 %v4426
    %4760 = vmatprep.subr.bf16.mxu0 %v4433
    %4761 = vmatpush1.bf16.msra.mxu0 %v4432
    %4762 = vmatprep.subr.bf16.mxu0 %v4439
    %4763 = vmatpush1.bf16.msra.mxu0 %v4438
    %4764 = vmatprep.mubr.bf16.mxu0 %v3545
    %4765 = vmatmul.mubr.bf16.gmra.mrb[0].mxu0 %v3544
    %v4766 = vpop.f32.mrb[0].mxu0
    %v4767 = vadd.f32 %v3745, %v4766
    %v4768 = vpop.f32.mrb[0].mxu0
    %v4769 = vadd.f32 %v3749, %v4768
    %v4770 = vpop.f32.mrb[0].mxu0
    %v4771 = vpop.f32.mrb[0].mxu0
    %4772 = vdwg.mxu0
    %4773 = vmatprep.subr.bf16.mxu0 %v4445
    %4774 = vmatpush1.bf16.msra.mxu0 %v4444
    %4775 = vmatprep.subr.bf16.mxu0 %v4451
    %4776 = vmatpush1.bf16.msra.mxu0 %v4450
    %4777 = vmatprep.subr.bf16.mxu0 %v4457
    %4778 = vmatpush1.bf16.msra.mxu0 %v4456
    %4779 = vmatprep.subr.bf16.mxu0 %v4463
    %4780 = vmatpush1.bf16.msra.mxu0 %v4462
    %4781 = vmatprep.subr.bf16.mxu0 %v4469
    %4782 = vmatpush1.bf16.msra.mxu0 %v4468
    %4783 = vmatprep.subr.bf16.mxu0 %v4475
    %4784 = vmatpush1.bf16.msra.mxu0 %v4474
    %4785 = vmatprep.subr.bf16.mxu0 %v4481
    %4786 = vmatpush1.bf16.msra.mxu0 %v4480
    %4787 = vmatprep.subr.bf16.mxu0 %v4487
    %4788 = vmatpush1.bf16.msra.mxu0 %v4486
    %4789 = vmatprep.subr.bf16.mxu0 %v4493
    %4790 = vmatpush1.bf16.msra.mxu0 %v4492
    %4791 = vmatprep.subr.bf16.mxu0 %v4499
    %4792 = vmatpush1.bf16.msra.mxu0 %v4498
    %4793 = vmatprep.subr.bf16.mxu0 %v4505
    %4794 = vmatpush1.bf16.msra.mxu0 %v4504
    %4795 = vmatprep.subr.bf16.mxu0 %v4511
    %4796 = vmatpush1.bf16.msra.mxu0 %v4510
    %4797 = vmatprep.subr.bf16.mxu0 %v4517
    %4798 = vmatpush1.bf16.msra.mxu0 %v4516
    %4799 = vmatprep.subr.bf16.mxu0 %v4523
    %4800 = vmatpush1.bf16.msra.mxu0 %v4522
    %4801 = vmatprep.subr.bf16.mxu0 %v4529
    %4802 = vmatpush1.bf16.msra.mxu0 %v4528
    %4803 = vmatprep.subr.bf16.mxu0 %v4535
    %4804 = vmatpush1.bf16.msra.mxu0 %v4534
    %4805 = vmatprep.mubr.bf16.mxu0 %v3547
    %4806 = vmatmul.mubr.bf16.gmra.mrb[0].mxu0 %v3546
    %v4807 = vpop.f32.mrb[0].mxu0
    %v4808 = vadd.f32 %v4767, %v4807
    %v4809 = vpop.f32.mrb[0].mxu0
    %v4810 = vadd.f32 %v4769, %v4809
    %v4811 = vpop.f32.mrb[0].mxu0
    %v4812 = vpop.f32.mrb[0].mxu0
    %4813 = vdwg.mxu0
    %4814 = vmatprep.subr.bf16.mxu0 %v4351
    %4815 = vmatpush1.bf16.msra.mxu0 %v4350
    %4816 = vmatprep.subr.bf16.mxu0 %v4357
    %4817 = vmatpush1.bf16.msra.mxu0 %v4356
    %4818 = vmatprep.subr.bf16.mxu0 %v4363
    %4819 = vmatpush1.bf16.msra.mxu0 %v4362
    %4820 = vmatprep.subr.bf16.mxu0 %v4369
    %4821 = vmatpush1.bf16.msra.mxu0 %v4368
    %4822 = vmatprep.subr.bf16.mxu0 %v4375
    %4823 = vmatpush1.bf16.msra.mxu0 %v4374
    %4824 = vmatprep.subr.bf16.mxu0 %v4381
    %4825 = vmatpush1.bf16.msra.mxu0 %v4380
    %4826 = vmatprep.subr.bf16.mxu0 %v4387
    %4827 = vmatpush1.bf16.msra.mxu0 %v4386
    %4828 = vmatprep.subr.bf16.mxu0 %v4393
    %4829 = vmatpush1.bf16.msra.mxu0 %v4392
    %4830 = vmatprep.subr.bf16.mxu0 %v4399
    %4831 = vmatpush1.bf16.msra.mxu0 %v4398
    %4832 = vmatprep.subr.bf16.mxu0 %v4405
    %4833 = vmatpush1.bf16.msra.mxu0 %v4404
    %4834 = vmatprep.subr.bf16.mxu0 %v4411
    %4835 = vmatpush1.bf16.msra.mxu0 %v4410
    %4836 = vmatprep.subr.bf16.mxu0 %v4417
    %4837 = vmatpush1.bf16.msra.mxu0 %v4416
    %4838 = vmatprep.subr.bf16.mxu0 %v4423
    %4839 = vmatpush1.bf16.msra.mxu0 %v4422
    %4840 = vmatprep.subr.bf16.mxu0 %v4429
    %4841 = vmatpush1.bf16.msra.mxu0 %v4428
    %4842 = vmatprep.subr.bf16.mxu0 %v4435
    %4843 = vmatpush1.bf16.msra.mxu0 %v4434
    %4844 = vmatprep.subr.bf16.mxu0 %v4441
    %4845 = vmatpush1.bf16.msra.mxu0 %v4440
    %4846 = vmatprep.mubr.bf16.mxu0 %v3545
    %4847 = vmatmul.mubr.bf16.gmra.mrb[0].mxu0 %v3544
    %v4848 = vpop.f32.mrb[0].mxu0
    %v4849 = vadd.f32 %v3753, %v4848
    %v4850 = vpop.f32.mrb[0].mxu0
    %v4851 = vadd.f32 %v3757, %v4850
    %v4852 = vpop.f32.mrb[0].mxu0
    %v4853 = vpop.f32.mrb[0].mxu0
    %4854 = vdwg.mxu0
    %4855 = vmatprep.subr.bf16.mxu0 %v4447
    %4856 = vmatpush1.bf16.msra.mxu0 %v4446
    %4857 = vmatprep.subr.bf16.mxu0 %v4453
    %4858 = vmatpush1.bf16.msra.mxu0 %v4452
    %4859 = vmatprep.subr.bf16.mxu0 %v4459
    %4860 = vmatpush1.bf16.msra.mxu0 %v4458
    %4861 = vmatprep.subr.bf16.mxu0 %v4465
    %4862 = vmatpush1.bf16.msra.mxu0 %v4464
    %4863 = vmatprep.subr.bf16.mxu0 %v4471
    %4864 = vmatpush1.bf16.msra.mxu0 %v4470
    %4865 = vmatprep.subr.bf16.mxu0 %v4477
    %4866 = vmatpush1.bf16.msra.mxu0 %v4476
    %4867 = vmatprep.subr.bf16.mxu0 %v4483
    %4868 = vmatpush1.bf16.msra.mxu0 %v4482
    %4869 = vmatprep.subr.bf16.mxu0 %v4489
    %4870 = vmatpush1.bf16.msra.mxu0 %v4488
    %4871 = vmatprep.subr.bf16.mxu0 %v4495
    %4872 = vmatpush1.bf16.msra.mxu0 %v4494
    %4873 = vmatprep.subr.bf16.mxu0 %v4501
    %4874 = vmatpush1.bf16.msra.mxu0 %v4500
    %4875 = vmatprep.subr.bf16.mxu0 %v4507
    %4876 = vmatpush1.bf16.msra.mxu0 %v4506
    %4877 = vmatprep.subr.bf16.mxu0 %v4513
    %4878 = vmatpush1.bf16.msra.mxu0 %v4512
    %4879 = vmatprep.subr.bf16.mxu0 %v4519
    %4880 = vmatpush1.bf16.msra.mxu0 %v4518
    %4881 = vmatprep.subr.bf16.mxu0 %v4525
    %4882 = vmatpush1.bf16.msra.mxu0 %v4524
    %4883 = vmatprep.subr.bf16.mxu0 %v4531
    %4884 = vmatpush1.bf16.msra.mxu0 %v4530
    %4885 = vmatprep.subr.bf16.mxu0 %v4537
    %4886 = vmatpush1.bf16.msra.mxu0 %v4536
    %4887 = vmatprep.mubr.bf16.mxu0 %v3547
    %4888 = vmatmul.mubr.bf16.gmra.mrb[0].mxu0 %v3546
    %v4889 = vpop.f32.mrb[0].mxu0
    %v4890 = vadd.f32 %v4849, %v4889
    %v4891 = vpop.f32.mrb[0].mxu0
    %v4892 = vadd.f32 %v4851, %v4891
    %v4893 = vpop.f32.mrb[0].mxu0
    %v4894 = vpop.f32.mrb[0].mxu0
    %4895 = vdwg.mxu0
    %4896 = vmatprep.subr.bf16.mxu0 %v4353
    %4897 = vmatpush1.bf16.msra.mxu0 %v4352
    %4898 = vmatprep.subr.bf16.mxu0 %v4359
    %4899 = vmatpush1.bf16.msra.mxu0 %v4358
    %4900 = vmatprep.subr.bf16.mxu0 %v4365
    %4901 = vmatpush1.bf16.msra.mxu0 %v4364
    %4902 = vmatprep.subr.bf16.mxu0 %v4371
    %4903 = vmatpush1.bf16.msra.mxu0 %v4370
    %4904 = vmatprep.subr.bf16.mxu0 %v4377
    %4905 = vmatpush1.bf16.msra.mxu0 %v4376
    %4906 = vmatprep.subr.bf16.mxu0 %v4383
    %4907 = vmatpush1.bf16.msra.mxu0 %v4382
    %4908 = vmatprep.subr.bf16.mxu0 %v4389
    %4909 = vmatpush1.bf16.msra.mxu0 %v4388
    %4910 = vmatprep.subr.bf16.mxu0 %v4395
    %4911 = vmatpush1.bf16.msra.mxu0 %v4394
    %4912 = vmatprep.subr.bf16.mxu0 %v4401
    %4913 = vmatpush1.bf16.msra.mxu0 %v4400
    %4914 = vmatprep.subr.bf16.mxu0 %v4407
    %4915 = vmatpush1.bf16.msra.mxu0 %v4406
    %4916 = vmatprep.subr.bf16.mxu0 %v4413
    %4917 = vmatpush1.bf16.msra.mxu0 %v4412
    %4918 = vmatprep.subr.bf16.mxu0 %v4419
    %4919 = vmatpush1.bf16.msra.mxu0 %v4418
    %4920 = vmatprep.subr.bf16.mxu0 %v4425
    %4921 = vmatpush1.bf16.msra.mxu0 %v4424
    %4922 = vmatprep.subr.bf16.mxu0 %v4431
    %4923 = vmatpush1.bf16.msra.mxu0 %v4430
    %4924 = vmatprep.subr.bf16.mxu0 %v4437
    %4925 = vmatpush1.bf16.msra.mxu0 %v4436
    %4926 = vmatprep.subr.bf16.mxu0 %v4443
    %4927 = vmatpush1.bf16.msra.mxu0 %v4442
    %4928 = vmatprep.mubr.bf16.mxu0 %v3545
    %4929 = vmatmul.mubr.bf16.gmra.mrb[0].mxu0 %v3544
    %v4930 = vpop.f32.mrb[0].mxu0
    %v4931 = vadd.f32 %v3761, %v4930
    %v4932 = vpop.f32.mrb[0].mxu0
    %v4933 = vadd.f32 %v3765, %v4932
    %v4934 = vpop.f32.mrb[0].mxu0
    %v4935 = vpop.f32.mrb[0].mxu0
    %4936 = vdwg.mxu0
    %4937 = vmatprep.subr.bf16.mxu0 %v4449
    %4938 = vmatpush1.bf16.msra.mxu0 %v4448
    %4939 = vmatprep.subr.bf16.mxu0 %v4455
    %4940 = vmatpush1.bf16.msra.mxu0 %v4454
    %4941 = vmatprep.subr.bf16.mxu0 %v4461
    %4942 = vmatpush1.bf16.msra.mxu0 %v4460
    %4943 = vmatprep.subr.bf16.mxu0 %v4467
    %4944 = vmatpush1.bf16.msra.mxu0 %v4466
    %4945 = vmatprep.subr.bf16.mxu0 %v4473
    %4946 = vmatpush1.bf16.msra.mxu0 %v4472
    %4947 = vmatprep.subr.bf16.mxu0 %v4479
    %4948 = vmatpush1.bf16.msra.mxu0 %v4478
    %4949 = vmatprep.subr.bf16.mxu0 %v4485
    %4950 = vmatpush1.bf16.msra.mxu0 %v4484
    %4951 = vmatprep.subr.bf16.mxu0 %v4491
    %4952 = vmatpush1.bf16.msra.mxu0 %v4490
    %4953 = vmatprep.subr.bf16.mxu0 %v4497
    %4954 = vmatpush1.bf16.msra.mxu0 %v4496
    %4955 = vmatprep.subr.bf16.mxu0 %v4503
    %4956 = vmatpush1.bf16.msra.mxu0 %v4502
    %4957 = vmatprep.subr.bf16.mxu0 %v4509
    %4958 = vmatpush1.bf16.msra.mxu0 %v4508
    %4959 = vmatprep.subr.bf16.mxu0 %v4515
    %4960 = vmatpush1.bf16.msra.mxu0 %v4514
    %4961 = vmatprep.subr.bf16.mxu0 %v4521
    %4962 = vmatpush1.bf16.msra.mxu0 %v4520
    %4963 = vmatprep.subr.bf16.mxu0 %v4527
    %4964 = vmatpush1.bf16.msra.mxu0 %v4526
    %4965 = vmatprep.subr.bf16.mxu0 %v4533
    %4966 = vmatpush1.bf16.msra.mxu0 %v4532
    %4967 = vmatprep.subr.bf16.mxu0 %v4539
    %4968 = vmatpush1.bf16.msra.mxu0 %v4538
    %4969 = vmatprep.mubr.bf16.mxu0 %v3547
    %4970 = vmatmul.mubr.bf16.gmra.mrb[0].mxu0 %v3546
    %v4971 = vpop.f32.mrb[0].mxu0
    %v4972 = vadd.f32 %v4931, %v4971
    %v4973 = vpop.f32.mrb[0].mxu0
    %v4974 = vadd.f32 %v4933, %v4973
    %v4975 = vpop.f32.mrb[0].mxu0
    %v4976 = vpop.f32.mrb[0].mxu0
    %4977 = vdwg.mxu0
    %v4984 = vcombine.low %v4808, %v4810
    %v4985 = vcombine.low %v4890, %v4892
    %v4986 = vcombine.low %v4972, %v4974
    %4990 = vst [vmem:[%s16] sm:$0xff] %v4984
    %4991 = vst [vmem:[%s16 + $0x8] sm:$0xff] %v4985
    %4992 = vst [vmem:[%s16 + $0x10] sm:$0xff] %v4986
    %s4993 = scalar_lea.vmem [#allocation7], 8
    %v4994 = vld [vmem:[%s4993] sm:$0xff]
    %v4995 = vadd.f32 %v4994, %v3403
    %v4996 = vadd.f32 %v4994, %v3442
    %v4998 = vcombine.high %v4995, %v4995
    %v5000 = vunpack.c.l.s4 1983009808
    %v5001 = vunpack.c.0.s8 %v5000
    %v5002 = vlaneseq
    %v5003 = vshrl.u32 %v5002, 7
    %v5004 = vsub.s32 %v5001, %v5003
    %v5005 = vrot.slane %v4995, %v5004
    %v5007 = vunpack.c.l.s4 1983009808
    %v5008 = vunpack.c.0.s8 %v5007
    %v5009 = vlaneseq
    %v5010 = vshrl.u32 %v5009, 7
    %v5011 = vsub.s32 %v5008, %v5010
    %v5012 = vrot.slane %v4998, %v5011
    %v5013 = vcombine.high %v5005, %v5005
    %v5014 = vcombine.high %v5012, %v5012
    %v5020 = vcombine.low %v4996, %v4996
    %v5022 = vunpack.c.l.s4 1983009808
    %v5023 = vunpack.c.0.s8 %v5022
    %v5024 = vlaneseq
    %v5025 = vshrl.u32 %v5024, 7
    %v5026 = vsub.s32 %v5023, %v5025
    %v5027 = vrot.slane %v5020, %v5026
    %v5029 = vunpack.c.l.s4 1983009808
    %v5030 = vunpack.c.0.s8 %v5029
    %v5031 = vlaneseq
    %v5032 = vshrl.u32 %v5031, 7
    %v5033 = vsub.s32 %v5030, %v5032
    %v5034 = vrot.slane %v4996, %v5033
    %v5035 = vcombine.high %v5027, %v5027
    %v5036 = vcombine.high %v5034, %v5034
    %v5041 = vsel %vm732, %v5005, %v5027
    %v5042 = vsel %vm732, %v5013, %v5035
    %v5043 = vsel %vm732, %v5012, %v5034
    %v5044 = vsel %vm732, %v5014, %v5036
    %v5045 = vmul.f32 %v5041, %v5043
    %v5046 = vmul.f32 %v5042, %v5044
    %v5047 = vsel %vm3495, %v5045, 0.0
    %v5048 = vsel %vm3495, %v5046, 0.0
    %v5049 = vadd.f32 %v5047, %v5048
    %5050 = vadd.xlane.f32.xlu0 %v5049
    %v5051 = vpop.xlane.xlu0 %5050
    %v5052 = vmul.f32 %v5041, %v5041
    %v5053 = vmul.f32 %v5042, %v5042
    %v5054 = vsel %vm3495, %v5052, 0.0
    %v5055 = vsel %vm3495, %v5053, 0.0
    %v5056 = vadd.f32 %v5054, %v5055
    %5057 = vadd.xlane.f32.xlu0 %v5056
    %v5058 = vpop.xlane.xlu0 %5057
    %v5059 = vrsqrt.pop %v5058
    %v5060 = vmul.f32 %v5058, %v5059
    %vm5061 = vcmp.eq.f32.partialorder %v5058, inf
    %v5062 = vsel %vm5061, %v5058, %v5060
    %vm5063 = vcmp.eq.f32.partialorder %v5058, 0.0
    %v5064 = vand.u32 %v5058, 2147483648
    %v5065 = vsel %vm5063, %v5064, %v5062
    %v5066 = vmul.f32 %v5043, %v5043
    %v5067 = vmul.f32 %v5044, %v5044
    %v5068 = vsel %vm3495, %v5066, 0.0
    %v5069 = vsel %vm3495, %v5067, 0.0
    %v5070 = vadd.f32 %v5068, %v5069
    %5071 = vadd.xlane.f32.xlu0 %v5070
    %v5072 = vpop.xlane.xlu0 %5071
    %v5073 = vrsqrt.pop %v5072
    %v5074 = vmul.f32 %v5072, %v5073
    %vm5075 = vcmp.eq.f32.partialorder %v5072, inf
    %v5076 = vsel %vm5075, %v5072, %v5074
    %vm5077 = vcmp.eq.f32.partialorder %v5072, 0.0
    %v5078 = vand.u32 %v5072, 2147483648
    %v5079 = vsel %vm5077, %v5078, %v5076
    %v5080 = vmul.f32 %v5065, %v5079
    %v5081 = vmax.f32 %v5080, 1e-08
    %v5082 = vrcp.pop %v5081
    %v5083 = vmul.f32 %v5051, %v5082
    %v5084 = vsel %vm3495, %v5083, 0.0
    %v5085 = vrot.slane %v5084, 4
    %v5086 = vadd.f32 %v5084, %v5085
    %v5087 = vrot.slane %v5086, 2
    %v5088 = vadd.f32 %v5086, %v5087
    %v5089 = vrot.slane %v5088, 1
    %v5090 = vadd.f32 %v5088, %v5089
    %v5091 = vmul.f32 %v5090, %v3540
    %s5092 = scalar_lea.vmem %s17, 1
    %5093 = vst.msk [vmem:[%s5092] sm:$0x1] %vm3542, %v5091
    %v5094 = vpack.c.bf16 %v5041, %v5041
    %v5095 = vpack.c.bf16 %v5042, %v5042
    %v5096 = vpack.c.bf16 %v5043, %v5043
    %v5097 = vpack.c.bf16 %v5044, %v5044
    %s5098 = scalar_lea.vmem [#allocation19], 1536
    %v5099 = vld [vmem:[%s5098] sm:$0xff]
    %v5100 = vld [vmem:[%s5098 + $0x8] sm:$0xff]
    %v5101 = vld [vmem:[%s5098 + $0x10] sm:$0xff]
    %v5102 = vld [vmem:[%s5098 + $0x18] sm:$0xff]
    %v5103 = vld [vmem:[%s5098 + $0x20] sm:$0xff]
    %v5104 = vld [vmem:[%s5098 + $0x28] sm:$0xff]
    %v5105 = vld [vmem:[%s5098 + $0x30] sm:$0xff]
    %v5106 = vld [vmem:[%s5098 + $0x38] sm:$0xff]
    %v5107 = vld [vmem:[%s5098 + $0x40] sm:$0xff]
    %v5108 = vld [vmem:[%s5098 + $0x48] sm:$0xff]
    %v5109 = vld [vmem:[%s5098 + $0x50] sm:$0xff]
    %v5110 = vld [vmem:[%s5098 + $0x58] sm:$0xff]
    %v5111 = vld [vmem:[%s5098 + $0x60] sm:$0xff]
    %v5112 = vld [vmem:[%s5098 + $0x68] sm:$0xff]
    %v5113 = vld [vmem:[%s5098 + $0x70] sm:$0xff]
    %v5114 = vld [vmem:[%s5098 + $0x78] sm:$0xff]
    %v5115 = vld [vmem:[%s5098 + $0x80] sm:$0xff]
    %v5116 = vld [vmem:[%s5098 + $0x88] sm:$0xff]
    %v5117 = vld [vmem:[%s5098 + $0x90] sm:$0xff]
    %v5118 = vld [vmem:[%s5098 + $0x98] sm:$0xff]
    %v5119 = vld [vmem:[%s5098 + $0xa0] sm:$0xff]
    %v5120 = vld [vmem:[%s5098 + $0xa8] sm:$0xff]
    %v5121 = vld [vmem:[%s5098 + $0xb0] sm:$0xff]
    %v5122 = vld [vmem:[%s5098 + $0xb8] sm:$0xff]
    %v5123 = vld [vmem:[%s5098 + $0xc0] sm:$0xff]
    %v5124 = vld [vmem:[%s5098 + $0xc8] sm:$0xff]
    %v5125 = vld [vmem:[%s5098 + $0xd0] sm:$0xff]
    %v5126 = vld [vmem:[%s5098 + $0xd8] sm:$0xff]
    %v5127 = vld [vmem:[%s5098 + $0xe0] sm:$0xff]
    %v5128 = vld [vmem:[%s5098 + $0xe8] sm:$0xff]
    %v5129 = vld [vmem:[%s5098 + $0xf0] sm:$0xff]
    %v5130 = vld [vmem:[%s5098 + $0xf8] sm:$0xff]
    %v5131 = vld [vmem:[%s5098 + $0x100] sm:$0xff]
    %v5132 = vld [vmem:[%s5098 + $0x108] sm:$0xff]
    %v5133 = vld [vmem:[%s5098 + $0x110] sm:$0xff]
    %v5134 = vld [vmem:[%s5098 + $0x118] sm:$0xff]
    %v5135 = vld [vmem:[%s5098 + $0x120] sm:$0xff]
    %v5136 = vld [vmem:[%s5098 + $0x128] sm:$0xff]
    %v5137 = vld [vmem:[%s5098 + $0x130] sm:$0xff]
    %v5138 = vld [vmem:[%s5098 + $0x138] sm:$0xff]
    %v5139 = vld [vmem:[%s5098 + $0x140] sm:$0xff]
    %v5140 = vld [vmem:[%s5098 + $0x148] sm:$0xff]
    %v5141 = vld [vmem:[%s5098 + $0x150] sm:$0xff]
    %v5142 = vld [vmem:[%s5098 + $0x158] sm:$0xff]
    %v5143 = vld [vmem:[%s5098 + $0x160] sm:$0xff]
    %v5144 = vld [vmem:[%s5098 + $0x168] sm:$0xff]
    %v5145 = vld [vmem:[%s5098 + $0x170] sm:$0xff]
    %v5146 = vld [vmem:[%s5098 + $0x178] sm:$0xff]
    %v5147 = vld [vmem:[%s5098 + $0x180] sm:$0xff]
    %v5148 = vld [vmem:[%s5098 + $0x188] sm:$0xff]
    %v5149 = vld [vmem:[%s5098 + $0x190] sm:$0xff]
    %v5150 = vld [vmem:[%s5098 + $0x198] sm:$0xff]
    %v5151 = vld [vmem:[%s5098 + $0x1a0] sm:$0xff]
    %v5152 = vld [vmem:[%s5098 + $0x1a8] sm:$0xff]
    %v5153 = vld [vmem:[%s5098 + $0x1b0] sm:$0xff]
    %v5154 = vld [vmem:[%s5098 + $0x1b8] sm:$0xff]
    %v5155 = vld [vmem:[%s5098 + $0x1c0] sm:$0xff]
    %v5156 = vld [vmem:[%s5098 + $0x1c8] sm:$0xff]
    %v5157 = vld [vmem:[%s5098 + $0x1d0] sm:$0xff]
    %v5158 = vld [vmem:[%s5098 + $0x1d8] sm:$0xff]
    %v5159 = vld [vmem:[%s5098 + $0x1e0] sm:$0xff]
    %v5160 = vld [vmem:[%s5098 + $0x1e8] sm:$0xff]
    %v5161 = vld [vmem:[%s5098 + $0x1f0] sm:$0xff]
    %v5162 = vld [vmem:[%s5098 + $0x1f8] sm:$0xff]
    %v5163 = vld [vmem:[%s5098 + $0x200] sm:$0xff]
    %v5164 = vld [vmem:[%s5098 + $0x208] sm:$0xff]
    %v5165 = vld [vmem:[%s5098 + $0x210] sm:$0xff]
    %v5166 = vld [vmem:[%s5098 + $0x218] sm:$0xff]
    %v5167 = vld [vmem:[%s5098 + $0x220] sm:$0xff]
    %v5168 = vld [vmem:[%s5098 + $0x228] sm:$0xff]
    %v5169 = vld [vmem:[%s5098 + $0x230] sm:$0xff]
    %v5170 = vld [vmem:[%s5098 + $0x238] sm:$0xff]
    %v5171 = vld [vmem:[%s5098 + $0x240] sm:$0xff]
    %v5172 = vld [vmem:[%s5098 + $0x248] sm:$0xff]
    %v5173 = vld [vmem:[%s5098 + $0x250] sm:$0xff]
    %v5174 = vld [vmem:[%s5098 + $0x258] sm:$0xff]
    %v5175 = vld [vmem:[%s5098 + $0x260] sm:$0xff]
    %v5176 = vld [vmem:[%s5098 + $0x268] sm:$0xff]
    %v5177 = vld [vmem:[%s5098 + $0x270] sm:$0xff]
    %v5178 = vld [vmem:[%s5098 + $0x278] sm:$0xff]
    %v5179 = vld [vmem:[%s5098 + $0x280] sm:$0xff]
    %v5180 = vld [vmem:[%s5098 + $0x288] sm:$0xff]
    %v5181 = vld [vmem:[%s5098 + $0x290] sm:$0xff]
    %v5182 = vld [vmem:[%s5098 + $0x298] sm:$0xff]
    %v5183 = vld [vmem:[%s5098 + $0x2a0] sm:$0xff]
    %v5184 = vld [vmem:[%s5098 + $0x2a8] sm:$0xff]
    %v5185 = vld [vmem:[%s5098 + $0x2b0] sm:$0xff]
    %v5186 = vld [vmem:[%s5098 + $0x2b8] sm:$0xff]
    %v5187 = vld [vmem:[%s5098 + $0x2c0] sm:$0xff]
    %v5188 = vld [vmem:[%s5098 + $0x2c8] sm:$0xff]
    %v5189 = vld [vmem:[%s5098 + $0x2d0] sm:$0xff]
    %v5190 = vld [vmem:[%s5098 + $0x2d8] sm:$0xff]
    %v5191 = vld [vmem:[%s5098 + $0x2e0] sm:$0xff]
    %v5192 = vld [vmem:[%s5098 + $0x2e8] sm:$0xff]
    %v5193 = vld [vmem:[%s5098 + $0x2f0] sm:$0xff]
    %v5194 = vld [vmem:[%s5098 + $0x2f8] sm:$0xff]
    %v5195 = vld [vmem:[%s5098 + $0x300] sm:$0xff]
    %v5196 = vld [vmem:[%s5098 + $0x308] sm:$0xff]
    %v5197 = vld [vmem:[%s5098 + $0x310] sm:$0xff]
    %v5198 = vld [vmem:[%s5098 + $0x318] sm:$0xff]
    %v5199 = vld [vmem:[%s5098 + $0x320] sm:$0xff]
    %v5200 = vld [vmem:[%s5098 + $0x328] sm:$0xff]
    %v5201 = vld [vmem:[%s5098 + $0x330] sm:$0xff]
    %v5202 = vld [vmem:[%s5098 + $0x338] sm:$0xff]
    %v5203 = vld [vmem:[%s5098 + $0x340] sm:$0xff]
    %v5204 = vld [vmem:[%s5098 + $0x348] sm:$0xff]
    %v5205 = vld [vmem:[%s5098 + $0x350] sm:$0xff]
    %v5206 = vld [vmem:[%s5098 + $0x358] sm:$0xff]
    %v5207 = vld [vmem:[%s5098 + $0x360] sm:$0xff]
    %v5208 = vld [vmem:[%s5098 + $0x368] sm:$0xff]
    %v5209 = vld [vmem:[%s5098 + $0x370] sm:$0xff]
    %v5210 = vld [vmem:[%s5098 + $0x378] sm:$0xff]
    %v5211 = vld [vmem:[%s5098 + $0x380] sm:$0xff]
    %v5212 = vld [vmem:[%s5098 + $0x388] sm:$0xff]
    %v5213 = vld [vmem:[%s5098 + $0x390] sm:$0xff]
    %v5214 = vld [vmem:[%s5098 + $0x398] sm:$0xff]
    %v5215 = vld [vmem:[%s5098 + $0x3a0] sm:$0xff]
    %v5216 = vld [vmem:[%s5098 + $0x3a8] sm:$0xff]
    %v5217 = vld [vmem:[%s5098 + $0x3b0] sm:$0xff]
    %v5218 = vld [vmem:[%s5098 + $0x3b8] sm:$0xff]
    %v5219 = vld [vmem:[%s5098 + $0x3c0] sm:$0xff]
    %v5220 = vld [vmem:[%s5098 + $0x3c8] sm:$0xff]
    %v5221 = vld [vmem:[%s5098 + $0x3d0] sm:$0xff]
    %v5222 = vld [vmem:[%s5098 + $0x3d8] sm:$0xff]
    %v5223 = vld [vmem:[%s5098 + $0x3e0] sm:$0xff]
    %v5224 = vld [vmem:[%s5098 + $0x3e8] sm:$0xff]
    %v5225 = vld [vmem:[%s5098 + $0x3f0] sm:$0xff]
    %v5226 = vld [vmem:[%s5098 + $0x3f8] sm:$0xff]
    %v5227 = vld [vmem:[%s5098 + $0x400] sm:$0xff]
    %v5228 = vld [vmem:[%s5098 + $0x408] sm:$0xff]
    %v5229 = vld [vmem:[%s5098 + $0x410] sm:$0xff]
    %v5230 = vld [vmem:[%s5098 + $0x418] sm:$0xff]
    %v5231 = vld [vmem:[%s5098 + $0x420] sm:$0xff]
    %v5232 = vld [vmem:[%s5098 + $0x428] sm:$0xff]
    %v5233 = vld [vmem:[%s5098 + $0x430] sm:$0xff]
    %v5234 = vld [vmem:[%s5098 + $0x438] sm:$0xff]
    %v5235 = vld [vmem:[%s5098 + $0x440] sm:$0xff]
    %v5236 = vld [vmem:[%s5098 + $0x448] sm:$0xff]
    %v5237 = vld [vmem:[%s5098 + $0x450] sm:$0xff]
    %v5238 = vld [vmem:[%s5098 + $0x458] sm:$0xff]
    %v5239 = vld [vmem:[%s5098 + $0x460] sm:$0xff]
    %v5240 = vld [vmem:[%s5098 + $0x468] sm:$0xff]
    %v5241 = vld [vmem:[%s5098 + $0x470] sm:$0xff]
    %v5242 = vld [vmem:[%s5098 + $0x478] sm:$0xff]
    %v5243 = vld [vmem:[%s5098 + $0x480] sm:$0xff]
    %v5244 = vld [vmem:[%s5098 + $0x488] sm:$0xff]
    %v5245 = vld [vmem:[%s5098 + $0x490] sm:$0xff]
    %v5246 = vld [vmem:[%s5098 + $0x498] sm:$0xff]
    %v5247 = vld [vmem:[%s5098 + $0x4a0] sm:$0xff]
    %v5248 = vld [vmem:[%s5098 + $0x4a8] sm:$0xff]
    %v5249 = vld [vmem:[%s5098 + $0x4b0] sm:$0xff]
    %v5250 = vld [vmem:[%s5098 + $0x4b8] sm:$0xff]
    %v5251 = vld [vmem:[%s5098 + $0x4c0] sm:$0xff]
    %v5252 = vld [vmem:[%s5098 + $0x4c8] sm:$0xff]
    %v5253 = vld [vmem:[%s5098 + $0x4d0] sm:$0xff]
    %v5254 = vld [vmem:[%s5098 + $0x4d8] sm:$0xff]
    %v5255 = vld [vmem:[%s5098 + $0x4e0] sm:$0xff]
    %v5256 = vld [vmem:[%s5098 + $0x4e8] sm:$0xff]
    %v5257 = vld [vmem:[%s5098 + $0x4f0] sm:$0xff]
    %v5258 = vld [vmem:[%s5098 + $0x4f8] sm:$0xff]
    %v5259 = vld [vmem:[%s5098 + $0x500] sm:$0xff]
    %v5260 = vld [vmem:[%s5098 + $0x508] sm:$0xff]
    %v5261 = vld [vmem:[%s5098 + $0x510] sm:$0xff]
    %v5262 = vld [vmem:[%s5098 + $0x518] sm:$0xff]
    %v5263 = vld [vmem:[%s5098 + $0x520] sm:$0xff]
    %v5264 = vld [vmem:[%s5098 + $0x528] sm:$0xff]
    %v5265 = vld [vmem:[%s5098 + $0x530] sm:$0xff]
    %v5266 = vld [vmem:[%s5098 + $0x538] sm:$0xff]
    %v5267 = vld [vmem:[%s5098 + $0x540] sm:$0xff]
    %v5268 = vld [vmem:[%s5098 + $0x548] sm:$0xff]
    %v5269 = vld [vmem:[%s5098 + $0x550] sm:$0xff]
    %v5270 = vld [vmem:[%s5098 + $0x558] sm:$0xff]
    %v5271 = vld [vmem:[%s5098 + $0x560] sm:$0xff]
    %v5272 = vld [vmem:[%s5098 + $0x568] sm:$0xff]
    %v5273 = vld [vmem:[%s5098 + $0x570] sm:$0xff]
    %v5274 = vld [vmem:[%s5098 + $0x578] sm:$0xff]
    %v5275 = vld [vmem:[%s5098 + $0x580] sm:$0xff]
    %v5276 = vld [vmem:[%s5098 + $0x588] sm:$0xff]
    %v5277 = vld [vmem:[%s5098 + $0x590] sm:$0xff]
    %v5278 = vld [vmem:[%s5098 + $0x598] sm:$0xff]
    %v5279 = vld [vmem:[%s5098 + $0x5a0] sm:$0xff]
    %v5280 = vld [vmem:[%s5098 + $0x5a8] sm:$0xff]
    %v5281 = vld [vmem:[%s5098 + $0x5b0] sm:$0xff]
    %v5282 = vld [vmem:[%s5098 + $0x5b8] sm:$0xff]
    %v5283 = vld [vmem:[%s5098 + $0x5c0] sm:$0xff]
    %v5284 = vld [vmem:[%s5098 + $0x5c8] sm:$0xff]
    %v5285 = vld [vmem:[%s5098 + $0x5d0] sm:$0xff]
    %v5286 = vld [vmem:[%s5098 + $0x5d8] sm:$0xff]
    %v5287 = vld [vmem:[%s5098 + $0x5e0] sm:$0xff]
    %v5288 = vld [vmem:[%s5098 + $0x5e8] sm:$0xff]
    %v5289 = vld [vmem:[%s5098 + $0x5f0] sm:$0xff]
    %v5290 = vld [vmem:[%s5098 + $0x5f8] sm:$0xff]
    %s5291 = scalar_lea.vmem [#allocation20], 6
    %v5292 = vld [vmem:[%s5291] sm:$0x3f]
    %v5294 = vlaneseq
    %v5295 = vshrl.u32 %v5294, 7
    %v5296 = vsub.s32 0, %v5295
    %v5297 = vrot.slane %v5292, %v5296
    %v5298 = vlaneseq
    %v5299 = vshrl.u32 %v5298, 7
    %v5300 = vsub.s32 1, %v5299
    %v5301 = vrot.slane %v5292, %v5300
    %v5302 = vlaneseq
    %v5303 = vshrl.u32 %v5302, 7
    %v5304 = vsub.s32 2, %v5303
    %v5305 = vrot.slane %v5292, %v5304
    %v5306 = vlaneseq
    %v5307 = vshrl.u32 %v5306, 7
    %v5308 = vsub.s32 3, %v5307
    %v5309 = vrot.slane %v5292, %v5308
    %v5310 = vlaneseq
    %v5311 = vshrl.u32 %v5310, 7
    %v5312 = vsub.s32 4, %v5311
    %v5313 = vrot.slane %v5292, %v5312
    %v5314 = vlaneseq
    %v5315 = vshrl.u32 %v5314, 7
    %v5316 = vsub.s32 5, %v5315
    %v5317 = vrot.slane %v5292, %v5316
    %v5516 = vunpack.c.l.b16 %v5099
    %v5517 = vunpack.c.h.b16 %v5099
    %v5518 = vunpack.c.l.b16 %v5100
    %v5519 = vunpack.c.h.b16 %v5100
    %v5520 = vunpack.c.l.b16 %v5101
    %v5521 = vunpack.c.h.b16 %v5101
    %v5522 = vunpack.c.l.b16 %v5102
    %v5523 = vunpack.c.h.b16 %v5102
    %v5524 = vunpack.c.l.b16 %v5103
    %v5525 = vunpack.c.h.b16 %v5103
    %v5526 = vunpack.c.l.b16 %v5104
    %v5527 = vunpack.c.h.b16 %v5104
    %v5528 = vunpack.c.l.b16 %v5105
    %v5529 = vunpack.c.h.b16 %v5105
    %v5530 = vunpack.c.l.b16 %v5106
    %v5531 = vunpack.c.h.b16 %v5106
    %v5532 = vunpack.c.l.b16 %v5107
    %v5533 = vunpack.c.h.b16 %v5107
    %v5534 = vunpack.c.l.b16 %v5108
    %v5535 = vunpack.c.h.b16 %v5108
    %v5536 = vunpack.c.l.b16 %v5109
    %v5537 = vunpack.c.h.b16 %v5109
    %v5538 = vunpack.c.l.b16 %v5110
    %v5539 = vunpack.c.h.b16 %v5110
    %v5540 = vunpack.c.l.b16 %v5111
    %v5541 = vunpack.c.h.b16 %v5111
    %v5542 = vunpack.c.l.b16 %v5112
    %v5543 = vunpack.c.h.b16 %v5112
    %v5544 = vunpack.c.l.b16 %v5113
    %v5545 = vunpack.c.h.b16 %v5113
    %v5546 = vunpack.c.l.b16 %v5114
    %v5547 = vunpack.c.h.b16 %v5114
    %v5548 = vunpack.c.l.b16 %v5115
    %v5549 = vunpack.c.h.b16 %v5115
    %v5550 = vunpack.c.l.b16 %v5116
    %v5551 = vunpack.c.h.b16 %v5116
    %v5552 = vunpack.c.l.b16 %v5117
    %v5553 = vunpack.c.h.b16 %v5117
    %v5554 = vunpack.c.l.b16 %v5118
    %v5555 = vunpack.c.h.b16 %v5118
    %v5556 = vunpack.c.l.b16 %v5119
    %v5557 = vunpack.c.h.b16 %v5119
    %v5558 = vunpack.c.l.b16 %v5120
    %v5559 = vunpack.c.h.b16 %v5120
    %v5560 = vunpack.c.l.b16 %v5121
    %v5561 = vunpack.c.h.b16 %v5121
    %v5562 = vunpack.c.l.b16 %v5122
    %v5563 = vunpack.c.h.b16 %v5122
    %v5564 = vunpack.c.l.b16 %v5123
    %v5565 = vunpack.c.h.b16 %v5123
    %v5566 = vunpack.c.l.b16 %v5124
    %v5567 = vunpack.c.h.b16 %v5124
    %v5568 = vunpack.c.l.b16 %v5125
    %v5569 = vunpack.c.h.b16 %v5125
    %v5570 = vunpack.c.l.b16 %v5126
    %v5571 = vunpack.c.h.b16 %v5126
    %v5572 = vunpack.c.l.b16 %v5127
    %v5573 = vunpack.c.h.b16 %v5127
    %v5574 = vunpack.c.l.b16 %v5128
    %v5575 = vunpack.c.h.b16 %v5128
    %v5576 = vunpack.c.l.b16 %v5129
    %v5577 = vunpack.c.h.b16 %v5129
    %v5578 = vunpack.c.l.b16 %v5130
    %v5579 = vunpack.c.h.b16 %v5130
    %v5580 = vunpack.c.l.b16 %v5131
    %v5581 = vunpack.c.h.b16 %v5131
    %v5582 = vunpack.c.l.b16 %v5132
    %v5583 = vunpack.c.h.b16 %v5132
    %v5584 = vunpack.c.l.b16 %v5133
    %v5585 = vunpack.c.h.b16 %v5133
    %v5586 = vunpack.c.l.b16 %v5134
    %v5587 = vunpack.c.h.b16 %v5134
    %v5588 = vunpack.c.l.b16 %v5135
    %v5589 = vunpack.c.h.b16 %v5135
    %v5590 = vunpack.c.l.b16 %v5136
    %v5591 = vunpack.c.h.b16 %v5136
    %v5592 = vunpack.c.l.b16 %v5137
    %v5593 = vunpack.c.h.b16 %v5137
    %v5594 = vunpack.c.l.b16 %v5138
    %v5595 = vunpack.c.h.b16 %v5138
    %v5596 = vunpack.c.l.b16 %v5139
    %v5597 = vunpack.c.h.b16 %v5139
    %v5598 = vunpack.c.l.b16 %v5140
    %v5599 = vunpack.c.h.b16 %v5140
    %v5600 = vunpack.c.l.b16 %v5141
    %v5601 = vunpack.c.h.b16 %v5141
    %v5602 = vunpack.c.l.b16 %v5142
    %v5603 = vunpack.c.h.b16 %v5142
    %v5604 = vunpack.c.l.b16 %v5143
    %v5605 = vunpack.c.h.b16 %v5143
    %v5606 = vunpack.c.l.b16 %v5144
    %v5607 = vunpack.c.h.b16 %v5144
    %v5608 = vunpack.c.l.b16 %v5145
    %v5609 = vunpack.c.h.b16 %v5145
    %v5610 = vunpack.c.l.b16 %v5146
    %v5611 = vunpack.c.h.b16 %v5146
    %v5612 = vunpack.c.l.b16 %v5147
    %v5613 = vunpack.c.h.b16 %v5147
    %v5614 = vunpack.c.l.b16 %v5148
    %v5615 = vunpack.c.h.b16 %v5148
    %v5616 = vunpack.c.l.b16 %v5149
    %v5617 = vunpack.c.h.b16 %v5149
    %v5618 = vunpack.c.l.b16 %v5150
    %v5619 = vunpack.c.h.b16 %v5150
    %v5620 = vunpack.c.l.b16 %v5151
    %v5621 = vunpack.c.h.b16 %v5151
    %v5622 = vunpack.c.l.b16 %v5152
    %v5623 = vunpack.c.h.b16 %v5152
    %v5624 = vunpack.c.l.b16 %v5153
    %v5625 = vunpack.c.h.b16 %v5153
    %v5626 = vunpack.c.l.b16 %v5154
    %v5627 = vunpack.c.h.b16 %v5154
    %v5628 = vunpack.c.l.b16 %v5155
    %v5629 = vunpack.c.h.b16 %v5155
    %v5630 = vunpack.c.l.b16 %v5156
    %v5631 = vunpack.c.h.b16 %v5156
    %v5632 = vunpack.c.l.b16 %v5157
    %v5633 = vunpack.c.h.b16 %v5157
    %v5634 = vunpack.c.l.b16 %v5158
    %v5635 = vunpack.c.h.b16 %v5158
    %v5636 = vunpack.c.l.b16 %v5159
    %v5637 = vunpack.c.h.b16 %v5159
    %v5638 = vunpack.c.l.b16 %v5160
    %v5639 = vunpack.c.h.b16 %v5160
    %v5640 = vunpack.c.l.b16 %v5161
    %v5641 = vunpack.c.h.b16 %v5161
    %v5642 = vunpack.c.l.b16 %v5162
    %v5643 = vunpack.c.h.b16 %v5162
    %v5644 = vunpack.c.l.b16 %v5163
    %v5645 = vunpack.c.h.b16 %v5163
    %v5646 = vunpack.c.l.b16 %v5164
    %v5647 = vunpack.c.h.b16 %v5164
    %v5648 = vunpack.c.l.b16 %v5165
    %v5649 = vunpack.c.h.b16 %v5165
    %v5650 = vunpack.c.l.b16 %v5166
    %v5651 = vunpack.c.h.b16 %v5166
    %v5652 = vunpack.c.l.b16 %v5167
    %v5653 = vunpack.c.h.b16 %v5167
    %v5654 = vunpack.c.l.b16 %v5168
    %v5655 = vunpack.c.h.b16 %v5168
    %v5656 = vunpack.c.l.b16 %v5169
    %v5657 = vunpack.c.h.b16 %v5169
    %v5658 = vunpack.c.l.b16 %v5170
    %v5659 = vunpack.c.h.b16 %v5170
    %v5660 = vunpack.c.l.b16 %v5171
    %v5661 = vunpack.c.h.b16 %v5171
    %v5662 = vunpack.c.l.b16 %v5172
    %v5663 = vunpack.c.h.b16 %v5172
    %v5664 = vunpack.c.l.b16 %v5173
    %v5665 = vunpack.c.h.b16 %v5173
    %v5666 = vunpack.c.l.b16 %v5174
    %v5667 = vunpack.c.h.b16 %v5174
    %v5668 = vunpack.c.l.b16 %v5175
    %v5669 = vunpack.c.h.b16 %v5175
    %v5670 = vunpack.c.l.b16 %v5176
    %v5671 = vunpack.c.h.b16 %v5176
    %v5672 = vunpack.c.l.b16 %v5177
    %v5673 = vunpack.c.h.b16 %v5177
    %v5674 = vunpack.c.l.b16 %v5178
    %v5675 = vunpack.c.h.b16 %v5178
    %v5676 = vunpack.c.l.b16 %v5179
    %v5677 = vunpack.c.h.b16 %v5179
    %v5678 = vunpack.c.l.b16 %v5180
    %v5679 = vunpack.c.h.b16 %v5180
    %v5680 = vunpack.c.l.b16 %v5181
    %v5681 = vunpack.c.h.b16 %v5181
    %v5682 = vunpack.c.l.b16 %v5182
    %v5683 = vunpack.c.h.b16 %v5182
    %v5684 = vunpack.c.l.b16 %v5183
    %v5685 = vunpack.c.h.b16 %v5183
    %v5686 = vunpack.c.l.b16 %v5184
    %v5687 = vunpack.c.h.b16 %v5184
    %v5688 = vunpack.c.l.b16 %v5185
    %v5689 = vunpack.c.h.b16 %v5185
    %v5690 = vunpack.c.l.b16 %v5186
    %v5691 = vunpack.c.h.b16 %v5186
    %v5692 = vunpack.c.l.b16 %v5187
    %v5693 = vunpack.c.h.b16 %v5187
    %v5694 = vunpack.c.l.b16 %v5188
    %v5695 = vunpack.c.h.b16 %v5188
    %v5696 = vunpack.c.l.b16 %v5189
    %v5697 = vunpack.c.h.b16 %v5189
    %v5698 = vunpack.c.l.b16 %v5190
    %v5699 = vunpack.c.h.b16 %v5190
    %v5700 = vunpack.c.l.b16 %v5191
    %v5701 = vunpack.c.h.b16 %v5191
    %v5702 = vunpack.c.l.b16 %v5192
    %v5703 = vunpack.c.h.b16 %v5192
    %v5704 = vunpack.c.l.b16 %v5193
    %v5705 = vunpack.c.h.b16 %v5193
    %v5706 = vunpack.c.l.b16 %v5194
    %v5707 = vunpack.c.h.b16 %v5194
    %v5708 = vunpack.c.l.b16 %v5195
    %v5709 = vunpack.c.h.b16 %v5195
    %v5710 = vunpack.c.l.b16 %v5196
    %v5711 = vunpack.c.h.b16 %v5196
    %v5712 = vunpack.c.l.b16 %v5197
    %v5713 = vunpack.c.h.b16 %v5197
    %v5714 = vunpack.c.l.b16 %v5198
    %v5715 = vunpack.c.h.b16 %v5198
    %v5716 = vunpack.c.l.b16 %v5199
    %v5717 = vunpack.c.h.b16 %v5199
    %v5718 = vunpack.c.l.b16 %v5200
    %v5719 = vunpack.c.h.b16 %v5200
    %v5720 = vunpack.c.l.b16 %v5201
    %v5721 = vunpack.c.h.b16 %v5201
    %v5722 = vunpack.c.l.b16 %v5202
    %v5723 = vunpack.c.h.b16 %v5202
    %v5724 = vunpack.c.l.b16 %v5203
    %v5725 = vunpack.c.h.b16 %v5203
    %v5726 = vunpack.c.l.b16 %v5204
    %v5727 = vunpack.c.h.b16 %v5204
    %v5728 = vunpack.c.l.b16 %v5205
    %v5729 = vunpack.c.h.b16 %v5205
    %v5730 = vunpack.c.l.b16 %v5206
    %v5731 = vunpack.c.h.b16 %v5206
    %v5732 = vunpack.c.l.b16 %v5207
    %v5733 = vunpack.c.h.b16 %v5207
    %v5734 = vunpack.c.l.b16 %v5208
    %v5735 = vunpack.c.h.b16 %v5208
    %v5736 = vunpack.c.l.b16 %v5209
    %v5737 = vunpack.c.h.b16 %v5209
    %v5738 = vunpack.c.l.b16 %v5210
    %v5739 = vunpack.c.h.b16 %v5210
    %v5740 = vunpack.c.l.b16 %v5211
    %v5741 = vunpack.c.h.b16 %v5211
    %v5742 = vunpack.c.l.b16 %v5212
    %v5743 = vunpack.c.h.b16 %v5212
    %v5744 = vunpack.c.l.b16 %v5213
    %v5745 = vunpack.c.h.b16 %v5213
    %v5746 = vunpack.c.l.b16 %v5214
    %v5747 = vunpack.c.h.b16 %v5214
    %v5748 = vunpack.c.l.b16 %v5215
    %v5749 = vunpack.c.h.b16 %v5215
    %v5750 = vunpack.c.l.b16 %v5216
    %v5751 = vunpack.c.h.b16 %v5216
    %v5752 = vunpack.c.l.b16 %v5217
    %v5753 = vunpack.c.h.b16 %v5217
    %v5754 = vunpack.c.l.b16 %v5218
    %v5755 = vunpack.c.h.b16 %v5218
    %v5756 = vunpack.c.l.b16 %v5219
    %v5757 = vunpack.c.h.b16 %v5219
    %v5758 = vunpack.c.l.b16 %v5220
    %v5759 = vunpack.c.h.b16 %v5220
    %v5760 = vunpack.c.l.b16 %v5221
    %v5761 = vunpack.c.h.b16 %v5221
    %v5762 = vunpack.c.l.b16 %v5222
    %v5763 = vunpack.c.h.b16 %v5222
    %v5764 = vunpack.c.l.b16 %v5223
    %v5765 = vunpack.c.h.b16 %v5223
    %v5766 = vunpack.c.l.b16 %v5224
    %v5767 = vunpack.c.h.b16 %v5224
    %v5768 = vunpack.c.l.b16 %v5225
    %v5769 = vunpack.c.h.b16 %v5225
    %v5770 = vunpack.c.l.b16 %v5226
    %v5771 = vunpack.c.h.b16 %v5226
    %v5772 = vunpack.c.l.b16 %v5227
    %v5773 = vunpack.c.h.b16 %v5227
    %v5774 = vunpack.c.l.b16 %v5228
    %v5775 = vunpack.c.h.b16 %v5228
    %v5776 = vunpack.c.l.b16 %v5229
    %v5777 = vunpack.c.h.b16 %v5229
    %v5778 = vunpack.c.l.b16 %v5230
    %v5779 = vunpack.c.h.b16 %v5230
    %v5780 = vunpack.c.l.b16 %v5231
    %v5781 = vunpack.c.h.b16 %v5231
    %v5782 = vunpack.c.l.b16 %v5232
    %v5783 = vunpack.c.h.b16 %v5232
    %v5784 = vunpack.c.l.b16 %v5233
    %v5785 = vunpack.c.h.b16 %v5233
    %v5786 = vunpack.c.l.b16 %v5234
    %v5787 = vunpack.c.h.b16 %v5234
    %v5788 = vunpack.c.l.b16 %v5235
    %v5789 = vunpack.c.h.b16 %v5235
    %v5790 = vunpack.c.l.b16 %v5236
    %v5791 = vunpack.c.h.b16 %v5236
    %v5792 = vunpack.c.l.b16 %v5237
    %v5793 = vunpack.c.h.b16 %v5237
    %v5794 = vunpack.c.l.b16 %v5238
    %v5795 = vunpack.c.h.b16 %v5238
    %v5796 = vunpack.c.l.b16 %v5239
    %v5797 = vunpack.c.h.b16 %v5239
    %v5798 = vunpack.c.l.b16 %v5240
    %v5799 = vunpack.c.h.b16 %v5240
    %v5800 = vunpack.c.l.b16 %v5241
    %v5801 = vunpack.c.h.b16 %v5241
    %v5802 = vunpack.c.l.b16 %v5242
    %v5803 = vunpack.c.h.b16 %v5242
    %v5804 = vunpack.c.l.b16 %v5243
    %v5805 = vunpack.c.h.b16 %v5243
    %v5806 = vunpack.c.l.b16 %v5244
    %v5807 = vunpack.c.h.b16 %v5244
    %v5808 = vunpack.c.l.b16 %v5245
    %v5809 = vunpack.c.h.b16 %v5245
    %v5810 = vunpack.c.l.b16 %v5246
    %v5811 = vunpack.c.h.b16 %v5246
    %v5812 = vunpack.c.l.b16 %v5247
    %v5813 = vunpack.c.h.b16 %v5247
    %v5814 = vunpack.c.l.b16 %v5248
    %v5815 = vunpack.c.h.b16 %v5248
    %v5816 = vunpack.c.l.b16 %v5249
    %v5817 = vunpack.c.h.b16 %v5249
    %v5818 = vunpack.c.l.b16 %v5250
    %v5819 = vunpack.c.h.b16 %v5250
    %v5820 = vunpack.c.l.b16 %v5251
    %v5821 = vunpack.c.h.b16 %v5251
    %v5822 = vunpack.c.l.b16 %v5252
    %v5823 = vunpack.c.h.b16 %v5252
    %v5824 = vunpack.c.l.b16 %v5253
    %v5825 = vunpack.c.h.b16 %v5253
    %v5826 = vunpack.c.l.b16 %v5254
    %v5827 = vunpack.c.h.b16 %v5254
    %v5828 = vunpack.c.l.b16 %v5255
    %v5829 = vunpack.c.h.b16 %v5255
    %v5830 = vunpack.c.l.b16 %v5256
    %v5831 = vunpack.c.h.b16 %v5256
    %v5832 = vunpack.c.l.b16 %v5257
    %v5833 = vunpack.c.h.b16 %v5257
    %v5834 = vunpack.c.l.b16 %v5258
    %v5835 = vunpack.c.h.b16 %v5258
    %v5836 = vunpack.c.l.b16 %v5259
    %v5837 = vunpack.c.h.b16 %v5259
    %v5838 = vunpack.c.l.b16 %v5260
    %v5839 = vunpack.c.h.b16 %v5260
    %v5840 = vunpack.c.l.b16 %v5261
    %v5841 = vunpack.c.h.b16 %v5261
    %v5842 = vunpack.c.l.b16 %v5262
    %v5843 = vunpack.c.h.b16 %v5262
    %v5844 = vunpack.c.l.b16 %v5263
    %v5845 = vunpack.c.h.b16 %v5263
    %v5846 = vunpack.c.l.b16 %v5264
    %v5847 = vunpack.c.h.b16 %v5264
    %v5848 = vunpack.c.l.b16 %v5265
    %v5849 = vunpack.c.h.b16 %v5265
    %v5850 = vunpack.c.l.b16 %v5266
    %v5851 = vunpack.c.h.b16 %v5266
    %v5852 = vunpack.c.l.b16 %v5267
    %v5853 = vunpack.c.h.b16 %v5267
    %v5854 = vunpack.c.l.b16 %v5268
    %v5855 = vunpack.c.h.b16 %v5268
    %v5856 = vunpack.c.l.b16 %v5269
    %v5857 = vunpack.c.h.b16 %v5269
    %v5858 = vunpack.c.l.b16 %v5270
    %v5859 = vunpack.c.h.b16 %v5270
    %v5860 = vunpack.c.l.b16 %v5271
    %v5861 = vunpack.c.h.b16 %v5271
    %v5862 = vunpack.c.l.b16 %v5272
    %v5863 = vunpack.c.h.b16 %v5272
    %v5864 = vunpack.c.l.b16 %v5273
    %v5865 = vunpack.c.h.b16 %v5273
    %v5866 = vunpack.c.l.b16 %v5274
    %v5867 = vunpack.c.h.b16 %v5274
    %v5868 = vunpack.c.l.b16 %v5275
    %v5869 = vunpack.c.h.b16 %v5275
    %v5870 = vunpack.c.l.b16 %v5276
    %v5871 = vunpack.c.h.b16 %v5276
    %v5872 = vunpack.c.l.b16 %v5277
    %v5873 = vunpack.c.h.b16 %v5277
    %v5874 = vunpack.c.l.b16 %v5278
    %v5875 = vunpack.c.h.b16 %v5278
    %v5876 = vunpack.c.l.b16 %v5279
    %v5877 = vunpack.c.h.b16 %v5279
    %v5878 = vunpack.c.l.b16 %v5280
    %v5879 = vunpack.c.h.b16 %v5280
    %v5880 = vunpack.c.l.b16 %v5281
    %v5881 = vunpack.c.h.b16 %v5281
    %v5882 = vunpack.c.l.b16 %v5282
    %v5883 = vunpack.c.h.b16 %v5282
    %v5884 = vunpack.c.l.b16 %v5283
    %v5885 = vunpack.c.h.b16 %v5283
    %v5886 = vunpack.c.l.b16 %v5284
    %v5887 = vunpack.c.h.b16 %v5284
    %v5888 = vunpack.c.l.b16 %v5285
    %v5889 = vunpack.c.h.b16 %v5285
    %v5890 = vunpack.c.l.b16 %v5286
    %v5891 = vunpack.c.h.b16 %v5286
    %v5892 = vunpack.c.l.b16 %v5287
    %v5893 = vunpack.c.h.b16 %v5287
    %v5894 = vunpack.c.l.b16 %v5288
    %v5895 = vunpack.c.h.b16 %v5288
    %v5896 = vunpack.c.l.b16 %v5289
    %v5897 = vunpack.c.h.b16 %v5289
    %v5898 = vunpack.c.l.b16 %v5290
    %v5899 = vunpack.c.h.b16 %v5290
    %v5900 = vpack.c.b16 %v5522, %v5516
    %v5901 = vpack.c.b16 %v5523, %v5517
    %v5902 = vpack.c.b16 %v5524, %v5518
    %v5903 = vpack.c.b16 %v5525, %v5519
    %v5904 = vpack.c.b16 %v5526, %v5520
    %v5905 = vpack.c.b16 %v5527, %v5521
    %v5906 = vpack.c.b16 %v5534, %v5528
    %v5907 = vpack.c.b16 %v5535, %v5529
    %v5908 = vpack.c.b16 %v5536, %v5530
    %v5909 = vpack.c.b16 %v5537, %v5531
    %v5910 = vpack.c.b16 %v5538, %v5532
    %v5911 = vpack.c.b16 %v5539, %v5533
    %v5912 = vpack.c.b16 %v5546, %v5540
    %v5913 = vpack.c.b16 %v5547, %v5541
    %v5914 = vpack.c.b16 %v5548, %v5542
    %v5915 = vpack.c.b16 %v5549, %v5543
    %v5916 = vpack.c.b16 %v5550, %v5544
    %v5917 = vpack.c.b16 %v5551, %v5545
    %v5918 = vpack.c.b16 %v5558, %v5552
    %v5919 = vpack.c.b16 %v5559, %v5553
    %v5920 = vpack.c.b16 %v5560, %v5554
    %v5921 = vpack.c.b16 %v5561, %v5555
    %v5922 = vpack.c.b16 %v5562, %v5556
    %v5923 = vpack.c.b16 %v5563, %v5557
    %v5924 = vpack.c.b16 %v5570, %v5564
    %v5925 = vpack.c.b16 %v5571, %v5565
    %v5926 = vpack.c.b16 %v5572, %v5566
    %v5927 = vpack.c.b16 %v5573, %v5567
    %v5928 = vpack.c.b16 %v5574, %v5568
    %v5929 = vpack.c.b16 %v5575, %v5569
    %v5930 = vpack.c.b16 %v5582, %v5576
    %v5931 = vpack.c.b16 %v5583, %v5577
    %v5932 = vpack.c.b16 %v5584, %v5578
    %v5933 = vpack.c.b16 %v5585, %v5579
    %v5934 = vpack.c.b16 %v5586, %v5580
    %v5935 = vpack.c.b16 %v5587, %v5581
    %v5936 = vpack.c.b16 %v5594, %v5588
    %v5937 = vpack.c.b16 %v5595, %v5589
    %v5938 = vpack.c.b16 %v5596, %v5590
    %v5939 = vpack.c.b16 %v5597, %v5591
    %v5940 = vpack.c.b16 %v5598, %v5592
    %v5941 = vpack.c.b16 %v5599, %v5593
    %v5942 = vpack.c.b16 %v5606, %v5600
    %v5943 = vpack.c.b16 %v5607, %v5601
    %v5944 = vpack.c.b16 %v5608, %v5602
    %v5945 = vpack.c.b16 %v5609, %v5603
    %v5946 = vpack.c.b16 %v5610, %v5604
    %v5947 = vpack.c.b16 %v5611, %v5605
    %v5948 = vpack.c.b16 %v5618, %v5612
    %v5949 = vpack.c.b16 %v5619, %v5613
    %v5950 = vpack.c.b16 %v5620, %v5614
    %v5951 = vpack.c.b16 %v5621, %v5615
    %v5952 = vpack.c.b16 %v5622, %v5616
    %v5953 = vpack.c.b16 %v5623, %v5617
    %v5954 = vpack.c.b16 %v5630, %v5624
    %v5955 = vpack.c.b16 %v5631, %v5625
    %v5956 = vpack.c.b16 %v5632, %v5626
    %v5957 = vpack.c.b16 %v5633, %v5627
    %v5958 = vpack.c.b16 %v5634, %v5628
    %v5959 = vpack.c.b16 %v5635, %v5629
    %v5960 = vpack.c.b16 %v5642, %v5636
    %v5961 = vpack.c.b16 %v5643, %v5637
    %v5962 = vpack.c.b16 %v5644, %v5638
    %v5963 = vpack.c.b16 %v5645, %v5639
    %v5964 = vpack.c.b16 %v5646, %v5640
    %v5965 = vpack.c.b16 %v5647, %v5641
    %v5966 = vpack.c.b16 %v5654, %v5648
    %v5967 = vpack.c.b16 %v5655, %v5649
    %v5968 = vpack.c.b16 %v5656, %v5650
    %v5969 = vpack.c.b16 %v5657, %v5651
    %v5970 = vpack.c.b16 %v5658, %v5652
    %v5971 = vpack.c.b16 %v5659, %v5653
    %v5972 = vpack.c.b16 %v5666, %v5660
    %v5973 = vpack.c.b16 %v5667, %v5661
    %v5974 = vpack.c.b16 %v5668, %v5662
    %v5975 = vpack.c.b16 %v5669, %v5663
    %v5976 = vpack.c.b16 %v5670, %v5664
    %v5977 = vpack.c.b16 %v5671, %v5665
    %v5978 = vpack.c.b16 %v5678, %v5672
    %v5979 = vpack.c.b16 %v5679, %v5673
    %v5980 = vpack.c.b16 %v5680, %v5674
    %v5981 = vpack.c.b16 %v5681, %v5675
    %v5982 = vpack.c.b16 %v5682, %v5676
    %v5983 = vpack.c.b16 %v5683, %v5677
    %v5984 = vpack.c.b16 %v5690, %v5684
    %v5985 = vpack.c.b16 %v5691, %v5685
    %v5986 = vpack.c.b16 %v5692, %v5686
    %v5987 = vpack.c.b16 %v5693, %v5687
    %v5988 = vpack.c.b16 %v5694, %v5688
    %v5989 = vpack.c.b16 %v5695, %v5689
    %v5990 = vpack.c.b16 %v5702, %v5696
    %v5991 = vpack.c.b16 %v5703, %v5697
    %v5992 = vpack.c.b16 %v5704, %v5698
    %v5993 = vpack.c.b16 %v5705, %v5699
    %v5994 = vpack.c.b16 %v5706, %v5700
    %v5995 = vpack.c.b16 %v5707, %v5701
    %v5996 = vpack.c.b16 %v5714, %v5708
    %v5997 = vpack.c.b16 %v5715, %v5709
    %v5998 = vpack.c.b16 %v5716, %v5710
    %v5999 = vpack.c.b16 %v5717, %v5711
    %v6000 = vpack.c.b16 %v5718, %v5712
    %v6001 = vpack.c.b16 %v5719, %v5713
    %v6002 = vpack.c.b16 %v5726, %v5720
    %v6003 = vpack.c.b16 %v5727, %v5721
    %v6004 = vpack.c.b16 %v5728, %v5722
    %v6005 = vpack.c.b16 %v5729, %v5723
    %v6006 = vpack.c.b16 %v5730, %v5724
    %v6007 = vpack.c.b16 %v5731, %v5725
    %v6008 = vpack.c.b16 %v5738, %v5732
    %v6009 = vpack.c.b16 %v5739, %v5733
    %v6010 = vpack.c.b16 %v5740, %v5734
    %v6011 = vpack.c.b16 %v5741, %v5735
    %v6012 = vpack.c.b16 %v5742, %v5736
    %v6013 = vpack.c.b16 %v5743, %v5737
    %v6014 = vpack.c.b16 %v5750, %v5744
    %v6015 = vpack.c.b16 %v5751, %v5745
    %v6016 = vpack.c.b16 %v5752, %v5746
    %v6017 = vpack.c.b16 %v5753, %v5747
    %v6018 = vpack.c.b16 %v5754, %v5748
    %v6019 = vpack.c.b16 %v5755, %v5749
    %v6020 = vpack.c.b16 %v5762, %v5756
    %v6021 = vpack.c.b16 %v5763, %v5757
    %v6022 = vpack.c.b16 %v5764, %v5758
    %v6023 = vpack.c.b16 %v5765, %v5759
    %v6024 = vpack.c.b16 %v5766, %v5760
    %v6025 = vpack.c.b16 %v5767, %v5761
    %v6026 = vpack.c.b16 %v5774, %v5768
    %v6027 = vpack.c.b16 %v5775, %v5769
    %v6028 = vpack.c.b16 %v5776, %v5770
    %v6029 = vpack.c.b16 %v5777, %v5771
    %v6030 = vpack.c.b16 %v5778, %v5772
    %v6031 = vpack.c.b16 %v5779, %v5773
    %v6032 = vpack.c.b16 %v5786, %v5780
    %v6033 = vpack.c.b16 %v5787, %v5781
    %v6034 = vpack.c.b16 %v5788, %v5782
    %v6035 = vpack.c.b16 %v5789, %v5783
    %v6036 = vpack.c.b16 %v5790, %v5784
    %v6037 = vpack.c.b16 %v5791, %v5785
    %v6038 = vpack.c.b16 %v5798, %v5792
    %v6039 = vpack.c.b16 %v5799, %v5793
    %v6040 = vpack.c.b16 %v5800, %v5794
    %v6041 = vpack.c.b16 %v5801, %v5795
    %v6042 = vpack.c.b16 %v5802, %v5796
    %v6043 = vpack.c.b16 %v5803, %v5797
    %v6044 = vpack.c.b16 %v5810, %v5804
    %v6045 = vpack.c.b16 %v5811, %v5805
    %v6046 = vpack.c.b16 %v5812, %v5806
    %v6047 = vpack.c.b16 %v5813, %v5807
    %v6048 = vpack.c.b16 %v5814, %v5808
    %v6049 = vpack.c.b16 %v5815, %v5809
    %v6050 = vpack.c.b16 %v5822, %v5816
    %v6051 = vpack.c.b16 %v5823, %v5817
    %v6052 = vpack.c.b16 %v5824, %v5818
    %v6053 = vpack.c.b16 %v5825, %v5819
    %v6054 = vpack.c.b16 %v5826, %v5820
    %v6055 = vpack.c.b16 %v5827, %v5821
    %v6056 = vpack.c.b16 %v5834, %v5828
    %v6057 = vpack.c.b16 %v5835, %v5829
    %v6058 = vpack.c.b16 %v5836, %v5830
    %v6059 = vpack.c.b16 %v5837, %v5831
    %v6060 = vpack.c.b16 %v5838, %v5832
    %v6061 = vpack.c.b16 %v5839, %v5833
    %v6062 = vpack.c.b16 %v5846, %v5840
    %v6063 = vpack.c.b16 %v5847, %v5841
    %v6064 = vpack.c.b16 %v5848, %v5842
    %v6065 = vpack.c.b16 %v5849, %v5843
    %v6066 = vpack.c.b16 %v5850, %v5844
    %v6067 = vpack.c.b16 %v5851, %v5845
    %v6068 = vpack.c.b16 %v5858, %v5852
    %v6069 = vpack.c.b16 %v5859, %v5853
    %v6070 = vpack.c.b16 %v5860, %v5854
    %v6071 = vpack.c.b16 %v5861, %v5855
    %v6072 = vpack.c.b16 %v5862, %v5856
    %v6073 = vpack.c.b16 %v5863, %v5857
    %v6074 = vpack.c.b16 %v5870, %v5864
    %v6075 = vpack.c.b16 %v5871, %v5865
    %v6076 = vpack.c.b16 %v5872, %v5866
    %v6077 = vpack.c.b16 %v5873, %v5867
    %v6078 = vpack.c.b16 %v5874, %v5868
    %v6079 = vpack.c.b16 %v5875, %v5869
    %v6080 = vpack.c.b16 %v5882, %v5876
    %v6081 = vpack.c.b16 %v5883, %v5877
    %v6082 = vpack.c.b16 %v5884, %v5878
    %v6083 = vpack.c.b16 %v5885, %v5879
    %v6084 = vpack.c.b16 %v5886, %v5880
    %v6085 = vpack.c.b16 %v5887, %v5881
    %v6086 = vpack.c.b16 %v5894, %v5888
    %v6087 = vpack.c.b16 %v5895, %v5889
    %v6088 = vpack.c.b16 %v5896, %v5890
    %v6089 = vpack.c.b16 %v5897, %v5891
    %v6090 = vpack.c.b16 %v5898, %v5892
    %v6091 = vpack.c.b16 %v5899, %v5893
    %6284 = vmatprep.subr.bf16.mxu0 %v5901
    %6285 = vmatpush1.bf16.msra.mxu0 %v5900
    %6286 = vmatprep.subr.bf16.mxu0 %v5907
    %6287 = vmatpush1.bf16.msra.mxu0 %v5906
    %6288 = vmatprep.subr.bf16.mxu0 %v5913
    %6289 = vmatpush1.bf16.msra.mxu0 %v5912
    %6290 = vmatprep.subr.bf16.mxu0 %v5919
    %6291 = vmatpush1.bf16.msra.mxu0 %v5918
    %6292 = vmatprep.subr.bf16.mxu0 %v5925
    %6293 = vmatpush1.bf16.msra.mxu0 %v5924
    %6294 = vmatprep.subr.bf16.mxu0 %v5931
    %6295 = vmatpush1.bf16.msra.mxu0 %v5930
    %6296 = vmatprep.subr.bf16.mxu0 %v5937
    %6297 = vmatpush1.bf16.msra.mxu0 %v5936
    %6298 = vmatprep.subr.bf16.mxu0 %v5943
    %6299 = vmatpush1.bf16.msra.mxu0 %v5942
    %6300 = vmatprep.subr.bf16.mxu0 %v5949
    %6301 = vmatpush1.bf16.msra.mxu0 %v5948
    %6302 = vmatprep.subr.bf16.mxu0 %v5955
    %6303 = vmatpush1.bf16.msra.mxu0 %v5954
    %6304 = vmatprep.subr.bf16.mxu0 %v5961
    %6305 = vmatpush1.bf16.msra.mxu0 %v5960
    %6306 = vmatprep.subr.bf16.mxu0 %v5967
    %6307 = vmatpush1.bf16.msra.mxu0 %v5966
    %6308 = vmatprep.subr.bf16.mxu0 %v5973
    %6309 = vmatpush1.bf16.msra.mxu0 %v5972
    %6310 = vmatprep.subr.bf16.mxu0 %v5979
    %6311 = vmatpush1.bf16.msra.mxu0 %v5978
    %6312 = vmatprep.subr.bf16.mxu0 %v5985
    %6313 = vmatpush1.bf16.msra.mxu0 %v5984
    %6314 = vmatprep.subr.bf16.mxu0 %v5991
    %6315 = vmatpush1.bf16.msra.mxu0 %v5990
    %6316 = vmatprep.mubr.bf16.mxu0 %v5095
    %6317 = vmatmul.mubr.bf16.gmra.mrb[0].mxu0 %v5094
    %v6318 = vpop.f32.mrb[0].mxu0
    %v6319 = vadd.f32 %v5297, %v6318
    %v6320 = vpop.f32.mrb[0].mxu0
    %v6321 = vadd.f32 %v5301, %v6320
    %v6322 = vpop.f32.mrb[0].mxu0
    %v6323 = vpop.f32.mrb[0].mxu0
    %6324 = vdwg.mxu0
    %6325 = vmatprep.subr.bf16.mxu0 %v5997
    %6326 = vmatpush1.bf16.msra.mxu0 %v5996
    %6327 = vmatprep.subr.bf16.mxu0 %v6003
    %6328 = vmatpush1.bf16.msra.mxu0 %v6002
    %6329 = vmatprep.subr.bf16.mxu0 %v6009
    %6330 = vmatpush1.bf16.msra.mxu0 %v6008
    %6331 = vmatprep.subr.bf16.mxu0 %v6015
    %6332 = vmatpush1.bf16.msra.mxu0 %v6014
    %6333 = vmatprep.subr.bf16.mxu0 %v6021
    %6334 = vmatpush1.bf16.msra.mxu0 %v6020
    %6335 = vmatprep.subr.bf16.mxu0 %v6027
    %6336 = vmatpush1.bf16.msra.mxu0 %v6026
    %6337 = vmatprep.subr.bf16.mxu0 %v6033
    %6338 = vmatpush1.bf16.msra.mxu0 %v6032
    %6339 = vmatprep.subr.bf16.mxu0 %v6039
    %6340 = vmatpush1.bf16.msra.mxu0 %v6038
    %6341 = vmatprep.subr.bf16.mxu0 %v6045
    %6342 = vmatpush1.bf16.msra.mxu0 %v6044
    %6343 = vmatprep.subr.bf16.mxu0 %v6051
    %6344 = vmatpush1.bf16.msra.mxu0 %v6050
    %6345 = vmatprep.subr.bf16.mxu0 %v6057
    %6346 = vmatpush1.bf16.msra.mxu0 %v6056
    %6347 = vmatprep.subr.bf16.mxu0 %v6063
    %6348 = vmatpush1.bf16.msra.mxu0 %v6062
    %6349 = vmatprep.subr.bf16.mxu0 %v6069
    %6350 = vmatpush1.bf16.msra.mxu0 %v6068
    %6351 = vmatprep.subr.bf16.mxu0 %v6075
    %6352 = vmatpush1.bf16.msra.mxu0 %v6074
    %6353 = vmatprep.subr.bf16.mxu0 %v6081
    %6354 = vmatpush1.bf16.msra.mxu0 %v6080
    %6355 = vmatprep.subr.bf16.mxu0 %v6087
    %6356 = vmatpush1.bf16.msra.mxu0 %v6086
    %6357 = vmatprep.mubr.bf16.mxu0 %v5097
    %6358 = vmatmul.mubr.bf16.gmra.mrb[0].mxu0 %v5096
    %v6359 = vpop.f32.mrb[0].mxu0
    %v6360 = vadd.f32 %v6319, %v6359
    %v6361 = vpop.f32.mrb[0].mxu0
    %v6362 = vadd.f32 %v6321, %v6361
    %v6363 = vpop.f32.mrb[0].mxu0
    %v6364 = vpop.f32.mrb[0].mxu0
    %6365 = vdwg.mxu0
    %6366 = vmatprep.subr.bf16.mxu0 %v5903
    %6367 = vmatpush1.bf16.msra.mxu0 %v5902
    %6368 = vmatprep.subr.bf16.mxu0 %v5909
    %6369 = vmatpush1.bf16.msra.mxu0 %v5908
    %6370 = vmatprep.subr.bf16.mxu0 %v5915
    %6371 = vmatpush1.bf16.msra.mxu0 %v5914
    %6372 = vmatprep.subr.bf16.mxu0 %v5921
    %6373 = vmatpush1.bf16.msra.mxu0 %v5920
    %6374 = vmatprep.subr.bf16.mxu0 %v5927
    %6375 = vmatpush1.bf16.msra.mxu0 %v5926
    %6376 = vmatprep.subr.bf16.mxu0 %v5933
    %6377 = vmatpush1.bf16.msra.mxu0 %v5932
    %6378 = vmatprep.subr.bf16.mxu0 %v5939
    %6379 = vmatpush1.bf16.msra.mxu0 %v5938
    %6380 = vmatprep.subr.bf16.mxu0 %v5945
    %6381 = vmatpush1.bf16.msra.mxu0 %v5944
    %6382 = vmatprep.subr.bf16.mxu0 %v5951
    %6383 = vmatpush1.bf16.msra.mxu0 %v5950
    %6384 = vmatprep.subr.bf16.mxu0 %v5957
    %6385 = vmatpush1.bf16.msra.mxu0 %v5956
    %6386 = vmatprep.subr.bf16.mxu0 %v5963
    %6387 = vmatpush1.bf16.msra.mxu0 %v5962
    %6388 = vmatprep.subr.bf16.mxu0 %v5969
    %6389 = vmatpush1.bf16.msra.mxu0 %v5968
    %6390 = vmatprep.subr.bf16.mxu0 %v5975
    %6391 = vmatpush1.bf16.msra.mxu0 %v5974
    %6392 = vmatprep.subr.bf16.mxu0 %v5981
    %6393 = vmatpush1.bf16.msra.mxu0 %v5980
    %6394 = vmatprep.subr.bf16.mxu0 %v5987
    %6395 = vmatpush1.bf16.msra.mxu0 %v5986
    %6396 = vmatprep.subr.bf16.mxu0 %v5993
    %6397 = vmatpush1.bf16.msra.mxu0 %v5992
    %6398 = vmatprep.mubr.bf16.mxu0 %v5095
    %6399 = vmatmul.mubr.bf16.gmra.mrb[0].mxu0 %v5094
    %v6400 = vpop.f32.mrb[0].mxu0
    %v6401 = vadd.f32 %v5305, %v6400
    %v6402 = vpop.f32.mrb[0].mxu0
    %v6403 = vadd.f32 %v5309, %v6402
    %v6404 = vpop.f32.mrb[0].mxu0
    %v6405 = vpop.f32.mrb[0].mxu0
    %6406 = vdwg.mxu0
    %6407 = vmatprep.subr.bf16.mxu0 %v5999
    %6408 = vmatpush1.bf16.msra.mxu0 %v5998
    %6409 = vmatprep.subr.bf16.mxu0 %v6005
    %6410 = vmatpush1.bf16.msra.mxu0 %v6004
    %6411 = vmatprep.subr.bf16.mxu0 %v6011
    %6412 = vmatpush1.bf16.msra.mxu0 %v6010
    %6413 = vmatprep.subr.bf16.mxu0 %v6017
    %6414 = vmatpush1.bf16.msra.mxu0 %v6016
    %6415 = vmatprep.subr.bf16.mxu0 %v6023
    %6416 = vmatpush1.bf16.msra.mxu0 %v6022
    %6417 = vmatprep.subr.bf16.mxu0 %v6029
    %6418 = vmatpush1.bf16.msra.mxu0 %v6028
    %6419 = vmatprep.subr.bf16.mxu0 %v6035
    %6420 = vmatpush1.bf16.msra.mxu0 %v6034
    %6421 = vmatprep.subr.bf16.mxu0 %v6041
    %6422 = vmatpush1.bf16.msra.mxu0 %v6040
    %6423 = vmatprep.subr.bf16.mxu0 %v6047
    %6424 = vmatpush1.bf16.msra.mxu0 %v6046
    %6425 = vmatprep.subr.bf16.mxu0 %v6053
    %6426 = vmatpush1.bf16.msra.mxu0 %v6052
    %6427 = vmatprep.subr.bf16.mxu0 %v6059
    %6428 = vmatpush1.bf16.msra.mxu0 %v6058
    %6429 = vmatprep.subr.bf16.mxu0 %v6065
    %6430 = vmatpush1.bf16.msra.mxu0 %v6064
    %6431 = vmatprep.subr.bf16.mxu0 %v6071
    %6432 = vmatpush1.bf16.msra.mxu0 %v6070
    %6433 = vmatprep.subr.bf16.mxu0 %v6077
    %6434 = vmatpush1.bf16.msra.mxu0 %v6076
    %6435 = vmatprep.subr.bf16.mxu0 %v6083
    %6436 = vmatpush1.bf16.msra.mxu0 %v6082
    %6437 = vmatprep.subr.bf16.mxu0 %v6089
    %6438 = vmatpush1.bf16.msra.mxu0 %v6088
    %6439 = vmatprep.mubr.bf16.mxu0 %v5097
    %6440 = vmatmul.mubr.bf16.gmra.mrb[0].mxu0 %v5096
    %v6441 = vpop.f32.mrb[0].mxu0
    %v6442 = vadd.f32 %v6401, %v6441
    %v6443 = vpop.f32.mrb[0].mxu0
    %v6444 = vadd.f32 %v6403, %v6443
    %v6445 = vpop.f32.mrb[0].mxu0
    %v6446 = vpop.f32.mrb[0].mxu0
    %6447 = vdwg.mxu0
    %6448 = vmatprep.subr.bf16.mxu0 %v5905
    %6449 = vmatpush1.bf16.msra.mxu0 %v5904
    %6450 = vmatprep.subr.bf16.mxu0 %v5911
    %6451 = vmatpush1.bf16.msra.mxu0 %v5910
    %6452 = vmatprep.subr.bf16.mxu0 %v5917
    %6453 = vmatpush1.bf16.msra.mxu0 %v5916
    %6454 = vmatprep.subr.bf16.mxu0 %v5923
    %6455 = vmatpush1.bf16.msra.mxu0 %v5922
    %6456 = vmatprep.subr.bf16.mxu0 %v5929
    %6457 = vmatpush1.bf16.msra.mxu0 %v5928
    %6458 = vmatprep.subr.bf16.mxu0 %v5935
    %6459 = vmatpush1.bf16.msra.mxu0 %v5934
    %6460 = vmatprep.subr.bf16.mxu0 %v5941
    %6461 = vmatpush1.bf16.msra.mxu0 %v5940
    %6462 = vmatprep.subr.bf16.mxu0 %v5947
    %6463 = vmatpush1.bf16.msra.mxu0 %v5946
    %6464 = vmatprep.subr.bf16.mxu0 %v5953
    %6465 = vmatpush1.bf16.msra.mxu0 %v5952
    %6466 = vmatprep.subr.bf16.mxu0 %v5959
    %6467 = vmatpush1.bf16.msra.mxu0 %v5958
    %6468 = vmatprep.subr.bf16.mxu0 %v5965
    %6469 = vmatpush1.bf16.msra.mxu0 %v5964
    %6470 = vmatprep.subr.bf16.mxu0 %v5971
    %6471 = vmatpush1.bf16.msra.mxu0 %v5970
    %6472 = vmatprep.subr.bf16.mxu0 %v5977
    %6473 = vmatpush1.bf16.msra.mxu0 %v5976
    %6474 = vmatprep.subr.bf16.mxu0 %v5983
    %6475 = vmatpush1.bf16.msra.mxu0 %v5982
    %6476 = vmatprep.subr.bf16.mxu0 %v5989
    %6477 = vmatpush1.bf16.msra.mxu0 %v5988
    %6478 = vmatprep.subr.bf16.mxu0 %v5995
    %6479 = vmatpush1.bf16.msra.mxu0 %v5994
    %6480 = vmatprep.mubr.bf16.mxu0 %v5095
    %6481 = vmatmul.mubr.bf16.gmra.mrb[0].mxu0 %v5094
    %v6482 = vpop.f32.mrb[0].mxu0
    %v6483 = vadd.f32 %v5313, %v6482
    %v6484 = vpop.f32.mrb[0].mxu0
    %v6485 = vadd.f32 %v5317, %v6484
    %v6486 = vpop.f32.mrb[0].mxu0
    %v6487 = vpop.f32.mrb[0].mxu0
    %6488 = vdwg.mxu0
    %6489 = vmatprep.subr.bf16.mxu0 %v6001
    %6490 = vmatpush1.bf16.msra.mxu0 %v6000
    %6491 = vmatprep.subr.bf16.mxu0 %v6007
    %6492 = vmatpush1.bf16.msra.mxu0 %v6006
    %6493 = vmatprep.subr.bf16.mxu0 %v6013
    %6494 = vmatpush1.bf16.msra.mxu0 %v6012
    %6495 = vmatprep.subr.bf16.mxu0 %v6019
    %6496 = vmatpush1.bf16.msra.mxu0 %v6018
    %6497 = vmatprep.subr.bf16.mxu0 %v6025
    %6498 = vmatpush1.bf16.msra.mxu0 %v6024
    %6499 = vmatprep.subr.bf16.mxu0 %v6031
    %6500 = vmatpush1.bf16.msra.mxu0 %v6030
    %6501 = vmatprep.subr.bf16.mxu0 %v6037
    %6502 = vmatpush1.bf16.msra.mxu0 %v6036
    %6503 = vmatprep.subr.bf16.mxu0 %v6043
    %6504 = vmatpush1.bf16.msra.mxu0 %v6042
    %6505 = vmatprep.subr.bf16.mxu0 %v6049
    %6506 = vmatpush1.bf16.msra.mxu0 %v6048
    %6507 = vmatprep.subr.bf16.mxu0 %v6055
    %6508 = vmatpush1.bf16.msra.mxu0 %v6054
    %6509 = vmatprep.subr.bf16.mxu0 %v6061
    %6510 = vmatpush1.bf16.msra.mxu0 %v6060
    %6511 = vmatprep.subr.bf16.mxu0 %v6067
    %6512 = vmatpush1.bf16.msra.mxu0 %v6066
    %6513 = vmatprep.subr.bf16.mxu0 %v6073
    %6514 = vmatpush1.bf16.msra.mxu0 %v6072
    %6515 = vmatprep.subr.bf16.mxu0 %v6079
    %6516 = vmatpush1.bf16.msra.mxu0 %v6078
    %6517 = vmatprep.subr.bf16.mxu0 %v6085
    %6518 = vmatpush1.bf16.msra.mxu0 %v6084
    %6519 = vmatprep.subr.bf16.mxu0 %v6091
    %6520 = vmatpush1.bf16.msra.mxu0 %v6090
    %6521 = vmatprep.mubr.bf16.mxu0 %v5097
    %6522 = vmatmul.mubr.bf16.gmra.mrb[0].mxu0 %v5096
    %v6523 = vpop.f32.mrb[0].mxu0
    %v6524 = vadd.f32 %v6483, %v6523
    %v6525 = vpop.f32.mrb[0].mxu0
    %v6526 = vadd.f32 %v6485, %v6525
    %v6527 = vpop.f32.mrb[0].mxu0
    %v6528 = vpop.f32.mrb[0].mxu0
    %6529 = vdwg.mxu0
    %v6536 = vcombine.low %v6360, %v6362
    %v6537 = vcombine.low %v6442, %v6444
    %v6538 = vcombine.low %v6524, %v6526
    %s6542 = scalar_lea.vmem %s16, 24
    %6543 = vst [vmem:[%s6542] sm:$0xff] %v6536
    %6544 = vst [vmem:[%s6542 + $0x8] sm:$0xff] %v6537
    %6545 = vst [vmem:[%s6542 + $0x10] sm:$0xff] %v6538
    // Predicated region
    $region106: #{forward.1} parent=1 // pred_check
      _
    $region107: #{forward.1} parent=1 // pred_check_branch
      %6547 = sbr.rel (0) target = $region109
    $region108: #{forward.1} parent=1 // pred_region
      _
    $region109: #{forward.1} parent=1 // pred_fallthru
      _
    // Predicated region
    $region110: #{forward.1} parent=1 // pred_check
      _
    $region111: #{forward.1} parent=1 // pred_check_branch
      %6549 = sbr.rel (0) target = $region113
    $region112: #{forward.1} parent=1 // pred_region
      %s6551 = ssub.s32 192, 192
      %6552 = vsyncadd [#allocation4], %s6551
      %s6554 = sshll.u32 [#allocation22], 4
      %s6555 = int_to_ptr.vmem [resolvable:$true] %s6554
      %6557 = dma.vmem_to_hbm [thread:$0]  %s6555, 192, %s15, [#allocation4]
    $region113: #{forward.1} parent=1 // pred_fallthru
      _
    // Predicated region
    $region114: #{forward.1} parent=1 // pred_check
      _
    $region115: #{forward.1} parent=1 // pred_check_branch
      %6559 = sbr.rel (0) target = $region117
    $region116: #{forward.1} parent=1 // pred_region
      _
    $region117: #{forward.1} parent=1 // pred_fallthru
      _
    // Predicated region
    $region118: #{forward.1} parent=1 // pred_check
      _
    $region119: #{forward.1} parent=1 // pred_check_branch
      %6561 = sbr.rel (0) target = $region121
    $region120: #{forward.1} parent=1 // pred_region
      _
    $region121: #{forward.1} parent=1 // pred_fallthru
      _
    // Predicated region
    $region122: #{forward.1} parent=1 // pred_check
      _
    $region123: #{forward.1} parent=1 // pred_check_branch
      %6563 = sbr.rel (0) target = $region125
    $region124: #{forward.1} parent=1 // pred_region
      _
    $region125: #{forward.1} parent=1 // pred_fallthru
      _
    // Predicated region
    $region126: #{forward.1} parent=1 // pred_check
      _
    $region127: #{forward.1} parent=1 // pred_check_branch
      %6565 = sbr.rel (0) target = $region129
    $region128: #{forward.1} parent=1 // pred_region
      %6566 = dma.done [#allocation4], 192
    $region129: #{forward.1} parent=1 // pred_fallthru
      _
    // Predicated region
    $region130: #{forward.1} parent=1 // pred_check
      _
    $region131: #{forward.1} parent=1 // pred_check_branch
      %6568 = sbr.rel (0) target = $region133
    $region132: #{forward.1} parent=1 // pred_region
      _
    $region133: #{forward.1} parent=1 // pred_fallthru
      _
    // Predicated region
    $region134: #{forward.1} parent=1 // pred_check
      _
    $region135: #{forward.1} parent=1 // pred_check_branch
      %6570 = sbr.rel (0) target = $region137
    $region136: #{forward.1} parent=1 // pred_region
      _
    $region137: #{forward.1} parent=1 // pred_fallthru
      _
    %6571 = vsyncpa [#allocation3], 1
    %6572 = vsyncpa [#allocation6], 1
    %6573 = vsyncpa [#allocation9], 1
    %6574 = vsyncpa [#allocation12], 1
    %6575 = vsyncpa [#allocation15], 1
    %6576 = vsyncpa [#allocation18], 1
    %6577 = vsyncpa [#allocation21], 1
    %6578 = vsyncpa [#allocation4], 1

</llo_original>
